<compile_context>
chip_gen: v7x
topology: tpu7x:2x2x1
jax: 0.10.0
libtpu: 0.0.40
codegen_flags: <defaults>
</compile_context>

<pallas_src>
import math
import numpy as np

import jax
import jax.numpy as jnp
from jax import lax
from jax.experimental import pallas as pl
from jax.experimental.pallas import tpu as pltpu


# ----------------------------------------------------------------------------
# Pad / upsample matrices (data independent, numpy, built at trace time)
# ----------------------------------------------------------------------------
def _zero_pad_matrix(S):
    """(S+2, S): embed a length-S axis into a zero-padded length-(S+2) axis."""
    M = np.zeros((S + 2, S), np.float32)
    M[np.arange(1, S + 1), np.arange(S)] = 1.0
    return M


def _repl_pad_matrix(S):
    """(S+2, S): ReplicationPad(1) along one axis."""
    M = np.zeros((S + 2, S), np.float32)
    for p in range(S + 2):
        M[p, min(max(p - 1, 0), S - 1)] = 1.0
    return M


def _upsample_pad_matrix(S):
    """(2S+2, S): bilinear x2 (align_corners=True) then ReplicationPad(1)."""
    out = 2 * S
    M = np.zeros((out + 2, S), np.float32)
    for p in range(out + 2):
        u = min(max(p - 1, 0), out - 1)
        src = u * (S - 1) / (out - 1) if out > 1 else 0.0
        lo = min(int(math.floor(src)), S - 1)
        hi = min(lo + 1, S - 1)
        f = src - lo
        M[p, lo] += 1.0 - f
        M[p, hi] += f
    return M


_PAD_FNS = {'zero': _zero_pad_matrix,
            'repl': _repl_pad_matrix,
            'up_repl': _upsample_pad_matrix}


# ----------------------------------------------------------------------------
# Pallas helpers
# ----------------------------------------------------------------------------
def _full_spec(shape):
    nd = len(shape)
    return pl.BlockSpec(tuple(shape), lambda i: (0,) * nd)


# ----------------------------------------------------------------------------
# Trace-time construction of the per-layer matmul operands
#   Y = act( BN( bias + sum_kh  kron(I_N, L[kh]) @ X @ R[kh] ) )
# on a batch-folded channels-last slab X of shape (N*Hin, Win*Cin).
# ----------------------------------------------------------------------------
def _build_conv_layer(wconv, bias, pad_kind, stride, N, Hin, Win, bn):
    w_np = np.asarray(wconv, np.float32)
    Cout, Cin, KH, KW = w_np.shape
    PH = _PAD_FNS[pad_kind](Hin)
    PW = _PAD_FNS[pad_kind](Win)
    Ho = (PH.shape[0] - KH) // stride + 1
    Wo = (PW.shape[0] - KW) // stride + 1
    eyeN = np.eye(N, dtype=np.float32)

    Ls, Rs = [], []
    for kh in range(KH):
        Lk = PH[kh + stride * np.arange(Ho), :]                       # (Ho, Hin)
        Ls.append(np.kron(eyeN, Lk))                                  # (N*Ho, N*Hin), batch fold
        r = np.zeros((Win * Cin, Wo * Cout), np.float32)
        for kw in range(KW):
            sel = PW[kw + stride * np.arange(Wo), :]                  # (Wo, Win)
            wt = w_np[:, :, kh, kw].T                                 # (Cin, Cout)
            r += np.einsum('ow,ic->wioc', sel, wt).reshape(Win * Cin, Wo * Cout)
        Rs.append(r)

    # Pick the association order that minimizes the big matmul's M:
    #   encoders / SSC (Ho <= Hin): L-first; bilinear-x2 decoders (Ho = 2*Hin): R-first.
    l_first = Ho <= Hin
    L_stack = jnp.asarray(np.stack(Ls), dtype=jnp.bfloat16)           # (T, N*Ho, N*Hin)
    if l_first:
        R_op = jnp.asarray(np.concatenate(Rs, axis=0), dtype=jnp.bfloat16)  # (T*Win*Cin, Wo*Cout)
    else:
        R_op = jnp.asarray(np.concatenate(Rs, axis=1), dtype=jnp.bfloat16)  # (Win*Cin, T*Wo*Cout)

    bias_row = jnp.asarray(np.tile(np.asarray(bias, np.float32), Wo)[None, :])
    arrays = [L_stack, R_op, bias_row]
    desc = dict(T=int(KH), l_first=bool(l_first), wc_out=int(Wo * Cout),
                cout=int(Cout), has_bn=bn is not None)
    if bn is not None:
        gamma, beta, eps = bn
        arrays.append(jnp.asarray(np.tile(np.asarray(gamma, np.float32), Wo)[None, :]))
        arrays.append(jnp.asarray(np.tile(np.asarray(beta, np.float32), Wo)[None, :]))
        desc['eps'] = float(eps)
        desc['count'] = float(N * Ho * Wo)
    return arrays, desc, Ho, Wo, Cout


# ----------------------------------------------------------------------------
# In-kernel per-layer apply (operates on traced values, bf16 MXU / f32 accumulate)
# ----------------------------------------------------------------------------
def _apply_conv_layer(x, refs, d):
    l_ref, r_ref, b_ref = refs[0], refs[1], refs[2]
    T, wc = d['T'], d['wc_out']
    xb = x.astype(jnp.bfloat16)

    if d['l_first']:
        # Collapse taps: Y = [L0 X | L1 X | ...] @ vstack(R_t)  (one K = T*Win*Cin matmul)
        parts = [jnp.dot(l_ref[t], xb, preferred_element_type=jnp.float32)
                 for t in range(T)]
        a = jnp.concatenate(parts, axis=-1).astype(jnp.bfloat16)
        y = jnp.dot(a, r_ref[...], preferred_element_type=jnp.float32)
    else:
        # Upsampling layer (Ho > Hin): reassociate -> ONE big X @ hstack(R_t), then T small
        # row-mixing left matmuls accumulated in traced f32 (no VMEM round-trips).
        big = jnp.dot(xb, r_ref[...], preferred_element_type=jnp.float32).astype(jnp.bfloat16)
        y = None
        for t in range(T):
            part = jnp.dot(l_ref[t], big[:, t * wc:(t + 1) * wc],
                           preferred_element_type=jnp.float32)
            y = part if y is None else y + part

    y = y + b_ref[...]

    if d['has_bn']:
        cout = d['cout']
        inv = 1.0 / d['count']
        # Skinny channel reduce / broadcast matrices generated from iota (no dense
        # (wc, wc) mask, no extra refs).  BN statistics stay in f32; two-pass centered var.
        red = (lax.broadcasted_iota(jnp.int32, (wc, cout), 0) % cout ==
               lax.broadcasted_iota(jnp.int32, (wc, cout), 1)).astype(jnp.float32)
        bca = (lax.broadcasted_iota(jnp.int32, (cout, wc), 1) % cout ==
               lax.broadcasted_iota(jnp.int32, (cout, wc), 0)).astype(jnp.float32)
        srow = jnp.sum(y, axis=0, keepdims=True)
        mean_row = jnp.dot(jnp.dot(srow, red, preferred_element_type=jnp.float32), bca,
                           preferred_element_type=jnp.float32) * inv
        c = y - mean_row
        qrow = jnp.sum(c * c, axis=0, keepdims=True)
        var_row = jnp.dot(jnp.dot(qrow, red, preferred_element_type=jnp.float32), bca,
                          preferred_element_type=jnp.float32) * inv
        z = c * (refs[3][...] * lax.rsqrt(var_row + d['eps'])) + refs[4][...]
        y = jnp.where(z >= 0, z, 0.2 * z)            # LeakyReLU(0.2)
    return y


def _make_stage_kernel(descs):
    def kernel(*refs):
        o_ref = refs[-1]
        x = refs[0][...]
        idx = 1
        for d in descs:
            n = 5 if d['has_bn'] else 3
            x = _apply_conv_layer(x, refs[idx:idx + n], d)
            idx += n
        o_ref[...] = x
    return kernel


def conv_stage_pallas(x_slab, layer_arrays, descs, out_shape):
    """One pallas_call for a whole stack of conv layers; intermediates stay in vregs/VMEM."""
    flat = [x_slab]
    for arrs in layer_arrays:
        flat.extend(arrs)
    return pl.pallas_call(
        _make_stage_kernel(descs),
        out_shape=jax.ShapeDtypeStruct(out_shape, jnp.float32),
        grid_spec=pltpu.PrefetchScalarGridSpec(
            num_scalar_prefetch=0, grid=(1,),
            in_specs=[_full_spec(a.shape) for a in flat],
            out_specs=_full_spec(out_shape)),
        compiler_params=pltpu.CompilerParams(dimension_semantics=("arbitrary",)),
    )(*flat)


# ----------------------------------------------------------------------------
# Linear kernels (bf16 MXU inputs, f32 accumulate)
# ----------------------------------------------------------------------------
def _make_linear_kernel(act):
    def kernel(x_ref, w_ref, b_ref, o_ref):
        y = jnp.dot(x_ref[...].astype(jnp.bfloat16), w_ref[...],
                    preferred_element_type=jnp.float32) + b_ref[...]
        if act == 'relu':
            y = jnp.maximum(y, 0.0)
        o_ref[...] = y
    return kernel


def linear_pallas(x, w_t_bf16, b_row, act=None):
    # TODO(synk): block (M, N, K) with a VMEM f32 accumulator for production-size weights.
    N = x.shape[0]
    Dout = w_t_bf16.shape[1]
    return pl.pallas_call(
        _make_linear_kernel(act),
        out_shape=jax.ShapeDtypeStruct((N, Dout), jnp.float32),
        grid_spec=pltpu.PrefetchScalarGridSpec(
            num_scalar_prefetch=0, grid=(1,),
            in_specs=[_full_spec(x.shape), _full_spec(w_t_bf16.shape), _full_spec(b_row.shape)],
            out_specs=_full_spec((N, Dout))),
        compiler_params=pltpu.CompilerParams(dimension_semantics=("arbitrary",)),
    )(x, w_t_bf16, b_row)


def _latent_kernel(h_ref, wm_ref, bm_ref, wv_ref, bv_ref, e_ref, mu_ref, lv_ref, z_ref):
    hb = h_ref[...].astype(jnp.bfloat16)
    mu = jnp.dot(hb, wm_ref[...], preferred_element_type=jnp.float32) + bm_ref[...]
    lv = jnp.dot(hb, wv_ref[...], preferred_element_type=jnp.float32) + bv_ref[...]
    mu_ref[...] = mu
    lv_ref[...] = lv
    z_ref[...] = mu + e_ref[...] * jnp.exp(0.5 * lv)       # reparametrize: eps*std + mu


def latent_pallas(h, wmu_t, bmu_row, wlv_t, blv_row, eps_noise):
    N = h.shape[0]
    Lat = wmu_t.shape[1]
    args = (h, wmu_t, bmu_row, wlv_t, blv_row, eps_noise)
    return pl.pallas_call(
        _latent_kernel,
        out_shape=(jax.ShapeDtypeStruct((N, Lat), jnp.float32),) * 3,
        grid_spec=pltpu.PrefetchScalarGridSpec(
            num_scalar_prefetch=0, grid=(1,),
            in_specs=[_full_spec(a.shape) for a in args],
            out_specs=tuple(_full_spec((N, Lat)) for _ in range(3))),
        compiler_params=pltpu.CompilerParams(dimension_semantics=("arbitrary",)),
    )(*args)


# ----------------------------------------------------------------------------
# Full VAE2D forward (5 Pallas dispatches)
# ----------------------------------------------------------------------------
def vae2d_forward(params, x, eps_noise, cfg):
    N, Cin, H, W = x.shape
    img, nf, lat = cfg['img_size'], cfg['n_filter'], cfg['latent']
    Cout = cfg['out_channels']
    n_layers = int(round(math.log2(img)) - 1)
    feat = int(nf * 2 ** (n_layers - 2) * (img / 2 ** n_layers) ** 2)
    s_low = img // 2 ** n_layers
    c_dec_in = int(2 * nf * 2 ** (n_layers - 2))

    # ----- encode: whole encoder stack fused into one pallas_call -----
    slab = jnp.transpose(x, (0, 2, 3, 1)).reshape(N * H, W * Cin)     # batch-folded slab
    h_sp, w_sp, c_cur = H, W, Cin
    enc_arrays, enc_descs = [], []
    for layer in params['encoders']:
        if layer['type'] == 'enc':
            arrs, desc, h_sp, w_sp, c_cur = _build_conv_layer(
                layer['w'], layer['b'], 'zero', 2, N, h_sp, w_sp,
                (layer['gamma'], layer['beta'], 1e-5))
        else:   # SameSizeConv2D
            arrs, desc, h_sp, w_sp, c_cur = _build_conv_layer(
                layer['w'], layer['b'], 'repl', 1, N, h_sp, w_sp, None)
        enc_arrays.append(arrs)
        enc_descs.append(desc)
    enc_slab = conv_stage_pallas(slab, enc_arrays, enc_descs, (N * h_sp, w_sp * c_cur))
    h_flat = jnp.transpose(enc_slab.reshape(N, h_sp, w_sp, c_cur),
                           (0, 3, 1, 2)).reshape(N, feat)             # torch (c,h,w) flatten

    # ----- fc1 / fc2 / reparametrize (one fused kernel) -----
    mu, logvar, z = latent_pallas(
        h_flat,
        jnp.transpose(params['fc1']['w']).astype(jnp.bfloat16), params['fc1']['b'][None, :],
        jnp.transpose(params['fc2']['w']).astype(jnp.bfloat16), params['fc2']['b'][None, :],
        eps_noise)

    # ----- decode -----
    hdec = linear_pallas(z, jnp.transpose(params['d1']['w']).astype(jnp.bfloat16),
                         params['d1']['b'][None, :], act='relu')
    slab = jnp.transpose(hdec.reshape(N, c_dec_in, s_low, s_low),
                         (0, 2, 3, 1)).reshape(N * s_low, s_low * c_dec_in)
    h_sp = w_sp = s_low
    c_cur = c_dec_in
    dec_arrays, dec_descs = [], []
    for layer in params['decoders']:
        if layer['type'] == 'dec':
            arrs, desc, h_sp, w_sp, c_cur = _build_conv_layer(
                layer['w'], layer['b'], 'up_repl', 1, N, h_sp, w_sp,
                (layer['gamma'], layer['beta'], 1e-3))
        elif layer['type'] == 'ssc':
            arrs, desc, h_sp, w_sp, c_cur = _build_conv_layer(
                layer['w'], layer['b'], 'repl', 1, N, h_sp, w_sp, None)
        else:   # final upsample + pad + conv (no BN / activation)
            arrs, desc, h_sp, w_sp, c_cur = _build_conv_layer(
                layer['w'], layer['b'], 'up_repl', 1, N, h_sp, w_sp, None)
        dec_arrays.append(arrs)
        dec_descs.append(desc)
    dec_slab = conv_stage_pallas(slab, dec_arrays, dec_descs, (N * h_sp, w_sp * c_cur))

    dec_flat = jnp.transpose(dec_slab.reshape(N, h_sp, w_sp, Cout),
                             (0, 3, 1, 2)).reshape(N, Cout * img * img)
    res_flat = linear_pallas(dec_flat,
                             jnp.transpose(params['final']['w']).astype(jnp.bfloat16),
                             params['final']['b'][None, :], act=None)
    return res_flat.reshape(N, Cout, img, img), mu, logvar


# ----------------------------------------------------------------------------
# Pure-JAX f32 reference (mirrors the PyTorch module op-for-op) for self-check
# ----------------------------------------------------------------------------
def _conv_ref(x, w, b, stride, pad):
    y = lax.conv_general_dilated(
        x, w, (stride, stride), [(pad, pad), (pad, pad)],
        dimension_numbers=('NCHW', 'OIHW', 'NCHW'),
        precision=lax.Precision.HIGHEST)
    return y + b[None, :, None, None]


def _bn_ref(x, gamma, beta, eps):
    mean = jnp.mean(x, axis=(0, 2, 3), keepdims=True)
    var = jnp.mean((x - mean) ** 2, axis=(0, 2, 3), keepdims=True)
    return ((x - mean) / jnp.sqrt(var + eps) * gamma[None, :, None, None]
            + beta[None, :, None, None])


def _leaky_ref(x):
    return jnp.where(x >= 0, x, 0.2 * x)


def _upsample_ref(x):
    N, C, H, W = x.shape
    AH = jnp.asarray(_upsample_pad_matrix(H)[1:2 * H + 1])
    AW = jnp.asarray(_upsample_pad_matrix(W)[1:2 * W + 1])
    y = jnp.einsum('ph,nchw->ncpw', AH, x, precision=lax.Precision.HIGHEST)
    y = jnp.einsum('qw,ncpw->ncpq', AW, y, precision=lax.Precision.HIGHEST)
    return y


def _reppad_ref(x):
    return jnp.pad(x, ((0, 0), (0, 0), (1, 1), (1, 1)), mode='edge')


def _linear_ref(x, w, b):
    return jnp.dot(x, w.T, precision=lax.Precision.HIGHEST) + b


def vae2d_reference(params, x, eps_noise, cfg):
    N = x.shape[0]
    img, nf = cfg['img_size'], cfg['n_filter']
    Cout = cfg['out_channels']
    n_layers = int(round(math.log2(img)) - 1)
    feat = int(nf * 2 ** (n_layers - 2) * (img / 2 ** n_layers) ** 2)
    s_low = img // 2 ** n_layers
    c_dec_in = int(2 * nf * 2 ** (n_layers - 2))

    h = x
    for layer in params['encoders']:
        if layer['type'] == 'enc':
            h = _leaky_ref(_bn_ref(_conv_ref(h, layer['w'], layer['b'], 2, 1),
                                   layer['gamma'], layer['beta'], 1e-5))
        else:
            h = _conv_ref(_reppad_ref(h), layer['w'], layer['b'], 1, 0)
    h_flat = h.reshape(N, feat)
    mu = _linear_ref(h_flat, params['fc1']['w'], params['fc1']['b'])
    logvar = _linear_ref(h_flat, params['fc2']['w'], params['fc2']['b'])
    z = mu + eps_noise * jnp.exp(0.5 * logvar)

    hd = jnp.maximum(_linear_ref(z, params['d1']['w'], params['d1']['b']), 0.0)
    hd = hd.reshape(N, c_dec_in, s_low, s_low)
    for layer in params['decoders']:
        if layer['type'] == 'dec':
            hd = _conv_ref(_reppad_ref(_upsample_ref(hd)), layer['w'], layer['b'], 1, 0)
            hd = _leaky_ref(_bn_ref(hd, layer['gamma'], layer['beta'], 1e-3))
        elif layer['type'] == 'ssc':
            hd = _conv_ref(_reppad_ref(hd), layer['w'], layer['b'], 1, 0)
        else:
            hd = _conv_ref(_reppad_ref(_upsample_ref(hd)), layer['w'], layer['b'], 1, 0)
    res = _linear_ref(hd.reshape(N, Cout * img * img),
                      params['final']['w'], params['final']['b'])
    return res.reshape(N, Cout, img, img), mu, logvar


# ----------------------------------------------------------------------------
# Parameter init (PyTorch-default-like uniform(-1/sqrt(fan_in), 1/sqrt(fan_in)))
# ----------------------------------------------------------------------------
def init_params(key, cfg):
    Cin, Cout = cfg['in_channels'], cfg['out_channels']
    nf, img, lat = cfg['n_filter'], cfg['img_size'], cfg['latent']
    n_layers = int(round(math.log2(img)) - 1)
    feat = int(nf * 2 ** (n_layers - 2) * (img / 2 ** n_layers) ** 2)

    kit = iter(jax.random.split(key, 128))

    def conv(cout, cin, k):
        bound = 1.0 / math.sqrt(cin * k * k)
        return {'w': jax.random.uniform(next(kit), (cout, cin, k, k), jnp.float32, -bound, bound),
                'b': jax.random.uniform(next(kit), (cout,), jnp.float32, -bound, bound)}

    def lin(dout, din):
        bound = 1.0 / math.sqrt(din)
        return {'w': jax.random.uniform(next(kit), (dout, din), jnp.float32, -bound, bound),
                'b': jax.random.uniform(next(kit), (dout,), jnp.float32, -bound, bound)}

    def with_bn(d, c):
        d['gamma'] = jnp.ones((c,), jnp.float32)
        d['beta'] = jnp.zeros((c,), jnp.float32)
        return d

    encoders = []
    e = with_bn(conv(nf, Cin, 4), nf); e['type'] = 'enc'; encoders.append(e)
    for i in range(n_layers - 2):
        c_in = nf * 2 ** i
        e = with_bn(conv(2 * c_in, c_in, 4), 2 * c_in); e['type'] = 'enc'; encoders.append(e)
        s = conv(2 * c_in, 2 * c_in, 3); s['type'] = 'ssc'; encoders.append(s)
    c_top = nf * 2 ** (n_layers - 2)
    e = with_bn(conv(c_top, c_top, 4), c_top); e['type'] = 'enc'; encoders.append(e)

    decoders = []
    for i in range(n_layers - 2, -1, -1):
        c = nf * 2 ** i
        d = with_bn(conv(c, 2 * c, 3), c); d['type'] = 'dec'; decoders.append(d)
        s = conv(c, c, 3); s['type'] = 'ssc'; decoders.append(s)
    d = conv(Cout, nf, 3); d['type'] = 'dec_plain'; decoders.append(d)

    return {'encoders': encoders, 'decoders': decoders,
            'fc1': lin(lat, feat), 'fc2': lin(lat, feat), 'd1': lin(2 * feat, lat),
            'final': lin(Cout * img * img, Cout * img * img)}


# ----------------------------------------------------------------------------
if __name__ == "__main__":
    # Small-but-consistent VAE2D config: img_size=16 -> n_layers=3, n_filter=8,
    # latent_variable_size=128, batch=2, in/out channels=2.
    cfg = dict(batch=2, in_channels=2, out_channels=2,
               img_size=16, n_filter=8, latent=128)

    key = jax.random.PRNGKey(0)
    k_param, k_x, k_eps = jax.random.split(key, 3)
    params = init_params(k_param, cfg)
    x = jax.random.normal(k_x, (cfg['batch'], cfg['in_channels'],
                                cfg['img_size'], cfg['img_size']), jnp.float32)
    # reparametrization noise is sampled in the wrapper so the Pallas path and the
    # reference share identical randomness (z = mu + eps * exp(0.5*logvar)).
    eps_noise = jax.random.normal(k_eps, (cfg['batch'], cfg['latent']), jnp.float32)

    res, mu, logvar = vae2d_forward(params, x, eps_noise, cfg)
    res = jax.block_until_ready(res)
    assert res.shape == (cfg['batch'], cfg['out_channels'], cfg['img_size'], cfg['img_size'])
    assert mu.shape == (cfg['batch'], cfg['latent'])
    assert logvar.shape == (cfg['batch'], cfg['latent'])

    # Tolerance covers bf16 MXU operand rounding (f32 accumulation, f32 BN stats).
    ref_res, ref_mu, ref_lv = vae2d_reference(params, x, eps_noise, cfg)
    np.testing.assert_allclose(np.asarray(mu), np.asarray(ref_mu), rtol=5e-2, atol=5e-2)
    np.testing.assert_allclose(np.asarray(logvar), np.asarray(ref_lv), rtol=5e-2, atol=5e-2)
    np.testing.assert_allclose(np.asarray(res), np.asarray(ref_res), rtol=5e-2, atol=5e-2)

    print("KERNEL_OK")
</pallas_src>

<mosaic_0001>
module attributes {stable_mosaic.version = 11 : i64} {
  func.func @kernel(%arg0: i32, %arg1: memref<32x32xf32, #tpu.memory_space<vmem>>, %arg2: memref<4x16x32xbf16, #tpu.memory_space<vmem>>, %arg3: memref<128x64xbf16, #tpu.memory_space<vmem>>, %arg4: memref<1x64xf32, #tpu.memory_space<vmem>>, %arg5: memref<1x64xf32, #tpu.memory_space<vmem>>, %arg6: memref<1x64xf32, #tpu.memory_space<vmem>>, %arg7: memref<4x8x16xbf16, #tpu.memory_space<vmem>>, %arg8: memref<256x64xbf16, #tpu.memory_space<vmem>>, %arg9: memref<1x64xf32, #tpu.memory_space<vmem>>, %arg10: memref<1x64xf32, #tpu.memory_space<vmem>>, %arg11: memref<1x64xf32, #tpu.memory_space<vmem>>, %arg12: memref<3x8x8xbf16, #tpu.memory_space<vmem>>, %arg13: memref<192x64xbf16, #tpu.memory_space<vmem>>, %arg14: memref<1x64xf32, #tpu.memory_space<vmem>>, %arg15: memref<4x4x8xbf16, #tpu.memory_space<vmem>>, %arg16: memref<256x32xbf16, #tpu.memory_space<vmem>>, %arg17: memref<1x32xf32, #tpu.memory_space<vmem>>, %arg18: memref<1x32xf32, #tpu.memory_space<vmem>>, %arg19: memref<1x32xf32, #tpu.memory_space<vmem>>, %arg20: memref<4x32xf32, #tpu.memory_space<vmem>>) attributes {dimension_semantics = [#tpu.dimension_semantics<arbitrary>], iteration_bounds = array<i64: 1>, scalar_prefetch = 0 : i64, scratch_operands = 0 : i64, tpu.core_type = #tpu.core_type<tc>, window_params = [{pipeline_mode = #tpu.pipeline_mode<synchronous>, transform_indices = @transform_0, window_bounds = array<i64: 32, 32>}, {pipeline_mode = #tpu.pipeline_mode<synchronous>, transform_indices = @transform_1, window_bounds = array<i64: 4, 16, 32>}, {pipeline_mode = #tpu.pipeline_mode<synchronous>, transform_indices = @transform_2, window_bounds = array<i64: 128, 64>}, {pipeline_mode = #tpu.pipeline_mode<synchronous>, transform_indices = @transform_3, window_bounds = array<i64: 1, 64>}, {pipeline_mode = #tpu.pipeline_mode<synchronous>, transform_indices = @transform_4, window_bounds = array<i64: 1, 64>}, {pipeline_mode = #tpu.pipeline_mode<synchronous>, transform_indices = @transform_5, window_bounds = array<i64: 1, 64>}, {pipeline_mode = #tpu.pipeline_mode<synchronous>, transform_indices = @transform_6, window_bounds = array<i64: 4, 8, 16>}, {pipeline_mode = #tpu.pipeline_mode<synchronous>, transform_indices = @transform_7, window_bounds = array<i64: 256, 64>}, {pipeline_mode = #tpu.pipeline_mode<synchronous>, transform_indices = @transform_8, window_bounds = array<i64: 1, 64>}, {pipeline_mode = #tpu.pipeline_mode<synchronous>, transform_indices = @transform_9, window_bounds = array<i64: 1, 64>}, {pipeline_mode = #tpu.pipeline_mode<synchronous>, transform_indices = @transform_10, window_bounds = array<i64: 1, 64>}, {pipeline_mode = #tpu.pipeline_mode<synchronous>, transform_indices = @transform_11, window_bounds = array<i64: 3, 8, 8>}, {pipeline_mode = #tpu.pipeline_mode<synchronous>, transform_indices = @transform_12, window_bounds = array<i64: 192, 64>}, {pipeline_mode = #tpu.pipeline_mode<synchronous>, transform_indices = @transform_13, window_bounds = array<i64: 1, 64>}, {pipeline_mode = #tpu.pipeline_mode<synchronous>, transform_indices = @transform_14, window_bounds = array<i64: 4, 4, 8>}, {pipeline_mode = #tpu.pipeline_mode<synchronous>, transform_indices = @transform_15, window_bounds = array<i64: 256, 32>}, {pipeline_mode = #tpu.pipeline_mode<synchronous>, transform_indices = @transform_16, window_bounds = array<i64: 1, 32>}, {pipeline_mode = #tpu.pipeline_mode<synchronous>, transform_indices = @transform_17, window_bounds = array<i64: 1, 32>}, {pipeline_mode = #tpu.pipeline_mode<synchronous>, transform_indices = @transform_18, window_bounds = array<i64: 1, 32>}, {pipeline_mode = #tpu.pipeline_mode<synchronous>, transform_indices = @transform_19, window_bounds = array<i64: 4, 32>}]} {
    %c0 = arith.constant 0 : index
    %c0_0 = arith.constant 0 : index
    %0 = vector.load %arg1[%c0, %c0_0] : memref<32x32xf32, #tpu.memory_space<vmem>>, vector<32x32xf32>
    %1 = arith.truncf %0 : vector<32x32xf32> to vector<32x32xbf16>
    %c0_1 = arith.constant 0 : index
    %c0_2 = arith.constant 0 : index
    %c0_3 = arith.constant 0 : index
    %2 = vector.load %arg2[%c0_1, %c0_2, %c0_3] : memref<4x16x32xbf16, #tpu.memory_space<vmem>>, vector<1x16x32xbf16>
    %3 = vector.shape_cast %2 : vector<1x16x32xbf16> to vector<16x32xbf16>
    %cst = arith.constant dense<0.000000e+00> : vector<16x32xf32>
    %4 = tpu.matmul %3, %1, %cst {dimension_numbers = #tpu.dot_dimension_numbers<[1], [0], [0], [1], [0, 0, 1, 1], [], []>} : vector<16x32xbf16>, vector<32x32xbf16>, vector<16x32xf32> -> vector<16x32xf32>
    %c1 = arith.constant 1 : index
    %c0_4 = arith.constant 0 : index
    %c0_5 = arith.constant 0 : index
    %5 = vector.load %arg2[%c1, %c0_4, %c0_5] : memref<4x16x32xbf16, #tpu.memory_space<vmem>>, vector<1x16x32xbf16>
    %6 = vector.shape_cast %5 : vector<1x16x32xbf16> to vector<16x32xbf16>
    %cst_6 = arith.constant dense<0.000000e+00> : vector<16x32xf32>
    %7 = tpu.matmul %6, %1, %cst_6 {dimension_numbers = #tpu.dot_dimension_numbers<[1], [0], [0], [1], [0, 0, 1, 1], [], []>} : vector<16x32xbf16>, vector<32x32xbf16>, vector<16x32xf32> -> vector<16x32xf32>
    %c2 = arith.constant 2 : index
    %c0_7 = arith.constant 0 : index
    %c0_8 = arith.constant 0 : index
    %8 = vector.load %arg2[%c2, %c0_7, %c0_8] : memref<4x16x32xbf16, #tpu.memory_space<vmem>>, vector<1x16x32xbf16>
    %9 = vector.shape_cast %8 : vector<1x16x32xbf16> to vector<16x32xbf16>
    %cst_9 = arith.constant dense<0.000000e+00> : vector<16x32xf32>
    %10 = tpu.matmul %9, %1, %cst_9 {dimension_numbers = #tpu.dot_dimension_numbers<[1], [0], [0], [1], [0, 0, 1, 1], [], []>} : vector<16x32xbf16>, vector<32x32xbf16>, vector<16x32xf32> -> vector<16x32xf32>
    %c3 = arith.constant 3 : index
    %c0_10 = arith.constant 0 : index
    %c0_11 = arith.constant 0 : index
    %11 = vector.load %arg2[%c3, %c0_10, %c0_11] : memref<4x16x32xbf16, #tpu.memory_space<vmem>>, vector<1x16x32xbf16>
    %12 = vector.shape_cast %11 : vector<1x16x32xbf16> to vector<16x32xbf16>
    %cst_12 = arith.constant dense<0.000000e+00> : vector<16x32xf32>
    %13 = tpu.matmul %12, %1, %cst_12 {dimension_numbers = #tpu.dot_dimension_numbers<[1], [0], [0], [1], [0, 0, 1, 1], [], []>} : vector<16x32xbf16>, vector<32x32xbf16>, vector<16x32xf32> -> vector<16x32xf32>
    %14 = tpu.concatenate %4, %7, %10, %13 in 1 : vector<16x32xf32>, vector<16x32xf32>, vector<16x32xf32>, vector<16x32xf32> -> vector<16x128xf32>
    %15 = arith.truncf %14 : vector<16x128xf32> to vector<16x128xbf16>
    %c0_13 = arith.constant 0 : index
    %c0_14 = arith.constant 0 : index
    %16 = vector.load %arg3[%c0_13, %c0_14] : memref<128x64xbf16, #tpu.memory_space<vmem>>, vector<128x64xbf16>
    %cst_15 = arith.constant dense<0.000000e+00> : vector<16x64xf32>
    %17 = tpu.matmul %15, %16, %cst_15 {dimension_numbers = #tpu.dot_dimension_numbers<[1], [0], [0], [1], [0, 0, 1, 1], [], []>} : vector<16x128xbf16>, vector<128x64xbf16>, vector<16x64xf32> -> vector<16x64xf32>
    %c0_16 = arith.constant 0 : index
    %c0_17 = arith.constant 0 : index
    %18 = vector.load %arg4[%c0_16, %c0_17] : memref<1x64xf32, #tpu.memory_space<vmem>>, vector<1x64xf32>
    %19 = vector.broadcast %18 : vector<1x64xf32> to vector<16x64xf32>
    %20 = arith.addf %17, %19 : vector<16x64xf32>
    %21 = tpu.iota {dimensions = array<i32: 0>} : vector<64x8xi32>
    %c8_i32 = arith.constant 8 : i32
    %c0_i32 = arith.constant 0 : i32
    %22 = arith.cmpi eq, %c8_i32, %c0_i32 : i32
    %c1_i32 = arith.constant 1 : i32
    %23 = arith.select %22, %c1_i32, %c8_i32 : i32
    %24 = vector.broadcast %23 : i32 to vector<64x8xi32>
    %25 = arith.remsi %21, %24 : vector<64x8xi32>
    %c0_i32_18 = arith.constant 0 : i32
    %26 = vector.broadcast %c0_i32_18 : i32 to vector<64x8xi32>
    %27 = arith.cmpi ne, %25, %26 : vector<64x8xi32>
    %c0_i32_19 = arith.constant 0 : i32
    %28 = vector.broadcast %c0_i32_19 : i32 to vector<64x8xi32>
    %29 = arith.cmpi slt, %25, %28 : vector<64x8xi32>
    %c0_i32_20 = arith.constant 0 : i32
    %30 = arith.cmpi slt, %23, %c0_i32_20 : i32
    %31 = vector.broadcast %30 : i1 to vector<64x8xi1>
    %32 = vector.broadcast %31 : vector<64x8xi1> to vector<64x8xi1>
    %33 = arith.xori %29, %32 : vector<64x8xi1>
    %34 = arith.andi %33, %27 : vector<64x8xi1>
    %35 = vector.broadcast %23 : i32 to vector<64x8xi32>
    %36 = arith.addi %25, %35 : vector<64x8xi32>
    %37 = arith.select %34, %36, %25 : vector<64x8xi1>, vector<64x8xi32>
    %38 = tpu.iota {dimensions = array<i32: 1>} : vector<64x8xi32>
    %39 = arith.cmpi eq, %37, %38 : vector<64x8xi32>
    %40 = arith.extui %39 : vector<64x8xi1> to vector<64x8xi32>
    %41 = arith.sitofp %40 : vector<64x8xi32> to vector<64x8xf32>
    %42 = tpu.iota {dimensions = array<i32: 1>} : vector<8x64xi32>
    %c8_i32_21 = arith.constant 8 : i32
    %c0_i32_22 = arith.constant 0 : i32
    %43 = arith.cmpi eq, %c8_i32_21, %c0_i32_22 : i32
    %c1_i32_23 = arith.constant 1 : i32
    %44 = arith.select %43, %c1_i32_23, %c8_i32_21 : i32
    %45 = vector.broadcast %44 : i32 to vector<8x64xi32>
    %46 = arith.remsi %42, %45 : vector<8x64xi32>
    %c0_i32_24 = arith.constant 0 : i32
    %47 = vector.broadcast %c0_i32_24 : i32 to vector<8x64xi32>
    %48 = arith.cmpi ne, %46, %47 : vector<8x64xi32>
    %c0_i32_25 = arith.constant 0 : i32
    %49 = vector.broadcast %c0_i32_25 : i32 to vector<8x64xi32>
    %50 = arith.cmpi slt, %46, %49 : vector<8x64xi32>
    %c0_i32_26 = arith.constant 0 : i32
    %51 = arith.cmpi slt, %44, %c0_i32_26 : i32
    %52 = vector.broadcast %51 : i1 to vector<8x64xi1>
    %53 = vector.broadcast %52 : vector<8x64xi1> to vector<8x64xi1>
    %54 = arith.xori %50, %53 : vector<8x64xi1>
    %55 = arith.andi %54, %48 : vector<8x64xi1>
    %56 = vector.broadcast %44 : i32 to vector<8x64xi32>
    %57 = arith.addi %46, %56 : vector<8x64xi32>
    %58 = arith.select %55, %57, %46 : vector<8x64xi1>, vector<8x64xi32>
    %59 = tpu.iota {dimensions = array<i32: 0>} : vector<8x64xi32>
    %60 = arith.cmpi eq, %58, %59 : vector<8x64xi32>
    %61 = arith.extui %60 : vector<8x64xi1> to vector<8x64xi32>
    %62 = arith.sitofp %61 : vector<8x64xi32> to vector<8x64xf32>
    %cst_27 = arith.constant dense<0.000000e+00> : vector<64xf32>
    %63 = vector.multi_reduction <add>, %20, %cst_27 [0] : vector<16x64xf32> to vector<64xf32>
    %64 = vector.shape_cast %63 : vector<64xf32> to vector<1x64xf32>
    %cst_28 = arith.constant dense<0.000000e+00> : vector<1x8xf32>
    %65 = tpu.matmul %64, %41, %cst_28 {dimension_numbers = #tpu.dot_dimension_numbers<[1], [0], [0], [1], [0, 0, 1, 1], [], []>} : vector<1x64xf32>, vector<64x8xf32>, vector<1x8xf32> -> vector<1x8xf32>
    %cst_29 = arith.constant dense<0.000000e+00> : vector<1x64xf32>
    %66 = tpu.matmul %65, %62, %cst_29 {dimension_numbers = #tpu.dot_dimension_numbers<[1], [0], [0], [1], [0, 0, 1, 1], [], []>} : vector<1x8xf32>, vector<8x64xf32>, vector<1x64xf32> -> vector<1x64xf32>
    %cst_30 = arith.constant 7.812500e-03 : f32
    %67 = vector.broadcast %cst_30 : f32 to vector<1x64xf32>
    %68 = arith.mulf %66, %67 : vector<1x64xf32>
    %69 = vector.broadcast %68 : vector<1x64xf32> to vector<16x64xf32>
    %70 = arith.subf %20, %69 : vector<16x64xf32>
    %71 = arith.mulf %70, %70 : vector<16x64xf32>
    %cst_31 = arith.constant dense<0.000000e+00> : vector<64xf32>
    %72 = vector.multi_reduction <add>, %71, %cst_31 [0] : vector<16x64xf32> to vector<64xf32>
    %73 = vector.shape_cast %72 : vector<64xf32> to vector<1x64xf32>
    %cst_32 = arith.constant dense<0.000000e+00> : vector<1x8xf32>
    %74 = tpu.matmul %73, %41, %cst_32 {dimension_numbers = #tpu.dot_dimension_numbers<[1], [0], [0], [1], [0, 0, 1, 1], [], []>} : vector<1x64xf32>, vector<64x8xf32>, vector<1x8xf32> -> vector<1x8xf32>
    %cst_33 = arith.constant dense<0.000000e+00> : vector<1x64xf32>
    %75 = tpu.matmul %74, %62, %cst_33 {dimension_numbers = #tpu.dot_dimension_numbers<[1], [0], [0], [1], [0, 0, 1, 1], [], []>} : vector<1x8xf32>, vector<8x64xf32>, vector<1x64xf32> -> vector<1x64xf32>
    %cst_34 = arith.constant 7.812500e-03 : f32
    %76 = vector.broadcast %cst_34 : f32 to vector<1x64xf32>
    %77 = arith.mulf %75, %76 : vector<1x64xf32>
    %c0_35 = arith.constant 0 : index
    %c0_36 = arith.constant 0 : index
    %78 = vector.load %arg5[%c0_35, %c0_36] : memref<1x64xf32, #tpu.memory_space<vmem>>, vector<1x64xf32>
    %cst_37 = arith.constant 9.99999974E-6 : f32
    %79 = vector.broadcast %cst_37 : f32 to vector<1x64xf32>
    %80 = arith.addf %77, %79 : vector<1x64xf32>
    %81 = math.rsqrt %80 : vector<1x64xf32>
    %82 = arith.mulf %78, %81 : vector<1x64xf32>
    %83 = vector.broadcast %82 : vector<1x64xf32> to vector<16x64xf32>
    %84 = arith.mulf %70, %83 : vector<16x64xf32>
    %c0_38 = arith.constant 0 : index
    %c0_39 = arith.constant 0 : index
    %85 = vector.load %arg6[%c0_38, %c0_39] : memref<1x64xf32, #tpu.memory_space<vmem>>, vector<1x64xf32>
    %86 = vector.broadcast %85 : vector<1x64xf32> to vector<16x64xf32>
    %87 = arith.addf %84, %86 : vector<16x64xf32>
    %cst_40 = arith.constant 0.000000e+00 : f32
    %88 = vector.broadcast %cst_40 : f32 to vector<16x64xf32>
    %89 = arith.cmpf oge, %87, %88 : vector<16x64xf32>
    %cst_41 = arith.constant 2.000000e-01 : f32
    %90 = vector.broadcast %cst_41 : f32 to vector<16x64xf32>
    %91 = arith.mulf %90, %87 : vector<16x64xf32>
    %92 = arith.select %89, %87, %91 : vector<16x64xi1>, vector<16x64xf32>
    %93 = arith.truncf %92 : vector<16x64xf32> to vector<16x64xbf16>
    %c0_42 = arith.constant 0 : index
    %c0_43 = arith.constant 0 : index
    %c0_44 = arith.constant 0 : index
    %94 = vector.load %arg7[%c0_42, %c0_43, %c0_44] : memref<4x8x16xbf16, #tpu.memory_space<vmem>>, vector<1x8x16xbf16>
    %95 = vector.shape_cast %94 : vector<1x8x16xbf16> to vector<8x16xbf16>
    %cst_45 = arith.constant dense<0.000000e+00> : vector<8x64xf32>
    %96 = tpu.matmul %95, %93, %cst_45 {dimension_numbers = #tpu.dot_dimension_numbers<[1], [0], [0], [1], [0, 0, 1, 1], [], []>} : vector<8x16xbf16>, vector<16x64xbf16>, vector<8x64xf32> -> vector<8x64xf32>
    %c1_46 = arith.constant 1 : index
    %c0_47 = arith.constant 0 : index
    %c0_48 = arith.constant 0 : index
    %97 = vector.load %arg7[%c1_46, %c0_47, %c0_48] : memref<4x8x16xbf16, #tpu.memory_space<vmem>>, vector<1x8x16xbf16>
    %98 = vector.shape_cast %97 : vector<1x8x16xbf16> to vector<8x16xbf16>
    %cst_49 = arith.constant dense<0.000000e+00> : vector<8x64xf32>
    %99 = tpu.matmul %98, %93, %cst_49 {dimension_numbers = #tpu.dot_dimension_numbers<[1], [0], [0], [1], [0, 0, 1, 1], [], []>} : vector<8x16xbf16>, vector<16x64xbf16>, vector<8x64xf32> -> vector<8x64xf32>
    %c2_50 = arith.constant 2 : index
    %c0_51 = arith.constant 0 : index
    %c0_52 = arith.constant 0 : index
    %100 = vector.load %arg7[%c2_50, %c0_51, %c0_52] : memref<4x8x16xbf16, #tpu.memory_space<vmem>>, vector<1x8x16xbf16>
    %101 = vector.shape_cast %100 : vector<1x8x16xbf16> to vector<8x16xbf16>
    %cst_53 = arith.constant dense<0.000000e+00> : vector<8x64xf32>
    %102 = tpu.matmul %101, %93, %cst_53 {dimension_numbers = #tpu.dot_dimension_numbers<[1], [0], [0], [1], [0, 0, 1, 1], [], []>} : vector<8x16xbf16>, vector<16x64xbf16>, vector<8x64xf32> -> vector<8x64xf32>
    %c3_54 = arith.constant 3 : index
    %c0_55 = arith.constant 0 : index
    %c0_56 = arith.constant 0 : index
    %103 = vector.load %arg7[%c3_54, %c0_55, %c0_56] : memref<4x8x16xbf16, #tpu.memory_space<vmem>>, vector<1x8x16xbf16>
    %104 = vector.shape_cast %103 : vector<1x8x16xbf16> to vector<8x16xbf16>
    %cst_57 = arith.constant dense<0.000000e+00> : vector<8x64xf32>
    %105 = tpu.matmul %104, %93, %cst_57 {dimension_numbers = #tpu.dot_dimension_numbers<[1], [0], [0], [1], [0, 0, 1, 1], [], []>} : vector<8x16xbf16>, vector<16x64xbf16>, vector<8x64xf32> -> vector<8x64xf32>
    %106 = tpu.concatenate %96, %99, %102, %105 in 1 : vector<8x64xf32>, vector<8x64xf32>, vector<8x64xf32>, vector<8x64xf32> -> vector<8x256xf32>
    %107 = arith.truncf %106 : vector<8x256xf32> to vector<8x256xbf16>
    %c0_58 = arith.constant 0 : index
    %c0_59 = arith.constant 0 : index
    %108 = vector.load %arg8[%c0_58, %c0_59] : memref<256x64xbf16, #tpu.memory_space<vmem>>, vector<256x64xbf16>
    %cst_60 = arith.constant dense<0.000000e+00> : vector<8x64xf32>
    %109 = tpu.matmul %107, %108, %cst_60 {dimension_numbers = #tpu.dot_dimension_numbers<[1], [0], [0], [1], [0, 0, 1, 1], [], []>} : vector<8x256xbf16>, vector<256x64xbf16>, vector<8x64xf32> -> vector<8x64xf32>
    %c0_61 = arith.constant 0 : index
    %c0_62 = arith.constant 0 : index
    %110 = vector.load %arg9[%c0_61, %c0_62] : memref<1x64xf32, #tpu.memory_space<vmem>>, vector<1x64xf32>
    %111 = vector.broadcast %110 : vector<1x64xf32> to vector<8x64xf32>
    %112 = arith.addf %109, %111 : vector<8x64xf32>
    %113 = tpu.iota {dimensions = array<i32: 0>} : vector<64x16xi32>
    %c16_i32 = arith.constant 16 : i32
    %c0_i32_63 = arith.constant 0 : i32
    %114 = arith.cmpi eq, %c16_i32, %c0_i32_63 : i32
    %c1_i32_64 = arith.constant 1 : i32
    %115 = arith.select %114, %c1_i32_64, %c16_i32 : i32
    %116 = vector.broadcast %115 : i32 to vector<64x16xi32>
    %117 = arith.remsi %113, %116 : vector<64x16xi32>
    %c0_i32_65 = arith.constant 0 : i32
    %118 = vector.broadcast %c0_i32_65 : i32 to vector<64x16xi32>
    %119 = arith.cmpi ne, %117, %118 : vector<64x16xi32>
    %c0_i32_66 = arith.constant 0 : i32
    %120 = vector.broadcast %c0_i32_66 : i32 to vector<64x16xi32>
    %121 = arith.cmpi slt, %117, %120 : vector<64x16xi32>
    %c0_i32_67 = arith.constant 0 : i32
    %122 = arith.cmpi slt, %115, %c0_i32_67 : i32
    %123 = vector.broadcast %122 : i1 to vector<64x16xi1>
    %124 = vector.broadcast %123 : vector<64x16xi1> to vector<64x16xi1>
    %125 = arith.xori %121, %124 : vector<64x16xi1>
    %126 = arith.andi %125, %119 : vector<64x16xi1>
    %127 = vector.broadcast %115 : i32 to vector<64x16xi32>
    %128 = arith.addi %117, %127 : vector<64x16xi32>
    %129 = arith.select %126, %128, %117 : vector<64x16xi1>, vector<64x16xi32>
    %130 = tpu.iota {dimensions = array<i32: 1>} : vector<64x16xi32>
    %131 = arith.cmpi eq, %129, %130 : vector<64x16xi32>
    %132 = arith.extui %131 : vector<64x16xi1> to vector<64x16xi32>
    %133 = arith.sitofp %132 : vector<64x16xi32> to vector<64x16xf32>
    %134 = tpu.iota {dimensions = array<i32: 1>} : vector<16x64xi32>
    %c16_i32_68 = arith.constant 16 : i32
    %c0_i32_69 = arith.constant 0 : i32
    %135 = arith.cmpi eq, %c16_i32_68, %c0_i32_69 : i32
    %c1_i32_70 = arith.constant 1 : i32
    %136 = arith.select %135, %c1_i32_70, %c16_i32_68 : i32
    %137 = vector.broadcast %136 : i32 to vector<16x64xi32>
    %138 = arith.remsi %134, %137 : vector<16x64xi32>
    %c0_i32_71 = arith.constant 0 : i32
    %139 = vector.broadcast %c0_i32_71 : i32 to vector<16x64xi32>
    %140 = arith.cmpi ne, %138, %139 : vector<16x64xi32>
    %c0_i32_72 = arith.constant 0 : i32
    %141 = vector.broadcast %c0_i32_72 : i32 to vector<16x64xi32>
    %142 = arith.cmpi slt, %138, %141 : vector<16x64xi32>
    %c0_i32_73 = arith.constant 0 : i32
    %143 = arith.cmpi slt, %136, %c0_i32_73 : i32
    %144 = vector.broadcast %143 : i1 to vector<16x64xi1>
    %145 = vector.broadcast %144 : vector<16x64xi1> to vector<16x64xi1>
    %146 = arith.xori %142, %145 : vector<16x64xi1>
    %147 = arith.andi %146, %140 : vector<16x64xi1>
    %148 = vector.broadcast %136 : i32 to vector<16x64xi32>
    %149 = arith.addi %138, %148 : vector<16x64xi32>
    %150 = arith.select %147, %149, %138 : vector<16x64xi1>, vector<16x64xi32>
    %151 = tpu.iota {dimensions = array<i32: 0>} : vector<16x64xi32>
    %152 = arith.cmpi eq, %150, %151 : vector<16x64xi32>
    %153 = arith.extui %152 : vector<16x64xi1> to vector<16x64xi32>
    %154 = arith.sitofp %153 : vector<16x64xi32> to vector<16x64xf32>
    %cst_74 = arith.constant dense<0.000000e+00> : vector<64xf32>
    %155 = vector.multi_reduction <add>, %112, %cst_74 [0] : vector<8x64xf32> to vector<64xf32>
    %156 = vector.shape_cast %155 : vector<64xf32> to vector<1x64xf32>
    %cst_75 = arith.constant dense<0.000000e+00> : vector<1x16xf32>
    %157 = tpu.matmul %156, %133, %cst_75 {dimension_numbers = #tpu.dot_dimension_numbers<[1], [0], [0], [1], [0, 0, 1, 1], [], []>} : vector<1x64xf32>, vector<64x16xf32>, vector<1x16xf32> -> vector<1x16xf32>
    %cst_76 = arith.constant dense<0.000000e+00> : vector<1x64xf32>
    %158 = tpu.matmul %157, %154, %cst_76 {dimension_numbers = #tpu.dot_dimension_numbers<[1], [0], [0], [1], [0, 0, 1, 1], [], []>} : vector<1x16xf32>, vector<16x64xf32>, vector<1x64xf32> -> vector<1x64xf32>
    %cst_77 = arith.constant 3.125000e-02 : f32
    %159 = vector.broadcast %cst_77 : f32 to vector<1x64xf32>
    %160 = arith.mulf %158, %159 : vector<1x64xf32>
    %161 = vector.broadcast %160 : vector<1x64xf32> to vector<8x64xf32>
    %162 = arith.subf %112, %161 : vector<8x64xf32>
    %163 = arith.mulf %162, %162 : vector<8x64xf32>
    %cst_78 = arith.constant dense<0.000000e+00> : vector<64xf32>
    %164 = vector.multi_reduction <add>, %163, %cst_78 [0] : vector<8x64xf32> to vector<64xf32>
    %165 = vector.shape_cast %164 : vector<64xf32> to vector<1x64xf32>
    %cst_79 = arith.constant dense<0.000000e+00> : vector<1x16xf32>
    %166 = tpu.matmul %165, %133, %cst_79 {dimension_numbers = #tpu.dot_dimension_numbers<[1], [0], [0], [1], [0, 0, 1, 1], [], []>} : vector<1x64xf32>, vector<64x16xf32>, vector<1x16xf32> -> vector<1x16xf32>
    %cst_80 = arith.constant dense<0.000000e+00> : vector<1x64xf32>
    %167 = tpu.matmul %166, %154, %cst_80 {dimension_numbers = #tpu.dot_dimension_numbers<[1], [0], [0], [1], [0, 0, 1, 1], [], []>} : vector<1x16xf32>, vector<16x64xf32>, vector<1x64xf32> -> vector<1x64xf32>
    %cst_81 = arith.constant 3.125000e-02 : f32
    %168 = vector.broadcast %cst_81 : f32 to vector<1x64xf32>
    %169 = arith.mulf %167, %168 : vector<1x64xf32>
    %c0_82 = arith.constant 0 : index
    %c0_83 = arith.constant 0 : index
    %170 = vector.load %arg10[%c0_82, %c0_83] : memref<1x64xf32, #tpu.memory_space<vmem>>, vector<1x64xf32>
    %cst_84 = arith.constant 9.99999974E-6 : f32
    %171 = vector.broadcast %cst_84 : f32 to vector<1x64xf32>
    %172 = arith.addf %169, %171 : vector<1x64xf32>
    %173 = math.rsqrt %172 : vector<1x64xf32>
    %174 = arith.mulf %170, %173 : vector<1x64xf32>
    %175 = vector.broadcast %174 : vector<1x64xf32> to vector<8x64xf32>
    %176 = arith.mulf %162, %175 : vector<8x64xf32>
    %c0_85 = arith.constant 0 : index
    %c0_86 = arith.constant 0 : index
    %177 = vector.load %arg11[%c0_85, %c0_86] : memref<1x64xf32, #tpu.memory_space<vmem>>, vector<1x64xf32>
    %178 = vector.broadcast %177 : vector<1x64xf32> to vector<8x64xf32>
    %179 = arith.addf %176, %178 : vector<8x64xf32>
    %cst_87 = arith.constant 0.000000e+00 : f32
    %180 = vector.broadcast %cst_87 : f32 to vector<8x64xf32>
    %181 = arith.cmpf oge, %179, %180 : vector<8x64xf32>
    %cst_88 = arith.constant 2.000000e-01 : f32
    %182 = vector.broadcast %cst_88 : f32 to vector<8x64xf32>
    %183 = arith.mulf %182, %179 : vector<8x64xf32>
    %184 = arith.select %181, %179, %183 : vector<8x64xi1>, vector<8x64xf32>
    %185 = arith.truncf %184 : vector<8x64xf32> to vector<8x64xbf16>
    %c0_89 = arith.constant 0 : index
    %c0_90 = arith.constant 0 : index
    %c0_91 = arith.constant 0 : index
    %186 = vector.load %arg12[%c0_89, %c0_90, %c0_91] : memref<3x8x8xbf16, #tpu.memory_space<vmem>>, vector<1x8x8xbf16>
    %187 = vector.shape_cast %186 : vector<1x8x8xbf16> to vector<8x8xbf16>
    %cst_92 = arith.constant dense<0.000000e+00> : vector<8x64xf32>
    %188 = tpu.matmul %187, %185, %cst_92 {dimension_numbers = #tpu.dot_dimension_numbers<[1], [0], [0], [1], [0, 0, 1, 1], [], []>} : vector<8x8xbf16>, vector<8x64xbf16>, vector<8x64xf32> -> vector<8x64xf32>
    %c1_93 = arith.constant 1 : index
    %c0_94 = arith.constant 0 : index
    %c0_95 = arith.constant 0 : index
    %189 = vector.load %arg12[%c1_93, %c0_94, %c0_95] : memref<3x8x8xbf16, #tpu.memory_space<vmem>>, vector<1x8x8xbf16>
    %190 = vector.shape_cast %189 : vector<1x8x8xbf16> to vector<8x8xbf16>
    %cst_96 = arith.constant dense<0.000000e+00> : vector<8x64xf32>
    %191 = tpu.matmul %190, %185, %cst_96 {dimension_numbers = #tpu.dot_dimension_numbers<[1], [0], [0], [1], [0, 0, 1, 1], [], []>} : vector<8x8xbf16>, vector<8x64xbf16>, vector<8x64xf32> -> vector<8x64xf32>
    %c2_97 = arith.constant 2 : index
    %c0_98 = arith.constant 0 : index
    %c0_99 = arith.constant 0 : index
    %192 = vector.load %arg12[%c2_97, %c0_98, %c0_99] : memref<3x8x8xbf16, #tpu.memory_space<vmem>>, vector<1x8x8xbf16>
    %193 = vector.shape_cast %192 : vector<1x8x8xbf16> to vector<8x8xbf16>
    %cst_100 = arith.constant dense<0.000000e+00> : vector<8x64xf32>
    %194 = tpu.matmul %193, %185, %cst_100 {dimension_numbers = #tpu.dot_dimension_numbers<[1], [0], [0], [1], [0, 0, 1, 1], [], []>} : vector<8x8xbf16>, vector<8x64xbf16>, vector<8x64xf32> -> vector<8x64xf32>
    %195 = tpu.concatenate %188, %191, %194 in 1 : vector<8x64xf32>, vector<8x64xf32>, vector<8x64xf32> -> vector<8x192xf32>
    %196 = arith.truncf %195 : vector<8x192xf32> to vector<8x192xbf16>
    %c0_101 = arith.constant 0 : index
    %c0_102 = arith.constant 0 : index
    %197 = vector.load %arg13[%c0_101, %c0_102] : memref<192x64xbf16, #tpu.memory_space<vmem>>, vector<192x64xbf16>
    %cst_103 = arith.constant dense<0.000000e+00> : vector<8x64xf32>
    %198 = tpu.matmul %196, %197, %cst_103 {dimension_numbers = #tpu.dot_dimension_numbers<[1], [0], [0], [1], [0, 0, 1, 1], [], []>} : vector<8x192xbf16>, vector<192x64xbf16>, vector<8x64xf32> -> vector<8x64xf32>
    %c0_104 = arith.constant 0 : index
    %c0_105 = arith.constant 0 : index
    %199 = vector.load %arg14[%c0_104, %c0_105] : memref<1x64xf32, #tpu.memory_space<vmem>>, vector<1x64xf32>
    %200 = vector.broadcast %199 : vector<1x64xf32> to vector<8x64xf32>
    %201 = arith.addf %198, %200 : vector<8x64xf32>
    %202 = arith.truncf %201 : vector<8x64xf32> to vector<8x64xbf16>
    %c0_106 = arith.constant 0 : index
    %c0_107 = arith.constant 0 : index
    %c0_108 = arith.constant 0 : index
    %203 = vector.load %arg15[%c0_106, %c0_107, %c0_108] : memref<4x4x8xbf16, #tpu.memory_space<vmem>>, vector<1x4x8xbf16>
    %204 = vector.shape_cast %203 : vector<1x4x8xbf16> to vector<4x8xbf16>
    %cst_109 = arith.constant dense<0.000000e+00> : vector<4x64xf32>
    %205 = tpu.matmul %204, %202, %cst_109 {dimension_numbers = #tpu.dot_dimension_numbers<[1], [0], [0], [1], [0, 0, 1, 1], [], []>} : vector<4x8xbf16>, vector<8x64xbf16>, vector<4x64xf32> -> vector<4x64xf32>
    %c1_110 = arith.constant 1 : index
    %c0_111 = arith.constant 0 : index
    %c0_112 = arith.constant 0 : index
    %206 = vector.load %arg15[%c1_110, %c0_111, %c0_112] : memref<4x4x8xbf16, #tpu.memory_space<vmem>>, vector<1x4x8xbf16>
    %207 = vector.shape_cast %206 : vector<1x4x8xbf16> to vector<4x8xbf16>
    %cst_113 = arith.constant dense<0.000000e+00> : vector<4x64xf32>
    %208 = tpu.matmul %207, %202, %cst_113 {dimension_numbers = #tpu.dot_dimension_numbers<[1], [0], [0], [1], [0, 0, 1, 1], [], []>} : vector<4x8xbf16>, vector<8x64xbf16>, vector<4x64xf32> -> vector<4x64xf32>
    %c2_114 = arith.constant 2 : index
    %c0_115 = arith.constant 0 : index
    %c0_116 = arith.constant 0 : index
    %209 = vector.load %arg15[%c2_114, %c0_115, %c0_116] : memref<4x4x8xbf16, #tpu.memory_space<vmem>>, vector<1x4x8xbf16>
    %210 = vector.shape_cast %209 : vector<1x4x8xbf16> to vector<4x8xbf16>
    %cst_117 = arith.constant dense<0.000000e+00> : vector<4x64xf32>
    %211 = tpu.matmul %210, %202, %cst_117 {dimension_numbers = #tpu.dot_dimension_numbers<[1], [0], [0], [1], [0, 0, 1, 1], [], []>} : vector<4x8xbf16>, vector<8x64xbf16>, vector<4x64xf32> -> vector<4x64xf32>
    %c3_118 = arith.constant 3 : index
    %c0_119 = arith.constant 0 : index
    %c0_120 = arith.constant 0 : index
    %212 = vector.load %arg15[%c3_118, %c0_119, %c0_120] : memref<4x4x8xbf16, #tpu.memory_space<vmem>>, vector<1x4x8xbf16>
    %213 = vector.shape_cast %212 : vector<1x4x8xbf16> to vector<4x8xbf16>
    %cst_121 = arith.constant dense<0.000000e+00> : vector<4x64xf32>
    %214 = tpu.matmul %213, %202, %cst_121 {dimension_numbers = #tpu.dot_dimension_numbers<[1], [0], [0], [1], [0, 0, 1, 1], [], []>} : vector<4x8xbf16>, vector<8x64xbf16>, vector<4x64xf32> -> vector<4x64xf32>
    %215 = tpu.concatenate %205, %208, %211, %214 in 1 : vector<4x64xf32>, vector<4x64xf32>, vector<4x64xf32>, vector<4x64xf32> -> vector<4x256xf32>
    %216 = arith.truncf %215 : vector<4x256xf32> to vector<4x256xbf16>
    %c0_122 = arith.constant 0 : index
    %c0_123 = arith.constant 0 : index
    %217 = vector.load %arg16[%c0_122, %c0_123] : memref<256x32xbf16, #tpu.memory_space<vmem>>, vector<256x32xbf16>
    %cst_124 = arith.constant dense<0.000000e+00> : vector<4x32xf32>
    %218 = tpu.matmul %216, %217, %cst_124 {dimension_numbers = #tpu.dot_dimension_numbers<[1], [0], [0], [1], [0, 0, 1, 1], [], []>} : vector<4x256xbf16>, vector<256x32xbf16>, vector<4x32xf32> -> vector<4x32xf32>
    %c0_125 = arith.constant 0 : index
    %c0_126 = arith.constant 0 : index
    %219 = vector.load %arg17[%c0_125, %c0_126] : memref<1x32xf32, #tpu.memory_space<vmem>>, vector<1x32xf32>
    %220 = vector.broadcast %219 : vector<1x32xf32> to vector<4x32xf32>
    %221 = arith.addf %218, %220 : vector<4x32xf32>
    %222 = tpu.iota {dimensions = array<i32: 0>} : vector<32x16xi32>
    %c16_i32_127 = arith.constant 16 : i32
    %c0_i32_128 = arith.constant 0 : i32
    %223 = arith.cmpi eq, %c16_i32_127, %c0_i32_128 : i32
    %c1_i32_129 = arith.constant 1 : i32
    %224 = arith.select %223, %c1_i32_129, %c16_i32_127 : i32
    %225 = vector.broadcast %224 : i32 to vector<32x16xi32>
    %226 = arith.remsi %222, %225 : vector<32x16xi32>
    %c0_i32_130 = arith.constant 0 : i32
    %227 = vector.broadcast %c0_i32_130 : i32 to vector<32x16xi32>
    %228 = arith.cmpi ne, %226, %227 : vector<32x16xi32>
    %c0_i32_131 = arith.constant 0 : i32
    %229 = vector.broadcast %c0_i32_131 : i32 to vector<32x16xi32>
    %230 = arith.cmpi slt, %226, %229 : vector<32x16xi32>
    %c0_i32_132 = arith.constant 0 : i32
    %231 = arith.cmpi slt, %224, %c0_i32_132 : i32
    %232 = vector.broadcast %231 : i1 to vector<32x16xi1>
    %233 = vector.broadcast %232 : vector<32x16xi1> to vector<32x16xi1>
    %234 = arith.xori %230, %233 : vector<32x16xi1>
    %235 = arith.andi %234, %228 : vector<32x16xi1>
    %236 = vector.broadcast %224 : i32 to vector<32x16xi32>
    %237 = arith.addi %226, %236 : vector<32x16xi32>
    %238 = arith.select %235, %237, %226 : vector<32x16xi1>, vector<32x16xi32>
    %239 = tpu.iota {dimensions = array<i32: 1>} : vector<32x16xi32>
    %240 = arith.cmpi eq, %238, %239 : vector<32x16xi32>
    %241 = arith.extui %240 : vector<32x16xi1> to vector<32x16xi32>
    %242 = arith.sitofp %241 : vector<32x16xi32> to vector<32x16xf32>
    %243 = tpu.iota {dimensions = array<i32: 1>} : vector<16x32xi32>
    %c16_i32_133 = arith.constant 16 : i32
    %c0_i32_134 = arith.constant 0 : i32
    %244 = arith.cmpi eq, %c16_i32_133, %c0_i32_134 : i32
    %c1_i32_135 = arith.constant 1 : i32
    %245 = arith.select %244, %c1_i32_135, %c16_i32_133 : i32
    %246 = vector.broadcast %245 : i32 to vector<16x32xi32>
    %247 = arith.remsi %243, %246 : vector<16x32xi32>
    %c0_i32_136 = arith.constant 0 : i32
    %248 = vector.broadcast %c0_i32_136 : i32 to vector<16x32xi32>
    %249 = arith.cmpi ne, %247, %248 : vector<16x32xi32>
    %c0_i32_137 = arith.constant 0 : i32
    %250 = vector.broadcast %c0_i32_137 : i32 to vector<16x32xi32>
    %251 = arith.cmpi slt, %247, %250 : vector<16x32xi32>
    %c0_i32_138 = arith.constant 0 : i32
    %252 = arith.cmpi slt, %245, %c0_i32_138 : i32
    %253 = vector.broadcast %252 : i1 to vector<16x32xi1>
    %254 = vector.broadcast %253 : vector<16x32xi1> to vector<16x32xi1>
    %255 = arith.xori %251, %254 : vector<16x32xi1>
    %256 = arith.andi %255, %249 : vector<16x32xi1>
    %257 = vector.broadcast %245 : i32 to vector<16x32xi32>
    %258 = arith.addi %247, %257 : vector<16x32xi32>
    %259 = arith.select %256, %258, %247 : vector<16x32xi1>, vector<16x32xi32>
    %260 = tpu.iota {dimensions = array<i32: 0>} : vector<16x32xi32>
    %261 = arith.cmpi eq, %259, %260 : vector<16x32xi32>
    %262 = arith.extui %261 : vector<16x32xi1> to vector<16x32xi32>
    %263 = arith.sitofp %262 : vector<16x32xi32> to vector<16x32xf32>
    %cst_139 = arith.constant dense<0.000000e+00> : vector<32xf32>
    %264 = vector.multi_reduction <add>, %221, %cst_139 [0] : vector<4x32xf32> to vector<32xf32>
    %265 = vector.shape_cast %264 : vector<32xf32> to vector<1x32xf32>
    %cst_140 = arith.constant dense<0.000000e+00> : vector<1x16xf32>
    %266 = tpu.matmul %265, %242, %cst_140 {dimension_numbers = #tpu.dot_dimension_numbers<[1], [0], [0], [1], [0, 0, 1, 1], [], []>} : vector<1x32xf32>, vector<32x16xf32>, vector<1x16xf32> -> vector<1x16xf32>
    %cst_141 = arith.constant dense<0.000000e+00> : vector<1x32xf32>
    %267 = tpu.matmul %266, %263, %cst_141 {dimension_numbers = #tpu.dot_dimension_numbers<[1], [0], [0], [1], [0, 0, 1, 1], [], []>} : vector<1x16xf32>, vector<16x32xf32>, vector<1x32xf32> -> vector<1x32xf32>
    %cst_142 = arith.constant 1.250000e-01 : f32
    %268 = vector.broadcast %cst_142 : f32 to vector<1x32xf32>
    %269 = arith.mulf %267, %268 : vector<1x32xf32>
    %270 = vector.broadcast %269 : vector<1x32xf32> to vector<4x32xf32>
    %271 = arith.subf %221, %270 : vector<4x32xf32>
    %272 = arith.mulf %271, %271 : vector<4x32xf32>
    %cst_143 = arith.constant dense<0.000000e+00> : vector<32xf32>
    %273 = vector.multi_reduction <add>, %272, %cst_143 [0] : vector<4x32xf32> to vector<32xf32>
    %274 = vector.shape_cast %273 : vector<32xf32> to vector<1x32xf32>
    %cst_144 = arith.constant dense<0.000000e+00> : vector<1x16xf32>
    %275 = tpu.matmul %274, %242, %cst_144 {dimension_numbers = #tpu.dot_dimension_numbers<[1], [0], [0], [1], [0, 0, 1, 1], [], []>} : vector<1x32xf32>, vector<32x16xf32>, vector<1x16xf32> -> vector<1x16xf32>
    %cst_145 = arith.constant dense<0.000000e+00> : vector<1x32xf32>
    %276 = tpu.matmul %275, %263, %cst_145 {dimension_numbers = #tpu.dot_dimension_numbers<[1], [0], [0], [1], [0, 0, 1, 1], [], []>} : vector<1x16xf32>, vector<16x32xf32>, vector<1x32xf32> -> vector<1x32xf32>
    %cst_146 = arith.constant 1.250000e-01 : f32
    %277 = vector.broadcast %cst_146 : f32 to vector<1x32xf32>
    %278 = arith.mulf %276, %277 : vector<1x32xf32>
    %c0_147 = arith.constant 0 : index
    %c0_148 = arith.constant 0 : index
    %279 = vector.load %arg18[%c0_147, %c0_148] : memref<1x32xf32, #tpu.memory_space<vmem>>, vector<1x32xf32>
    %cst_149 = arith.constant 9.99999974E-6 : f32
    %280 = vector.broadcast %cst_149 : f32 to vector<1x32xf32>
    %281 = arith.addf %278, %280 : vector<1x32xf32>
    %282 = math.rsqrt %281 : vector<1x32xf32>
    %283 = arith.mulf %279, %282 : vector<1x32xf32>
    %284 = vector.broadcast %283 : vector<1x32xf32> to vector<4x32xf32>
    %285 = arith.mulf %271, %284 : vector<4x32xf32>
    %c0_150 = arith.constant 0 : index
    %c0_151 = arith.constant 0 : index
    %286 = vector.load %arg19[%c0_150, %c0_151] : memref<1x32xf32, #tpu.memory_space<vmem>>, vector<1x32xf32>
    %287 = vector.broadcast %286 : vector<1x32xf32> to vector<4x32xf32>
    %288 = arith.addf %285, %287 : vector<4x32xf32>
    %cst_152 = arith.constant 0.000000e+00 : f32
    %289 = vector.broadcast %cst_152 : f32 to vector<4x32xf32>
    %290 = arith.cmpf oge, %288, %289 : vector<4x32xf32>
    %cst_153 = arith.constant 2.000000e-01 : f32
    %291 = vector.broadcast %cst_153 : f32 to vector<4x32xf32>
    %292 = arith.mulf %291, %288 : vector<4x32xf32>
    %293 = arith.select %290, %288, %292 : vector<4x32xi1>, vector<4x32xf32>
    %c0_154 = arith.constant 0 : index
    %c0_155 = arith.constant 0 : index
    %294 = vector.load %arg20[%c0_154, %c0_155] : memref<4x32xf32, #tpu.memory_space<vmem>>, vector<4x32xf32>
    tpu.vector_store %arg20[%c0_154, %c0_155], %293 {strides = array<i32>} : memref<4x32xf32, #tpu.memory_space<vmem>>, vector<4x32xf32>,
    return
  }
  func.func @transform_0(%arg0: i32) -> (i32, i32) {
    %c0_i32 = arith.constant 0 : i32
    %c0_i32_0 = arith.constant 0 : i32
    %c0_i32_1 = arith.constant 0 : i32
    return %c0_i32, %c0_i32_0 : i32, i32
  }
  func.func @transform_1(%arg0: i32) -> (i32, i32, i32) {
    %c0_i32 = arith.constant 0 : i32
    %c0_i32_0 = arith.constant 0 : i32
    %c0_i32_1 = arith.constant 0 : i32
    %c0_i32_2 = arith.constant 0 : i32
    return %c0_i32, %c0_i32_0, %c0_i32_1 : i32, i32, i32
  }
  func.func @transform_2(%arg0: i32) -> (i32, i32) {
    %c0_i32 = arith.constant 0 : i32
    %c0_i32_0 = arith.constant 0 : i32
    %c0_i32_1 = arith.constant 0 : i32
    return %c0_i32, %c0_i32_0 : i32, i32
  }
  func.func @transform_3(%arg0: i32) -> (i32, i32) {
    %c0_i32 = arith.constant 0 : i32
    %c0_i32_0 = arith.constant 0 : i32
    %c0_i32_1 = arith.constant 0 : i32
    return %c0_i32, %c0_i32_0 : i32, i32
  }
  func.func @transform_4(%arg0: i32) -> (i32, i32) {
    %c0_i32 = arith.constant 0 : i32
    %c0_i32_0 = arith.constant 0 : i32
    %c0_i32_1 = arith.constant 0 : i32
    return %c0_i32, %c0_i32_0 : i32, i32
  }
  func.func @transform_5(%arg0: i32) -> (i32, i32) {
    %c0_i32 = arith.constant 0 : i32
    %c0_i32_0 = arith.constant 0 : i32
    %c0_i32_1 = arith.constant 0 : i32
    return %c0_i32, %c0_i32_0 : i32, i32
  }
  func.func @transform_6(%arg0: i32) -> (i32, i32, i32) {
    %c0_i32 = arith.constant 0 : i32
    %c0_i32_0 = arith.constant 0 : i32
    %c0_i32_1 = arith.constant 0 : i32
    %c0_i32_2 = arith.constant 0 : i32
    return %c0_i32, %c0_i32_0, %c0_i32_1 : i32, i32, i32
  }
  func.func @transform_7(%arg0: i32) -> (i32, i32) {
    %c0_i32 = arith.constant 0 : i32
    %c0_i32_0 = arith.constant 0 : i32
    %c0_i32_1 = arith.constant 0 : i32
    return %c0_i32, %c0_i32_0 : i32, i32
  }
  func.func @transform_8(%arg0: i32) -> (i32, i32) {
    %c0_i32 = arith.constant 0 : i32
    %c0_i32_0 = arith.constant 0 : i32
    %c0_i32_1 = arith.constant 0 : i32
    return %c0_i32, %c0_i32_0 : i32, i32
  }
  func.func @transform_9(%arg0: i32) -> (i32, i32) {
    %c0_i32 = arith.constant 0 : i32
    %c0_i32_0 = arith.constant 0 : i32
    %c0_i32_1 = arith.constant 0 : i32
    return %c0_i32, %c0_i32_0 : i32, i32
  }
  func.func @transform_10(%arg0: i32) -> (i32, i32) {
    %c0_i32 = arith.constant 0 : i32
    %c0_i32_0 = arith.constant 0 : i32
    %c0_i32_1 = arith.constant 0 : i32
    return %c0_i32, %c0_i32_0 : i32, i32
  }
  func.func @transform_11(%arg0: i32) -> (i32, i32, i32) {
    %c0_i32 = arith.constant 0 : i32
    %c0_i32_0 = arith.constant 0 : i32
    %c0_i32_1 = arith.constant 0 : i32
    %c0_i32_2 = arith.constant 0 : i32
    return %c0_i32, %c0_i32_0, %c0_i32_1 : i32, i32, i32
  }
  func.func @transform_12(%arg0: i32) -> (i32, i32) {
    %c0_i32 = arith.constant 0 : i32
    %c0_i32_0 = arith.constant 0 : i32
    %c0_i32_1 = arith.constant 0 : i32
    return %c0_i32, %c0_i32_0 : i32, i32
  }
  func.func @transform_13(%arg0: i32) -> (i32, i32) {
    %c0_i32 = arith.constant 0 : i32
    %c0_i32_0 = arith.constant 0 : i32
    %c0_i32_1 = arith.constant 0 : i32
    return %c0_i32, %c0_i32_0 : i32, i32
  }
  func.func @transform_14(%arg0: i32) -> (i32, i32, i32) {
    %c0_i32 = arith.constant 0 : i32
    %c0_i32_0 = arith.constant 0 : i32
    %c0_i32_1 = arith.constant 0 : i32
    %c0_i32_2 = arith.constant 0 : i32
    return %c0_i32, %c0_i32_0, %c0_i32_1 : i32, i32, i32
  }
  func.func @transform_15(%arg0: i32) -> (i32, i32) {
    %c0_i32 = arith.constant 0 : i32
    %c0_i32_0 = arith.constant 0 : i32
    %c0_i32_1 = arith.constant 0 : i32
    return %c0_i32, %c0_i32_0 : i32, i32
  }
  func.func @transform_16(%arg0: i32) -> (i32, i32) {
    %c0_i32 = arith.constant 0 : i32
    %c0_i32_0 = arith.constant 0 : i32
    %c0_i32_1 = arith.constant 0 : i32
    return %c0_i32, %c0_i32_0 : i32, i32
  }
  func.func @transform_17(%arg0: i32) -> (i32, i32) {
    %c0_i32 = arith.constant 0 : i32
    %c0_i32_0 = arith.constant 0 : i32
    %c0_i32_1 = arith.constant 0 : i32
    return %c0_i32, %c0_i32_0 : i32, i32
  }
  func.func @transform_18(%arg0: i32) -> (i32, i32) {
    %c0_i32 = arith.constant 0 : i32
    %c0_i32_0 = arith.constant 0 : i32
    %c0_i32_1 = arith.constant 0 : i32
    return %c0_i32, %c0_i32_0 : i32, i32
  }
  func.func @transform_19(%arg0: i32) -> (i32, i32) {
    %c0_i32 = arith.constant 0 : i32
    %c0_i32_0 = arith.constant 0 : i32
    %c0_i32_1 = arith.constant 0 : i32
    return %c0_i32, %c0_i32_0 : i32, i32
  }
}

</mosaic_0001>

<llo_original>
// kernel: tpu_custom_call.1
$region0: #{tpu_custom_call.1}
  #allocation0 [shape = 'u32[]', space=smem, size = 0x4, offset = 0x4, fixed_abs, tag = 'smem constant byte address 0x4 - core index']
  #allocation1 [shape = 'u32[144,128]{1,0:T(1,128)}', space=vmem, size = 0x12000, scoped, tag = 'internal scratch']
  %s0 = inlined_call_operand.vmem [shape: f32[32,32], index: 0, kind: input, shape index: {}]
  %s1 = inlined_call_operand.vmem [shape: bf16[4,16,32], index: 1, kind: input, shape index: {}]
  %s2 = inlined_call_operand.vmem [shape: bf16[128,64], index: 2, kind: input, shape index: {}]
  %s3 = inlined_call_operand.vmem [shape: f32[1,64], index: 3, kind: input, shape index: {}]
  %s4 = inlined_call_operand.vmem [shape: f32[1,64], index: 4, kind: input, shape index: {}]
  %s5 = inlined_call_operand.vmem [shape: f32[1,64], index: 5, kind: input, shape index: {}]
  %s6 = inlined_call_operand.vmem [shape: bf16[4,8,16], index: 6, kind: input, shape index: {}]
  %s7 = inlined_call_operand.vmem [shape: bf16[256,64], index: 7, kind: input, shape index: {}]
  %s8 = inlined_call_operand.vmem [shape: f32[1,64], index: 8, kind: input, shape index: {}]
  %s9 = inlined_call_operand.vmem [shape: f32[1,64], index: 9, kind: input, shape index: {}]
  %s10 = inlined_call_operand.vmem [shape: f32[1,64], index: 10, kind: input, shape index: {}]
  %s11 = inlined_call_operand.vmem [shape: bf16[3,8,8], index: 11, kind: input, shape index: {}]
  %s12 = inlined_call_operand.vmem [shape: bf16[192,64], index: 12, kind: input, shape index: {}]
  %s13 = inlined_call_operand.vmem [shape: f32[1,64], index: 13, kind: input, shape index: {}]
  %s14 = inlined_call_operand.vmem [shape: bf16[4,4,8], index: 14, kind: input, shape index: {}]
  %s15 = inlined_call_operand.vmem [shape: bf16[256,32], index: 15, kind: input, shape index: {}]
  %s16 = inlined_call_operand.vmem [shape: f32[1,32], index: 16, kind: input, shape index: {}]
  %s17 = inlined_call_operand.vmem [shape: f32[1,32], index: 17, kind: input, shape index: {}]
  %s18 = inlined_call_operand.vmem [shape: f32[1,32], index: 18, kind: input, shape index: {}]
  %s19 = inlined_call_operand.hbm [shape: f32[4,32], index: 19, kind: output, shape index: {}]
  %s20 = sld [smem:[#allocation0]]
  $region86: #{tpu_custom_call.1} parent=0
    _
  %s22 = ssub.s32 1, %s20
  %s23 = scalar_select 0, %s22, %s20
  $region1: #{tpu_custom_call.1} parent=0
    #allocation2 [shape = 'u8[2048]{0}', space=vmem, size = 0x800, scoped, tag = 'output window, operand 0, single buffered']
    #allocation3 [shape = 's32[1]{0}', space=sflag, size = 0x4, scoped, tag = 'scoped memory for tpu_custom_call.1']
    %24 = vsyncpa [#allocation3], 0
    // Predicated region
    $region2: #{tpu_custom_call.1} parent=1 // pred_check
      _
    $region3: #{tpu_custom_call.1} parent=1 // pred_check_branch
      %26 = sbr.rel (0) target = $region5
    $region4: #{tpu_custom_call.1} parent=1 // pred_region
      _
    $region5: #{tpu_custom_call.1} parent=1 // pred_fallthru
      _
    // Predicated region
    $region6: #{tpu_custom_call.1} parent=1 // pred_check
      _
    $region7: #{tpu_custom_call.1} parent=1 // pred_check_branch
      %28 = sbr.rel (0) target = $region9
    $region8: #{tpu_custom_call.1} parent=1 // pred_region
      _
    $region9: #{tpu_custom_call.1} parent=1 // pred_fallthru
      _
    // Predicated region
    $region10: #{tpu_custom_call.1} parent=1 // pred_check
      _
    $region11: #{tpu_custom_call.1} parent=1 // pred_check_branch
      %30 = sbr.rel (0) target = $region13
    $region12: #{tpu_custom_call.1} parent=1 // pred_region
      _
    $region13: #{tpu_custom_call.1} parent=1 // pred_fallthru
      _
    // Predicated region
    $region14: #{tpu_custom_call.1} parent=1 // pred_check
      _
    $region15: #{tpu_custom_call.1} parent=1 // pred_check_branch
      %32 = sbr.rel (0) target = $region17
    $region16: #{tpu_custom_call.1} parent=1 // pred_region
      _
    $region17: #{tpu_custom_call.1} parent=1 // pred_fallthru
      _
    // Predicated region
    $region18: #{tpu_custom_call.1} parent=1 // pred_check
      _
    $region19: #{tpu_custom_call.1} parent=1 // pred_check_branch
      %34 = sbr.rel (0) target = $region21
    $region20: #{tpu_custom_call.1} parent=1 // pred_region
      _
    $region21: #{tpu_custom_call.1} parent=1 // pred_fallthru
      _
    // Predicated region
    $region22: #{tpu_custom_call.1} parent=1 // pred_check
      _
    $region23: #{tpu_custom_call.1} parent=1 // pred_check_branch
      %36 = sbr.rel (0) target = $region25
    $region24: #{tpu_custom_call.1} parent=1 // pred_region
      _
    $region25: #{tpu_custom_call.1} parent=1 // pred_fallthru
      _
    // Predicated region
    $region26: #{tpu_custom_call.1} parent=1 // pred_check
      _
    $region27: #{tpu_custom_call.1} parent=1 // pred_check_branch
      %38 = sbr.rel (0) target = $region29
    $region28: #{tpu_custom_call.1} parent=1 // pred_region
      _
    $region29: #{tpu_custom_call.1} parent=1 // pred_fallthru
      _
    // Predicated region
    $region30: #{tpu_custom_call.1} parent=1 // pred_check
      _
    $region31: #{tpu_custom_call.1} parent=1 // pred_check_branch
      %40 = sbr.rel (0) target = $region33
    $region32: #{tpu_custom_call.1} parent=1 // pred_region
      _
    $region33: #{tpu_custom_call.1} parent=1 // pred_fallthru
      _
    // Predicated region
    $region34: #{tpu_custom_call.1} parent=1 // pred_check
      _
    $region35: #{tpu_custom_call.1} parent=1 // pred_check_branch
      %42 = sbr.rel (0) target = $region37
    $region36: #{tpu_custom_call.1} parent=1 // pred_region
      _
    $region37: #{tpu_custom_call.1} parent=1 // pred_fallthru
      _
    // Predicated region
    $region38: #{tpu_custom_call.1} parent=1 // pred_check
      _
    $region39: #{tpu_custom_call.1} parent=1 // pred_check_branch
      %44 = sbr.rel (0) target = $region41
    $region40: #{tpu_custom_call.1} parent=1 // pred_region
      _
    $region41: #{tpu_custom_call.1} parent=1 // pred_fallthru
      _
    // Predicated region
    $region42: #{tpu_custom_call.1} parent=1 // pred_check
      _
    $region43: #{tpu_custom_call.1} parent=1 // pred_check_branch
      %46 = sbr.rel (0) target = $region45
    $region44: #{tpu_custom_call.1} parent=1 // pred_region
      _
    $region45: #{tpu_custom_call.1} parent=1 // pred_fallthru
      _
    // Predicated region
    $region46: #{tpu_custom_call.1} parent=1 // pred_check
      _
    $region47: #{tpu_custom_call.1} parent=1 // pred_check_branch
      %48 = sbr.rel (0) target = $region49
    $region48: #{tpu_custom_call.1} parent=1 // pred_region
      _
    $region49: #{tpu_custom_call.1} parent=1 // pred_fallthru
      _
    // Predicated region
    $region50: #{tpu_custom_call.1} parent=1 // pred_check
      _
    $region51: #{tpu_custom_call.1} parent=1 // pred_check_branch
      %50 = sbr.rel (0) target = $region53
    $region52: #{tpu_custom_call.1} parent=1 // pred_region
      _
    $region53: #{tpu_custom_call.1} parent=1 // pred_fallthru
      _
    // Predicated region
    $region54: #{tpu_custom_call.1} parent=1 // pred_check
      _
    $region55: #{tpu_custom_call.1} parent=1 // pred_check_branch
      %52 = sbr.rel (0) target = $region57
    $region56: #{tpu_custom_call.1} parent=1 // pred_region
      _
    $region57: #{tpu_custom_call.1} parent=1 // pred_fallthru
      _
    // Predicated region
    $region58: #{tpu_custom_call.1} parent=1 // pred_check
      _
    $region59: #{tpu_custom_call.1} parent=1 // pred_check_branch
      %54 = sbr.rel (0) target = $region61
    $region60: #{tpu_custom_call.1} parent=1 // pred_region
      _
    $region61: #{tpu_custom_call.1} parent=1 // pred_fallthru
      _
    // Predicated region
    $region62: #{tpu_custom_call.1} parent=1 // pred_check
      _
    $region63: #{tpu_custom_call.1} parent=1 // pred_check_branch
      %56 = sbr.rel (0) target = $region65
    $region64: #{tpu_custom_call.1} parent=1 // pred_region
      _
    $region65: #{tpu_custom_call.1} parent=1 // pred_fallthru
      _
    // Predicated region
    $region66: #{tpu_custom_call.1} parent=1 // pred_check
      _
    $region67: #{tpu_custom_call.1} parent=1 // pred_check_branch
      %58 = sbr.rel (0) target = $region69
    $region68: #{tpu_custom_call.1} parent=1 // pred_region
      _
    $region69: #{tpu_custom_call.1} parent=1 // pred_fallthru
      _
    // Predicated region
    $region70: #{tpu_custom_call.1} parent=1 // pred_check
      _
    $region71: #{tpu_custom_call.1} parent=1 // pred_check_branch
      %60 = sbr.rel (0) target = $region73
    $region72: #{tpu_custom_call.1} parent=1 // pred_region
      _
    $region73: #{tpu_custom_call.1} parent=1 // pred_fallthru
      _
    // Predicated region
    $region74: #{tpu_custom_call.1} parent=1 // pred_check
      _
    $region75: #{tpu_custom_call.1} parent=1 // pred_check_branch
      %62 = sbr.rel (0) target = $region77
    $region76: #{tpu_custom_call.1} parent=1 // pred_region
      _
    $region77: #{tpu_custom_call.1} parent=1 // pred_fallthru
      _
    %v64 = vld [vmem:[%s0] sm:$0xff]
    %v65 = vld [vmem:[%s0 + $0x8] sm:$0xff]
    %v66 = vld [vmem:[%s0 + $0x10] sm:$0xff]
    %v67 = vld [vmem:[%s0 + $0x18] sm:$0xff]
    %v68 = vpack.c.bf16 %v65, %v64
    %v69 = vpack.c.bf16 %v67, %v66
    %v70 = vld [vmem:[%s1] sm:$0xf]
    %v71 = vld [vmem:[%s1 + $0x4] sm:$0xf]
    %v74 = vunpack.c.l.b16 %v70
    %v75 = vunpack.c.l.b16 %v71
    %v76 = vpack.c.b16 %v75, %v74
    %vm77 = vcmask 261120
    %v79 = vsel %vm77, %v76, 0
    %81 = vmatprep.subr.bf16.mxu0 0
    %82 = vmatpush1.bf16.msra.mxu0 %v68
    %83 = vmatprep.subr.bf16.mxu0 0
    %84 = vmatpush1.bf16.msra.mxu0 %v69
    %85 = vmatprep.subr.bf16.mxu0 0
    %86 = vmatpush1.bf16.msra.mxu0 0
    %87 = vmatprep.subr.bf16.mxu0 0
    %88 = vmatpush1.bf16.msra.mxu0 0
    %89 = vmatprep.subr.bf16.mxu0 0
    %90 = vmatpush1.bf16.msra.mxu0 0
    %91 = vmatprep.subr.bf16.mxu0 0
    %92 = vmatpush1.bf16.msra.mxu0 0
    %93 = vmatprep.subr.bf16.mxu0 0
    %94 = vmatpush1.bf16.msra.mxu0 0
    %95 = vmatprep.subr.bf16.mxu0 0
    %96 = vmatpush1.bf16.msra.mxu0 0
    %97 = vmatprep.subr.bf16.mxu0 0
    %98 = vmatpush1.bf16.msra.mxu0 0
    %99 = vmatprep.subr.bf16.mxu0 0
    %100 = vmatpush1.bf16.msra.mxu0 0
    %101 = vmatprep.subr.bf16.mxu0 0
    %102 = vmatpush1.bf16.msra.mxu0 0
    %103 = vmatprep.subr.bf16.mxu0 0
    %104 = vmatpush1.bf16.msra.mxu0 0
    %105 = vmatprep.subr.bf16.mxu0 0
    %106 = vmatpush1.bf16.msra.mxu0 0
    %107 = vmatprep.subr.bf16.mxu0 0
    %108 = vmatpush1.bf16.msra.mxu0 0
    %109 = vmatprep.subr.bf16.mxu0 0
    %110 = vmatpush1.bf16.msra.mxu0 0
    %111 = vmatprep.subr.bf16.mxu0 0
    %112 = vmatpush1.bf16.msra.mxu0 0
    %113 = vmatprep.mubr.bf16.mxu0 0
    %114 = vmatmul.mubr.bf16.gmra.mrb[0].mxu0 %v79
    %v115 = vpop.f32.mrb[0].mxu0
    %v116 = vadd.f32 0.0, %v115
    %v117 = vpop.f32.mrb[0].mxu0
    %v118 = vpop.f32.mrb[0].mxu0
    %v119 = vadd.f32 0.0, %v118
    %v120 = vpop.f32.mrb[0].mxu0
    %121 = vdwg.mxu0
    %s122 = scalar_lea.vmem %s1, 8
    %v123 = vld [vmem:[%s122] sm:$0xf]
    %v124 = vld [vmem:[%s122 + $0x4] sm:$0xf]
    %v127 = vunpack.c.l.b16 %v123
    %v128 = vunpack.c.l.b16 %v124
    %v129 = vpack.c.b16 %v128, %v127
    %v131 = vsel %vm77, %v129, 0
    %133 = vmatprep.subr.bf16.mxu0 0
    %134 = vmatpush1.bf16.msra.mxu0 %v68
    %135 = vmatprep.subr.bf16.mxu0 0
    %136 = vmatpush1.bf16.msra.mxu0 %v69
    %137 = vmatprep.subr.bf16.mxu0 0
    %138 = vmatpush1.bf16.msra.mxu0 0
    %139 = vmatprep.subr.bf16.mxu0 0
    %140 = vmatpush1.bf16.msra.mxu0 0
    %141 = vmatprep.subr.bf16.mxu0 0
    %142 = vmatpush1.bf16.msra.mxu0 0
    %143 = vmatprep.subr.bf16.mxu0 0
    %144 = vmatpush1.bf16.msra.mxu0 0
    %145 = vmatprep.subr.bf16.mxu0 0
    %146 = vmatpush1.bf16.msra.mxu0 0
    %147 = vmatprep.subr.bf16.mxu0 0
    %148 = vmatpush1.bf16.msra.mxu0 0
    %149 = vmatprep.subr.bf16.mxu0 0
    %150 = vmatpush1.bf16.msra.mxu0 0
    %151 = vmatprep.subr.bf16.mxu0 0
    %152 = vmatpush1.bf16.msra.mxu0 0
    %153 = vmatprep.subr.bf16.mxu0 0
    %154 = vmatpush1.bf16.msra.mxu0 0
    %155 = vmatprep.subr.bf16.mxu0 0
    %156 = vmatpush1.bf16.msra.mxu0 0
    %157 = vmatprep.subr.bf16.mxu0 0
    %158 = vmatpush1.bf16.msra.mxu0 0
    %159 = vmatprep.subr.bf16.mxu0 0
    %160 = vmatpush1.bf16.msra.mxu0 0
    %161 = vmatprep.subr.bf16.mxu0 0
    %162 = vmatpush1.bf16.msra.mxu0 0
    %163 = vmatprep.subr.bf16.mxu0 0
    %164 = vmatpush1.bf16.msra.mxu0 0
    %165 = vmatprep.mubr.bf16.mxu0 0
    %166 = vmatmul.mubr.bf16.gmra.mrb[0].mxu0 %v131
    %v167 = vpop.f32.mrb[0].mxu0
    %v168 = vadd.f32 0.0, %v167
    %v169 = vpop.f32.mrb[0].mxu0
    %v170 = vpop.f32.mrb[0].mxu0
    %v171 = vadd.f32 0.0, %v170
    %v172 = vpop.f32.mrb[0].mxu0
    %173 = vdwg.mxu0
    %s174 = scalar_lea.vmem %s1, 16
    %v175 = vld [vmem:[%s174] sm:$0xf]
    %v176 = vld [vmem:[%s174 + $0x4] sm:$0xf]
    %v179 = vunpack.c.l.b16 %v175
    %v180 = vunpack.c.l.b16 %v176
    %v181 = vpack.c.b16 %v180, %v179
    %v183 = vsel %vm77, %v181, 0
    %185 = vmatprep.subr.bf16.mxu0 0
    %186 = vmatpush1.bf16.msra.mxu0 %v68
    %187 = vmatprep.subr.bf16.mxu0 0
    %188 = vmatpush1.bf16.msra.mxu0 %v69
    %189 = vmatprep.subr.bf16.mxu0 0
    %190 = vmatpush1.bf16.msra.mxu0 0
    %191 = vmatprep.subr.bf16.mxu0 0
    %192 = vmatpush1.bf16.msra.mxu0 0
    %193 = vmatprep.subr.bf16.mxu0 0
    %194 = vmatpush1.bf16.msra.mxu0 0
    %195 = vmatprep.subr.bf16.mxu0 0
    %196 = vmatpush1.bf16.msra.mxu0 0
    %197 = vmatprep.subr.bf16.mxu0 0
    %198 = vmatpush1.bf16.msra.mxu0 0
    %199 = vmatprep.subr.bf16.mxu0 0
    %200 = vmatpush1.bf16.msra.mxu0 0
    %201 = vmatprep.subr.bf16.mxu0 0
    %202 = vmatpush1.bf16.msra.mxu0 0
    %203 = vmatprep.subr.bf16.mxu0 0
    %204 = vmatpush1.bf16.msra.mxu0 0
    %205 = vmatprep.subr.bf16.mxu0 0
    %206 = vmatpush1.bf16.msra.mxu0 0
    %207 = vmatprep.subr.bf16.mxu0 0
    %208 = vmatpush1.bf16.msra.mxu0 0
    %209 = vmatprep.subr.bf16.mxu0 0
    %210 = vmatpush1.bf16.msra.mxu0 0
    %211 = vmatprep.subr.bf16.mxu0 0
    %212 = vmatpush1.bf16.msra.mxu0 0
    %213 = vmatprep.subr.bf16.mxu0 0
    %214 = vmatpush1.bf16.msra.mxu0 0
    %215 = vmatprep.subr.bf16.mxu0 0
    %216 = vmatpush1.bf16.msra.mxu0 0
    %217 = vmatprep.mubr.bf16.mxu0 0
    %218 = vmatmul.mubr.bf16.gmra.mrb[0].mxu0 %v183
    %v219 = vpop.f32.mrb[0].mxu0
    %v220 = vadd.f32 0.0, %v219
    %v221 = vpop.f32.mrb[0].mxu0
    %v222 = vpop.f32.mrb[0].mxu0
    %v223 = vadd.f32 0.0, %v222
    %v224 = vpop.f32.mrb[0].mxu0
    %225 = vdwg.mxu0
    %s226 = scalar_lea.vmem %s1, 24
    %v227 = vld [vmem:[%s226] sm:$0xf]
    %v228 = vld [vmem:[%s226 + $0x4] sm:$0xf]
    %v231 = vunpack.c.l.b16 %v227
    %v232 = vunpack.c.l.b16 %v228
    %v233 = vpack.c.b16 %v232, %v231
    %v235 = vsel %vm77, %v233, 0
    %237 = vmatprep.subr.bf16.mxu0 0
    %238 = vmatpush1.bf16.msra.mxu0 %v68
    %239 = vmatprep.subr.bf16.mxu0 0
    %240 = vmatpush1.bf16.msra.mxu0 %v69
    %241 = vmatprep.subr.bf16.mxu0 0
    %242 = vmatpush1.bf16.msra.mxu0 0
    %243 = vmatprep.subr.bf16.mxu0 0
    %244 = vmatpush1.bf16.msra.mxu0 0
    %245 = vmatprep.subr.bf16.mxu0 0
    %246 = vmatpush1.bf16.msra.mxu0 0
    %247 = vmatprep.subr.bf16.mxu0 0
    %248 = vmatpush1.bf16.msra.mxu0 0
    %249 = vmatprep.subr.bf16.mxu0 0
    %250 = vmatpush1.bf16.msra.mxu0 0
    %251 = vmatprep.subr.bf16.mxu0 0
    %252 = vmatpush1.bf16.msra.mxu0 0
    %253 = vmatprep.subr.bf16.mxu0 0
    %254 = vmatpush1.bf16.msra.mxu0 0
    %255 = vmatprep.subr.bf16.mxu0 0
    %256 = vmatpush1.bf16.msra.mxu0 0
    %257 = vmatprep.subr.bf16.mxu0 0
    %258 = vmatpush1.bf16.msra.mxu0 0
    %259 = vmatprep.subr.bf16.mxu0 0
    %260 = vmatpush1.bf16.msra.mxu0 0
    %261 = vmatprep.subr.bf16.mxu0 0
    %262 = vmatpush1.bf16.msra.mxu0 0
    %263 = vmatprep.subr.bf16.mxu0 0
    %264 = vmatpush1.bf16.msra.mxu0 0
    %265 = vmatprep.subr.bf16.mxu0 0
    %266 = vmatpush1.bf16.msra.mxu0 0
    %267 = vmatprep.subr.bf16.mxu0 0
    %268 = vmatpush1.bf16.msra.mxu0 0
    %269 = vmatprep.mubr.bf16.mxu0 0
    %270 = vmatmul.mubr.bf16.gmra.mrb[0].mxu0 %v235
    %v271 = vpop.f32.mrb[0].mxu0
    %v272 = vadd.f32 0.0, %v271
    %v273 = vpop.f32.mrb[0].mxu0
    %v274 = vpop.f32.mrb[0].mxu0
    %v275 = vadd.f32 0.0, %v274
    %v276 = vpop.f32.mrb[0].mxu0
    %277 = vdwg.mxu0
    %280 = vrot.lane.b32.xlu0 %v168, 32
    %v281 = vpop.permute.xlu0 %280
    %282 = vrot.lane.b32.xlu0 %v171, 32
    %v283 = vpop.permute.xlu0 %282
    %288 = vrot.lane.b32.xlu0 %v220, 64
    %v289 = vpop.permute.xlu0 %288
    %290 = vrot.lane.b32.xlu0 %v223, 64
    %v291 = vpop.permute.xlu0 %290
    %296 = vrot.lane.b32.xlu0 %v272, 96
    %v297 = vpop.permute.xlu0 %296
    %298 = vrot.lane.b32.xlu0 %v275, 96
    %v299 = vpop.permute.xlu0 %298
    %v302 = vsel %vm77, %v116, %v281
    %v303 = vsel %vm77, %v119, %v283
    %vm304 = vcmask 523264
    %v305 = vsel %vm304, %v302, %v289
    %v306 = vsel %vm304, %v303, %v291
    %vm307 = vcmask 785408
    %v308 = vsel %vm307, %v305, %v297
    %v309 = vsel %vm307, %v306, %v299
    %v310 = vpack.c.bf16 %v309, %v308
    %v311 = vld [vmem:[%s2] sm:$0xf]
    %v312 = vld [vmem:[%s2 + $0x4] sm:$0xf]
    %v313 = vld [vmem:[%s2 + $0x8] sm:$0xf]
    %v314 = vld [vmem:[%s2 + $0xc] sm:$0xf]
    %v315 = vld [vmem:[%s2 + $0x10] sm:$0xf]
    %v316 = vld [vmem:[%s2 + $0x14] sm:$0xf]
    %v317 = vld [vmem:[%s2 + $0x18] sm:$0xf]
    %v318 = vld [vmem:[%s2 + $0x1c] sm:$0xf]
    %v319 = vld [vmem:[%s2 + $0x20] sm:$0xf]
    %v320 = vld [vmem:[%s2 + $0x24] sm:$0xf]
    %v321 = vld [vmem:[%s2 + $0x28] sm:$0xf]
    %v322 = vld [vmem:[%s2 + $0x2c] sm:$0xf]
    %v323 = vld [vmem:[%s2 + $0x30] sm:$0xf]
    %v324 = vld [vmem:[%s2 + $0x34] sm:$0xf]
    %v325 = vld [vmem:[%s2 + $0x38] sm:$0xf]
    %v326 = vld [vmem:[%s2 + $0x3c] sm:$0xf]
    %v327 = vld [vmem:[%s3] sm:$0x1]
    %v329 = vlaneseq
    %v330 = vshrl.u32 %v329, 7
    %v331 = vsub.s32 0, %v330
    %v332 = vrot.slane %v327, %v331
    %v350 = vunpack.c.l.b16 %v311
    %v351 = vunpack.c.l.b16 %v312
    %v352 = vunpack.c.l.b16 %v313
    %v353 = vunpack.c.l.b16 %v314
    %v354 = vunpack.c.l.b16 %v315
    %v355 = vunpack.c.l.b16 %v316
    %v356 = vunpack.c.l.b16 %v317
    %v357 = vunpack.c.l.b16 %v318
    %v358 = vunpack.c.l.b16 %v319
    %v359 = vunpack.c.l.b16 %v320
    %v360 = vunpack.c.l.b16 %v321
    %v361 = vunpack.c.l.b16 %v322
    %v362 = vunpack.c.l.b16 %v323
    %v363 = vunpack.c.l.b16 %v324
    %v364 = vunpack.c.l.b16 %v325
    %v365 = vunpack.c.l.b16 %v326
    %v366 = vpack.c.b16 %v351, %v350
    %v367 = vpack.c.b16 %v353, %v352
    %v368 = vpack.c.b16 %v355, %v354
    %v369 = vpack.c.b16 %v357, %v356
    %v370 = vpack.c.b16 %v359, %v358
    %v371 = vpack.c.b16 %v361, %v360
    %v372 = vpack.c.b16 %v363, %v362
    %v373 = vpack.c.b16 %v365, %v364
    %382 = vmatprep.subr.bf16.mxu0 0
    %383 = vmatpush1.bf16.msra.mxu0 %v366
    %384 = vmatprep.subr.bf16.mxu0 0
    %385 = vmatpush1.bf16.msra.mxu0 %v367
    %386 = vmatprep.subr.bf16.mxu0 0
    %387 = vmatpush1.bf16.msra.mxu0 %v368
    %388 = vmatprep.subr.bf16.mxu0 0
    %389 = vmatpush1.bf16.msra.mxu0 %v369
    %390 = vmatprep.subr.bf16.mxu0 0
    %391 = vmatpush1.bf16.msra.mxu0 %v370
    %392 = vmatprep.subr.bf16.mxu0 0
    %393 = vmatpush1.bf16.msra.mxu0 %v371
    %394 = vmatprep.subr.bf16.mxu0 0
    %395 = vmatpush1.bf16.msra.mxu0 %v372
    %396 = vmatprep.subr.bf16.mxu0 0
    %397 = vmatpush1.bf16.msra.mxu0 %v373
    %398 = vmatprep.subr.bf16.mxu0 0
    %399 = vmatpush1.bf16.msra.mxu0 0
    %400 = vmatprep.subr.bf16.mxu0 0
    %401 = vmatpush1.bf16.msra.mxu0 0
    %402 = vmatprep.subr.bf16.mxu0 0
    %403 = vmatpush1.bf16.msra.mxu0 0
    %404 = vmatprep.subr.bf16.mxu0 0
    %405 = vmatpush1.bf16.msra.mxu0 0
    %406 = vmatprep.subr.bf16.mxu0 0
    %407 = vmatpush1.bf16.msra.mxu0 0
    %408 = vmatprep.subr.bf16.mxu0 0
    %409 = vmatpush1.bf16.msra.mxu0 0
    %410 = vmatprep.subr.bf16.mxu0 0
    %411 = vmatpush1.bf16.msra.mxu0 0
    %412 = vmatprep.subr.bf16.mxu0 0
    %413 = vmatpush1.bf16.msra.mxu0 0
    %414 = vmatprep.mubr.bf16.mxu0 0
    %415 = vmatmul.mubr.bf16.gmra.mrb[0].mxu0 %v310
    %v416 = vpop.f32.mrb[0].mxu0
    %v417 = vadd.f32 %v332, %v416
    %v418 = vpop.f32.mrb[0].mxu0
    %v419 = vpop.f32.mrb[0].mxu0
    %v420 = vadd.f32 %v332, %v419
    %v421 = vpop.f32.mrb[0].mxu0
    %422 = vdwg.mxu0
    %v423 = vlaneseq
    %v424 = vshrl.u32 %v423, 7
    %v425 = vadd.s32 %v424, 8
    %v426 = vadd.s32 %v424, 16
    %v427 = vadd.s32 %v424, 24
    %v428 = vadd.s32 %v424, 32
    %v429 = vadd.s32 %v424, 40
    %v430 = vadd.s32 %v424, 48
    %v431 = vadd.s32 %v424, 56
    %vm432 = vcmp.lt.s32.totalorder %v424, 0
    %v433 = vsub.s32 0, %v424
    %v434 = vsel %vm432, %v433, %v424
    %v435 = vshrl.u32 %v434, 3
    %v436 = vand.u32 %v434, 7
    %v437 = vsub.s32 0, %v436
    %v438 = vsel %vm432, %v437, %v436
    %vm439 = vcmp.lt.s32.totalorder %v425, 0
    %v440 = vsub.s32 0, %v425
    %v441 = vsel %vm439, %v440, %v425
    %v442 = vshrl.u32 %v441, 3
    %v443 = vand.u32 %v441, 7
    %v444 = vsub.s32 0, %v443
    %v445 = vsel %vm439, %v444, %v443
    %vm446 = vcmp.lt.s32.totalorder %v426, 0
    %v447 = vsub.s32 0, %v426
    %v448 = vsel %vm446, %v447, %v426
    %v449 = vshrl.u32 %v448, 3
    %v450 = vand.u32 %v448, 7
    %v451 = vsub.s32 0, %v450
    %v452 = vsel %vm446, %v451, %v450
    %vm453 = vcmp.lt.s32.totalorder %v427, 0
    %v454 = vsub.s32 0, %v427
    %v455 = vsel %vm453, %v454, %v427
    %v456 = vshrl.u32 %v455, 3
    %v457 = vand.u32 %v455, 7
    %v458 = vsub.s32 0, %v457
    %v459 = vsel %vm453, %v458, %v457
    %vm460 = vcmp.lt.s32.totalorder %v428, 0
    %v461 = vsub.s32 0, %v428
    %v462 = vsel %vm460, %v461, %v428
    %v463 = vshrl.u32 %v462, 3
    %v464 = vand.u32 %v462, 7
    %v465 = vsub.s32 0, %v464
    %v466 = vsel %vm460, %v465, %v464
    %vm467 = vcmp.lt.s32.totalorder %v429, 0
    %v468 = vsub.s32 0, %v429
    %v469 = vsel %vm467, %v468, %v429
    %v470 = vshrl.u32 %v469, 3
    %v471 = vand.u32 %v469, 7
    %v472 = vsub.s32 0, %v471
    %v473 = vsel %vm467, %v472, %v471
    %vm474 = vcmp.lt.s32.totalorder %v430, 0
    %v475 = vsub.s32 0, %v430
    %v476 = vsel %vm474, %v475, %v430
    %v477 = vshrl.u32 %v476, 3
    %v478 = vand.u32 %v476, 7
    %v479 = vsub.s32 0, %v478
    %v480 = vsel %vm474, %v479, %v478
    %vm481 = vcmp.lt.s32.totalorder %v431, 0
    %v482 = vsub.s32 0, %v431
    %v483 = vsel %vm481, %v482, %v431
    %v484 = vshrl.u32 %v483, 3
    %v485 = vand.u32 %v483, 7
    %v486 = vsub.s32 0, %v485
    %v487 = vsel %vm481, %v486, %v485
    %vm488 = vcmp.ne.s32.totalorder %v438, 0
    %vm489 = vcmp.ne.s32.totalorder %v445, 0
    %vm490 = vcmp.ne.s32.totalorder %v452, 0
    %vm491 = vcmp.ne.s32.totalorder %v459, 0
    %vm492 = vcmp.ne.s32.totalorder %v466, 0
    %vm493 = vcmp.ne.s32.totalorder %v473, 0
    %vm494 = vcmp.ne.s32.totalorder %v480, 0
    %vm495 = vcmp.ne.s32.totalorder %v487, 0
    %vm496 = vcmp.lt.s32.totalorder %v438, 0
    %vm497 = vcmp.lt.s32.totalorder %v445, 0
    %vm498 = vcmp.lt.s32.totalorder %v452, 0
    %vm499 = vcmp.lt.s32.totalorder %v459, 0
    %vm500 = vcmp.lt.s32.totalorder %v466, 0
    %vm501 = vcmp.lt.s32.totalorder %v473, 0
    %vm502 = vcmp.lt.s32.totalorder %v480, 0
    %vm503 = vcmp.lt.s32.totalorder %v487, 0
    %vm504 = vmand %vm496, %vm488
    %vm505 = vmand %vm497, %vm489
    %vm506 = vmand %vm498, %vm490
    %vm507 = vmand %vm499, %vm491
    %vm508 = vmand %vm500, %vm492
    %vm509 = vmand %vm501, %vm493
    %vm510 = vmand %vm502, %vm494
    %vm511 = vmand %vm503, %vm495
    %v512 = vadd.s32 %v438, 8
    %v513 = vadd.s32 %v445, 8
    %v514 = vadd.s32 %v452, 8
    %v515 = vadd.s32 %v459, 8
    %v516 = vadd.s32 %v466, 8
    %v517 = vadd.s32 %v473, 8
    %v518 = vadd.s32 %v480, 8
    %v519 = vadd.s32 %v487, 8
    %v520 = vsel %vm504, %v512, %v438
    %v521 = vsel %vm505, %v513, %v445
    %v522 = vsel %vm506, %v514, %v452
    %v523 = vsel %vm507, %v515, %v459
    %v524 = vsel %vm508, %v516, %v466
    %v525 = vsel %vm509, %v517, %v473
    %v526 = vsel %vm510, %v518, %v480
    %v527 = vsel %vm511, %v519, %v487
    %v528 = vlaneseq
    %v529 = vand.u32 %v528, 127
    %vm530 = vcmp.eq.s32.totalorder %v520, %v529
    %vm531 = vcmp.eq.s32.totalorder %v521, %v529
    %vm532 = vcmp.eq.s32.totalorder %v522, %v529
    %vm533 = vcmp.eq.s32.totalorder %v523, %v529
    %vm534 = vcmp.eq.s32.totalorder %v524, %v529
    %vm535 = vcmp.eq.s32.totalorder %v525, %v529
    %vm536 = vcmp.eq.s32.totalorder %v526, %v529
    %vm537 = vcmp.eq.s32.totalorder %v527, %v529
    %v538 = vsel %vm530, 1, 0
    %v539 = vsel %vm531, 1, 0
    %v540 = vsel %vm532, 1, 0
    %v541 = vsel %vm533, 1, 0
    %v542 = vsel %vm534, 1, 0
    %v543 = vsel %vm535, 1, 0
    %v544 = vsel %vm536, 1, 0
    %v545 = vsel %vm537, 1, 0
    %v546 = vcvt.s32.f32 %v538
    %v547 = vcvt.s32.f32 %v539
    %v548 = vcvt.s32.f32 %v540
    %v549 = vcvt.s32.f32 %v541
    %v550 = vcvt.s32.f32 %v542
    %v551 = vcvt.s32.f32 %v543
    %v552 = vcvt.s32.f32 %v544
    %v553 = vcvt.s32.f32 %v545
    %vm554 = vcmp.lt.s32.totalorder %v529, 0
    %v555 = vsub.s32 0, %v529
    %v556 = vsel %vm554, %v555, %v529
    %v557 = vshrl.u32 %v556, 3
    %v558 = vand.u32 %v556, 7
    %v559 = vsub.s32 0, %v558
    %v560 = vsel %vm554, %v559, %v558
    %vm561 = vcmp.ne.s32.totalorder %v560, 0
    %vm562 = vcmp.lt.s32.totalorder %v560, 0
    %vm563 = vmand %vm562, %vm561
    %v564 = vadd.s32 %v560, 8
    %v565 = vsel %vm563, %v564, %v560
    %vm566 = vcmp.eq.s32.totalorder %v565, %v424
    %v567 = vsel %vm566, 1, 0
    %v568 = vcvt.s32.f32 %v567
    %v569 = vsel %vm304, %v417, 0.0
    %v570 = vsel %vm304, %v420, 0.0
    %v571 = vadd.f32 %v569, %v570
    %v572 = vrot.slane %v571, 4
    %v573 = vadd.f32 %v571, %v572
    %v574 = vrot.slane %v573, 2
    %v575 = vadd.f32 %v573, %v574
    %v576 = vrot.slane %v575, 1
    %v577 = vadd.f32 %v575, %v576
    %v579 = vsel %vm304, %v577, 0
    %581 = vmatprep.subr.mxu0 0.0
    %582 = vmatpush1.msra.mxu0 %v546
    %583 = vmatprep.subr.mxu0 0.0
    %584 = vmatpush1.msra.mxu0 %v547
    %585 = vmatprep.subr.mxu0 0.0
    %586 = vmatpush1.msra.mxu0 %v548
    %587 = vmatprep.subr.mxu0 0.0
    %588 = vmatpush1.msra.mxu0 %v549
    %589 = vmatprep.subr.mxu0 0.0
    %590 = vmatpush1.msra.mxu0 %v550
    %591 = vmatprep.subr.mxu0 0.0
    %592 = vmatpush1.msra.mxu0 %v551
    %593 = vmatprep.subr.mxu0 0.0
    %594 = vmatpush1.msra.mxu0 %v552
    %595 = vmatprep.subr.mxu0 0.0
    %596 = vmatpush1.msra.mxu0 %v553
    %597 = vmatprep.subr.mxu0 0.0
    %598 = vmatpush1.msra.mxu0 0.0
    %599 = vmatprep.subr.mxu0 0.0
    %600 = vmatpush1.msra.mxu0 0.0
    %601 = vmatprep.subr.mxu0 0.0
    %602 = vmatpush1.msra.mxu0 0.0
    %603 = vmatprep.subr.mxu0 0.0
    %604 = vmatpush1.msra.mxu0 0.0
    %605 = vmatprep.subr.mxu0 0.0
    %606 = vmatpush1.msra.mxu0 0.0
    %607 = vmatprep.subr.mxu0 0.0
    %608 = vmatpush1.msra.mxu0 0.0
    %609 = vmatprep.subr.mxu0 0.0
    %610 = vmatpush1.msra.mxu0 0.0
    %611 = vmatprep.subr.mxu0 0.0
    %612 = vmatpush1.msra.mxu0 0.0
    %613 = vmatprep.subr.mxu0 0.0
    %614 = vmatpush1.msra.mxu0 0.0
    %615 = vmatprep.subr.mxu0 0.0
    %616 = vmatpush1.msra.mxu0 0.0
    %617 = vmatprep.subr.mxu0 0.0
    %618 = vmatpush1.msra.mxu0 0.0
    %619 = vmatprep.subr.mxu0 0.0
    %620 = vmatpush1.msra.mxu0 0.0
    %621 = vmatprep.subr.mxu0 0.0
    %622 = vmatpush1.msra.mxu0 0.0
    %623 = vmatprep.subr.mxu0 0.0
    %624 = vmatpush1.msra.mxu0 0.0
    %625 = vmatprep.subr.mxu0 0.0
    %626 = vmatpush1.msra.mxu0 0.0
    %627 = vmatprep.subr.mxu0 0.0
    %628 = vmatpush1.msra.mxu0 0.0
    %629 = vmatprep.subr.mxu0 0.0
    %630 = vmatpush1.msra.mxu0 0.0
    %631 = vmatprep.subr.mxu0 0.0
    %632 = vmatpush1.msra.mxu0 0.0
    %633 = vmatprep.subr.mxu0 0.0
    %634 = vmatpush1.msra.mxu0 0.0
    %635 = vmatprep.subr.mxu0 0.0
    %636 = vmatpush1.msra.mxu0 0.0
    %637 = vmatprep.subr.mxu0 0.0
    %638 = vmatpush1.msra.mxu0 0.0
    %639 = vmatprep.subr.mxu0 0.0
    %640 = vmatpush1.msra.mxu0 0.0
    %641 = vmatprep.subr.mxu0 0.0
    %642 = vmatpush1.msra.mxu0 0.0
    %643 = vmatprep.subr.mxu0 0.0
    %644 = vmatpush1.msra.mxu0 0.0
    %645 = vmatprep.mubr.f32.mxu0 0.0
    %646 = vmatmul.mubr.f32.gmra.mrb[0].mxu0 %v579
    %v647 = vpop.f32.mrb[0].mxu0
    %v648 = vadd.f32 0.0, %v647
    %v649 = vpop.f32.mrb[0].mxu0
    %650 = vdwg.mxu0
    %vm651 = vcmask 64512
    %v653 = vsel %vm651, %v648, 0
    %655 = vmatprep.subr.mxu0 0.0
    %656 = vmatpush1.msra.mxu0 %v568
    %657 = vmatprep.subr.mxu0 0.0
    %658 = vmatpush1.msra.mxu0 0.0
    %659 = vmatprep.subr.mxu0 0.0
    %660 = vmatpush1.msra.mxu0 0.0
    %661 = vmatprep.subr.mxu0 0.0
    %662 = vmatpush1.msra.mxu0 0.0
    %663 = vmatprep.subr.mxu0 0.0
    %664 = vmatpush1.msra.mxu0 0.0
    %665 = vmatprep.subr.mxu0 0.0
    %666 = vmatpush1.msra.mxu0 0.0
    %667 = vmatprep.subr.mxu0 0.0
    %668 = vmatpush1.msra.mxu0 0.0
    %669 = vmatprep.subr.mxu0 0.0
    %670 = vmatpush1.msra.mxu0 0.0
    %671 = vmatprep.subr.mxu0 0.0
    %672 = vmatpush1.msra.mxu0 0.0
    %673 = vmatprep.subr.mxu0 0.0
    %674 = vmatpush1.msra.mxu0 0.0
    %675 = vmatprep.subr.mxu0 0.0
    %676 = vmatpush1.msra.mxu0 0.0
    %677 = vmatprep.subr.mxu0 0.0
    %678 = vmatpush1.msra.mxu0 0.0
    %679 = vmatprep.subr.mxu0 0.0
    %680 = vmatpush1.msra.mxu0 0.0
    %681 = vmatprep.subr.mxu0 0.0
    %682 = vmatpush1.msra.mxu0 0.0
    %683 = vmatprep.subr.mxu0 0.0
    %684 = vmatpush1.msra.mxu0 0.0
    %685 = vmatprep.subr.mxu0 0.0
    %686 = vmatpush1.msra.mxu0 0.0
    %687 = vmatprep.subr.mxu0 0.0
    %688 = vmatpush1.msra.mxu0 0.0
    %689 = vmatprep.subr.mxu0 0.0
    %690 = vmatpush1.msra.mxu0 0.0
    %691 = vmatprep.subr.mxu0 0.0
    %692 = vmatpush1.msra.mxu0 0.0
    %693 = vmatprep.subr.mxu0 0.0
    %694 = vmatpush1.msra.mxu0 0.0
    %695 = vmatprep.subr.mxu0 0.0
    %696 = vmatpush1.msra.mxu0 0.0
    %697 = vmatprep.subr.mxu0 0.0
    %698 = vmatpush1.msra.mxu0 0.0
    %699 = vmatprep.subr.mxu0 0.0
    %700 = vmatpush1.msra.mxu0 0.0
    %701 = vmatprep.subr.mxu0 0.0
    %702 = vmatpush1.msra.mxu0 0.0
    %703 = vmatprep.subr.mxu0 0.0
    %704 = vmatpush1.msra.mxu0 0.0
    %705 = vmatprep.subr.mxu0 0.0
    %706 = vmatpush1.msra.mxu0 0.0
    %707 = vmatprep.subr.mxu0 0.0
    %708 = vmatpush1.msra.mxu0 0.0
    %709 = vmatprep.subr.mxu0 0.0
    %710 = vmatpush1.msra.mxu0 0.0
    %711 = vmatprep.subr.mxu0 0.0
    %712 = vmatpush1.msra.mxu0 0.0
    %713 = vmatprep.subr.mxu0 0.0
    %714 = vmatpush1.msra.mxu0 0.0
    %715 = vmatprep.subr.mxu0 0.0
    %716 = vmatpush1.msra.mxu0 0.0
    %717 = vmatprep.subr.mxu0 0.0
    %718 = vmatpush1.msra.mxu0 0.0
    %719 = vmatprep.mubr.f32.mxu0 0.0
    %720 = vmatmul.mubr.f32.gmra.mrb[0].mxu0 %v653
    %v721 = vpop.f32.mrb[0].mxu0
    %v722 = vadd.f32 0.0, %v721
    %v723 = vpop.f32.mrb[0].mxu0
    %724 = vdwg.mxu0
    %v725 = vmul.f32 %v722, 0.0078125
    %v726 = vlaneseq
    %v727 = vshrl.u32 %v726, 7
    %v728 = vsub.s32 0, %v727
    %v729 = vrot.slane %v725, %v728
    %v730 = vsub.f32 %v417, %v729
    %v731 = vsub.f32 %v420, %v729
    %v732 = vmul.f32 %v730, %v730
    %v733 = vmul.f32 %v731, %v731
    %v734 = vsel %vm304, %v732, 0.0
    %v735 = vsel %vm304, %v733, 0.0
    %v736 = vadd.f32 %v734, %v735
    %v737 = vrot.slane %v736, 4
    %v738 = vadd.f32 %v736, %v737
    %v739 = vrot.slane %v738, 2
    %v740 = vadd.f32 %v738, %v739
    %v741 = vrot.slane %v740, 1
    %v742 = vadd.f32 %v740, %v741
    %v744 = vsel %vm304, %v742, 0
    %746 = vmatprep.subr.mxu0 0.0
    %747 = vmatpush1.msra.mxu0 %v546
    %748 = vmatprep.subr.mxu0 0.0
    %749 = vmatpush1.msra.mxu0 %v547
    %750 = vmatprep.subr.mxu0 0.0
    %751 = vmatpush1.msra.mxu0 %v548
    %752 = vmatprep.subr.mxu0 0.0
    %753 = vmatpush1.msra.mxu0 %v549
    %754 = vmatprep.subr.mxu0 0.0
    %755 = vmatpush1.msra.mxu0 %v550
    %756 = vmatprep.subr.mxu0 0.0
    %757 = vmatpush1.msra.mxu0 %v551
    %758 = vmatprep.subr.mxu0 0.0
    %759 = vmatpush1.msra.mxu0 %v552
    %760 = vmatprep.subr.mxu0 0.0
    %761 = vmatpush1.msra.mxu0 %v553
    %762 = vmatprep.subr.mxu0 0.0
    %763 = vmatpush1.msra.mxu0 0.0
    %764 = vmatprep.subr.mxu0 0.0
    %765 = vmatpush1.msra.mxu0 0.0
    %766 = vmatprep.subr.mxu0 0.0
    %767 = vmatpush1.msra.mxu0 0.0
    %768 = vmatprep.subr.mxu0 0.0
    %769 = vmatpush1.msra.mxu0 0.0
    %770 = vmatprep.subr.mxu0 0.0
    %771 = vmatpush1.msra.mxu0 0.0
    %772 = vmatprep.subr.mxu0 0.0
    %773 = vmatpush1.msra.mxu0 0.0
    %774 = vmatprep.subr.mxu0 0.0
    %775 = vmatpush1.msra.mxu0 0.0
    %776 = vmatprep.subr.mxu0 0.0
    %777 = vmatpush1.msra.mxu0 0.0
    %778 = vmatprep.subr.mxu0 0.0
    %779 = vmatpush1.msra.mxu0 0.0
    %780 = vmatprep.subr.mxu0 0.0
    %781 = vmatpush1.msra.mxu0 0.0
    %782 = vmatprep.subr.mxu0 0.0
    %783 = vmatpush1.msra.mxu0 0.0
    %784 = vmatprep.subr.mxu0 0.0
    %785 = vmatpush1.msra.mxu0 0.0
    %786 = vmatprep.subr.mxu0 0.0
    %787 = vmatpush1.msra.mxu0 0.0
    %788 = vmatprep.subr.mxu0 0.0
    %789 = vmatpush1.msra.mxu0 0.0
    %790 = vmatprep.subr.mxu0 0.0
    %791 = vmatpush1.msra.mxu0 0.0
    %792 = vmatprep.subr.mxu0 0.0
    %793 = vmatpush1.msra.mxu0 0.0
    %794 = vmatprep.subr.mxu0 0.0
    %795 = vmatpush1.msra.mxu0 0.0
    %796 = vmatprep.subr.mxu0 0.0
    %797 = vmatpush1.msra.mxu0 0.0
    %798 = vmatprep.subr.mxu0 0.0
    %799 = vmatpush1.msra.mxu0 0.0
    %800 = vmatprep.subr.mxu0 0.0
    %801 = vmatpush1.msra.mxu0 0.0
    %802 = vmatprep.subr.mxu0 0.0
    %803 = vmatpush1.msra.mxu0 0.0
    %804 = vmatprep.subr.mxu0 0.0
    %805 = vmatpush1.msra.mxu0 0.0
    %806 = vmatprep.subr.mxu0 0.0
    %807 = vmatpush1.msra.mxu0 0.0
    %808 = vmatprep.subr.mxu0 0.0
    %809 = vmatpush1.msra.mxu0 0.0
    %810 = vmatprep.mubr.f32.mxu0 0.0
    %811 = vmatmul.mubr.f32.gmra.mrb[0].mxu0 %v744
    %v812 = vpop.f32.mrb[0].mxu0
    %v813 = vadd.f32 0.0, %v812
    %v814 = vpop.f32.mrb[0].mxu0
    %815 = vdwg.mxu0
    %v817 = vsel %vm651, %v813, 0
    %819 = vmatprep.subr.mxu0 0.0
    %820 = vmatpush1.msra.mxu0 %v568
    %821 = vmatprep.subr.mxu0 0.0
    %822 = vmatpush1.msra.mxu0 0.0
    %823 = vmatprep.subr.mxu0 0.0
    %824 = vmatpush1.msra.mxu0 0.0
    %825 = vmatprep.subr.mxu0 0.0
    %826 = vmatpush1.msra.mxu0 0.0
    %827 = vmatprep.subr.mxu0 0.0
    %828 = vmatpush1.msra.mxu0 0.0
    %829 = vmatprep.subr.mxu0 0.0
    %830 = vmatpush1.msra.mxu0 0.0
    %831 = vmatprep.subr.mxu0 0.0
    %832 = vmatpush1.msra.mxu0 0.0
    %833 = vmatprep.subr.mxu0 0.0
    %834 = vmatpush1.msra.mxu0 0.0
    %835 = vmatprep.subr.mxu0 0.0
    %836 = vmatpush1.msra.mxu0 0.0
    %837 = vmatprep.subr.mxu0 0.0
    %838 = vmatpush1.msra.mxu0 0.0
    %839 = vmatprep.subr.mxu0 0.0
    %840 = vmatpush1.msra.mxu0 0.0
    %841 = vmatprep.subr.mxu0 0.0
    %842 = vmatpush1.msra.mxu0 0.0
    %843 = vmatprep.subr.mxu0 0.0
    %844 = vmatpush1.msra.mxu0 0.0
    %845 = vmatprep.subr.mxu0 0.0
    %846 = vmatpush1.msra.mxu0 0.0
    %847 = vmatprep.subr.mxu0 0.0
    %848 = vmatpush1.msra.mxu0 0.0
    %849 = vmatprep.subr.mxu0 0.0
    %850 = vmatpush1.msra.mxu0 0.0
    %851 = vmatprep.subr.mxu0 0.0
    %852 = vmatpush1.msra.mxu0 0.0
    %853 = vmatprep.subr.mxu0 0.0
    %854 = vmatpush1.msra.mxu0 0.0
    %855 = vmatprep.subr.mxu0 0.0
    %856 = vmatpush1.msra.mxu0 0.0
    %857 = vmatprep.subr.mxu0 0.0
    %858 = vmatpush1.msra.mxu0 0.0
    %859 = vmatprep.subr.mxu0 0.0
    %860 = vmatpush1.msra.mxu0 0.0
    %861 = vmatprep.subr.mxu0 0.0
    %862 = vmatpush1.msra.mxu0 0.0
    %863 = vmatprep.subr.mxu0 0.0
    %864 = vmatpush1.msra.mxu0 0.0
    %865 = vmatprep.subr.mxu0 0.0
    %866 = vmatpush1.msra.mxu0 0.0
    %867 = vmatprep.subr.mxu0 0.0
    %868 = vmatpush1.msra.mxu0 0.0
    %869 = vmatprep.subr.mxu0 0.0
    %870 = vmatpush1.msra.mxu0 0.0
    %871 = vmatprep.subr.mxu0 0.0
    %872 = vmatpush1.msra.mxu0 0.0
    %873 = vmatprep.subr.mxu0 0.0
    %874 = vmatpush1.msra.mxu0 0.0
    %875 = vmatprep.subr.mxu0 0.0
    %876 = vmatpush1.msra.mxu0 0.0
    %877 = vmatprep.subr.mxu0 0.0
    %878 = vmatpush1.msra.mxu0 0.0
    %879 = vmatprep.subr.mxu0 0.0
    %880 = vmatpush1.msra.mxu0 0.0
    %881 = vmatprep.subr.mxu0 0.0
    %882 = vmatpush1.msra.mxu0 0.0
    %883 = vmatprep.mubr.f32.mxu0 0.0
    %884 = vmatmul.mubr.f32.gmra.mrb[0].mxu0 %v817
    %v885 = vpop.f32.mrb[0].mxu0
    %v886 = vadd.f32 0.0, %v885
    %v887 = vpop.f32.mrb[0].mxu0
    %888 = vdwg.mxu0
    %v889 = vmul.f32 %v886, 0.0078125
    %v890 = vld [vmem:[%s4] sm:$0x1]
    %v891 = vadd.f32 %v889, 1e-05
    %v892 = vrsqrt.pop %v891
    %v893 = vmul.f32 %v890, %v892
    %v895 = vlaneseq
    %v896 = vshrl.u32 %v895, 7
    %v897 = vsub.s32 0, %v896
    %v898 = vrot.slane %v893, %v897
    %v900 = vmul.f32 %v730, %v898
    %v901 = vmul.f32 %v731, %v898
    %v902 = vld [vmem:[%s5] sm:$0x1]
    %v904 = vlaneseq
    %v905 = vshrl.u32 %v904, 7
    %v906 = vsub.s32 0, %v905
    %v907 = vrot.slane %v902, %v906
    %v909 = vadd.f32 %v900, %v907
    %v910 = vadd.f32 %v901, %v907
    %vm911 = vcmp.ge.f32.partialorder %v909, 0.0
    %vm912 = vcmp.ge.f32.partialorder %v910, 0.0
    %v913 = vmul.f32 %v909, 0.2
    %v914 = vmul.f32 %v910, 0.2
    %v915 = vsel %vm911, %v909, %v913
    %v916 = vsel %vm912, %v910, %v914
    %v917 = vpack.c.bf16 %v916, %v915
    %v918 = vld [vmem:[%s6] sm:$0xf]
    %vm919 = vcmask 130048
    %v921 = vsel %vm919, %v918, 0
    %923 = vmatprep.subr.bf16.mxu0 0
    %924 = vmatpush1.bf16.msra.mxu0 %v917
    %925 = vmatprep.subr.bf16.mxu0 0
    %926 = vmatpush1.bf16.msra.mxu0 0
    %927 = vmatprep.subr.bf16.mxu0 0
    %928 = vmatpush1.bf16.msra.mxu0 0
    %929 = vmatprep.subr.bf16.mxu0 0
    %930 = vmatpush1.bf16.msra.mxu0 0
    %931 = vmatprep.subr.bf16.mxu0 0
    %932 = vmatpush1.bf16.msra.mxu0 0
    %933 = vmatprep.subr.bf16.mxu0 0
    %934 = vmatpush1.bf16.msra.mxu0 0
    %935 = vmatprep.subr.bf16.mxu0 0
    %936 = vmatpush1.bf16.msra.mxu0 0
    %937 = vmatprep.subr.bf16.mxu0 0
    %938 = vmatpush1.bf16.msra.mxu0 0
    %939 = vmatprep.subr.bf16.mxu0 0
    %940 = vmatpush1.bf16.msra.mxu0 0
    %941 = vmatprep.subr.bf16.mxu0 0
    %942 = vmatpush1.bf16.msra.mxu0 0
    %943 = vmatprep.subr.bf16.mxu0 0
    %944 = vmatpush1.bf16.msra.mxu0 0
    %945 = vmatprep.subr.bf16.mxu0 0
    %946 = vmatpush1.bf16.msra.mxu0 0
    %947 = vmatprep.subr.bf16.mxu0 0
    %948 = vmatpush1.bf16.msra.mxu0 0
    %949 = vmatprep.subr.bf16.mxu0 0
    %950 = vmatpush1.bf16.msra.mxu0 0
    %951 = vmatprep.subr.bf16.mxu0 0
    %952 = vmatpush1.bf16.msra.mxu0 0
    %953 = vmatprep.subr.bf16.mxu0 0
    %954 = vmatpush1.bf16.msra.mxu0 0
    %955 = vmatprep.mubr.bf16.mxu0 0
    %956 = vmatmul.mubr.bf16.gmra.mrb[0].mxu0 %v921
    %v957 = vpop.f32.mrb[0].mxu0
    %v958 = vadd.f32 0.0, %v957
    %v959 = vpop.f32.mrb[0].mxu0
    %v960 = vpop.f32.mrb[0].mxu0
    %v961 = vpop.f32.mrb[0].mxu0
    %962 = vdwg.mxu0
    %s963 = scalar_lea.vmem %s6, 4
    %v964 = vld [vmem:[%s963] sm:$0xf]
    %v966 = vsel %vm919, %v964, 0
    %968 = vmatprep.subr.bf16.mxu0 0
    %969 = vmatpush1.bf16.msra.mxu0 %v917
    %970 = vmatprep.subr.bf16.mxu0 0
    %971 = vmatpush1.bf16.msra.mxu0 0
    %972 = vmatprep.subr.bf16.mxu0 0
    %973 = vmatpush1.bf16.msra.mxu0 0
    %974 = vmatprep.subr.bf16.mxu0 0
    %975 = vmatpush1.bf16.msra.mxu0 0
    %976 = vmatprep.subr.bf16.mxu0 0
    %977 = vmatpush1.bf16.msra.mxu0 0
    %978 = vmatprep.subr.bf16.mxu0 0
    %979 = vmatpush1.bf16.msra.mxu0 0
    %980 = vmatprep.subr.bf16.mxu0 0
    %981 = vmatpush1.bf16.msra.mxu0 0
    %982 = vmatprep.subr.bf16.mxu0 0
    %983 = vmatpush1.bf16.msra.mxu0 0
    %984 = vmatprep.subr.bf16.mxu0 0
    %985 = vmatpush1.bf16.msra.mxu0 0
    %986 = vmatprep.subr.bf16.mxu0 0
    %987 = vmatpush1.bf16.msra.mxu0 0
    %988 = vmatprep.subr.bf16.mxu0 0
    %989 = vmatpush1.bf16.msra.mxu0 0
    %990 = vmatprep.subr.bf16.mxu0 0
    %991 = vmatpush1.bf16.msra.mxu0 0
    %992 = vmatprep.subr.bf16.mxu0 0
    %993 = vmatpush1.bf16.msra.mxu0 0
    %994 = vmatprep.subr.bf16.mxu0 0
    %995 = vmatpush1.bf16.msra.mxu0 0
    %996 = vmatprep.subr.bf16.mxu0 0
    %997 = vmatpush1.bf16.msra.mxu0 0
    %998 = vmatprep.subr.bf16.mxu0 0
    %999 = vmatpush1.bf16.msra.mxu0 0
    %1000 = vmatprep.mubr.bf16.mxu0 0
    %1001 = vmatmul.mubr.bf16.gmra.mrb[0].mxu0 %v966
    %v1002 = vpop.f32.mrb[0].mxu0
    %v1003 = vadd.f32 0.0, %v1002
    %v1004 = vpop.f32.mrb[0].mxu0
    %v1005 = vpop.f32.mrb[0].mxu0
    %v1006 = vpop.f32.mrb[0].mxu0
    %1007 = vdwg.mxu0
    %s1008 = scalar_lea.vmem %s6, 8
    %v1009 = vld [vmem:[%s1008] sm:$0xf]
    %v1011 = vsel %vm919, %v1009, 0
    %1013 = vmatprep.subr.bf16.mxu0 0
    %1014 = vmatpush1.bf16.msra.mxu0 %v917
    %1015 = vmatprep.subr.bf16.mxu0 0
    %1016 = vmatpush1.bf16.msra.mxu0 0
    %1017 = vmatprep.subr.bf16.mxu0 0
    %1018 = vmatpush1.bf16.msra.mxu0 0
    %1019 = vmatprep.subr.bf16.mxu0 0
    %1020 = vmatpush1.bf16.msra.mxu0 0
    %1021 = vmatprep.subr.bf16.mxu0 0
    %1022 = vmatpush1.bf16.msra.mxu0 0
    %1023 = vmatprep.subr.bf16.mxu0 0
    %1024 = vmatpush1.bf16.msra.mxu0 0
    %1025 = vmatprep.subr.bf16.mxu0 0
    %1026 = vmatpush1.bf16.msra.mxu0 0
    %1027 = vmatprep.subr.bf16.mxu0 0
    %1028 = vmatpush1.bf16.msra.mxu0 0
    %1029 = vmatprep.subr.bf16.mxu0 0
    %1030 = vmatpush1.bf16.msra.mxu0 0
    %1031 = vmatprep.subr.bf16.mxu0 0
    %1032 = vmatpush1.bf16.msra.mxu0 0
    %1033 = vmatprep.subr.bf16.mxu0 0
    %1034 = vmatpush1.bf16.msra.mxu0 0
    %1035 = vmatprep.subr.bf16.mxu0 0
    %1036 = vmatpush1.bf16.msra.mxu0 0
    %1037 = vmatprep.subr.bf16.mxu0 0
    %1038 = vmatpush1.bf16.msra.mxu0 0
    %1039 = vmatprep.subr.bf16.mxu0 0
    %1040 = vmatpush1.bf16.msra.mxu0 0
    %1041 = vmatprep.subr.bf16.mxu0 0
    %1042 = vmatpush1.bf16.msra.mxu0 0
    %1043 = vmatprep.subr.bf16.mxu0 0
    %1044 = vmatpush1.bf16.msra.mxu0 0
    %1045 = vmatprep.mubr.bf16.mxu0 0
    %1046 = vmatmul.mubr.bf16.gmra.mrb[0].mxu0 %v1011
    %v1047 = vpop.f32.mrb[0].mxu0
    %v1048 = vadd.f32 0.0, %v1047
    %v1049 = vpop.f32.mrb[0].mxu0
    %v1050 = vpop.f32.mrb[0].mxu0
    %v1051 = vpop.f32.mrb[0].mxu0
    %1052 = vdwg.mxu0
    %s1053 = scalar_lea.vmem %s6, 12
    %v1054 = vld [vmem:[%s1053] sm:$0xf]
    %v1056 = vsel %vm919, %v1054, 0
    %1058 = vmatprep.subr.bf16.mxu0 0
    %1059 = vmatpush1.bf16.msra.mxu0 %v917
    %1060 = vmatprep.subr.bf16.mxu0 0
    %1061 = vmatpush1.bf16.msra.mxu0 0
    %1062 = vmatprep.subr.bf16.mxu0 0
    %1063 = vmatpush1.bf16.msra.mxu0 0
    %1064 = vmatprep.subr.bf16.mxu0 0
    %1065 = vmatpush1.bf16.msra.mxu0 0
    %1066 = vmatprep.subr.bf16.mxu0 0
    %1067 = vmatpush1.bf16.msra.mxu0 0
    %1068 = vmatprep.subr.bf16.mxu0 0
    %1069 = vmatpush1.bf16.msra.mxu0 0
    %1070 = vmatprep.subr.bf16.mxu0 0
    %1071 = vmatpush1.bf16.msra.mxu0 0
    %1072 = vmatprep.subr.bf16.mxu0 0
    %1073 = vmatpush1.bf16.msra.mxu0 0
    %1074 = vmatprep.subr.bf16.mxu0 0
    %1075 = vmatpush1.bf16.msra.mxu0 0
    %1076 = vmatprep.subr.bf16.mxu0 0
    %1077 = vmatpush1.bf16.msra.mxu0 0
    %1078 = vmatprep.subr.bf16.mxu0 0
    %1079 = vmatpush1.bf16.msra.mxu0 0
    %1080 = vmatprep.subr.bf16.mxu0 0
    %1081 = vmatpush1.bf16.msra.mxu0 0
    %1082 = vmatprep.subr.bf16.mxu0 0
    %1083 = vmatpush1.bf16.msra.mxu0 0
    %1084 = vmatprep.subr.bf16.mxu0 0
    %1085 = vmatpush1.bf16.msra.mxu0 0
    %1086 = vmatprep.subr.bf16.mxu0 0
    %1087 = vmatpush1.bf16.msra.mxu0 0
    %1088 = vmatprep.subr.bf16.mxu0 0
    %1089 = vmatpush1.bf16.msra.mxu0 0
    %1090 = vmatprep.mubr.bf16.mxu0 0
    %1091 = vmatmul.mubr.bf16.gmra.mrb[0].mxu0 %v1056
    %v1092 = vpop.f32.mrb[0].mxu0
    %v1093 = vadd.f32 0.0, %v1092
    %v1094 = vpop.f32.mrb[0].mxu0
    %v1095 = vpop.f32.mrb[0].mxu0
    %v1096 = vpop.f32.mrb[0].mxu0
    %1097 = vdwg.mxu0
    %1099 = vrot.lane.b32.xlu0 %v1003, 64
    %v1100 = vpop.permute.xlu0 %1099
    %1103 = vrot.lane.b32.xlu0 %v1093, 64
    %v1104 = vpop.permute.xlu0 %1103
    %v1106 = vsel %vm304, %v958, %v1100
    %v1107 = vsel %vm304, %v1048, %v1104
    %v1108 = vpack.c.bf16 %v1106, %v1106
    %v1109 = vpack.c.bf16 %v1107, %v1107
    %v1110 = vld [vmem:[%s7] sm:$0xf]
    %v1111 = vld [vmem:[%s7 + $0x4] sm:$0xf]
    %v1112 = vld [vmem:[%s7 + $0x8] sm:$0xf]
    %v1113 = vld [vmem:[%s7 + $0xc] sm:$0xf]
    %v1114 = vld [vmem:[%s7 + $0x10] sm:$0xf]
    %v1115 = vld [vmem:[%s7 + $0x14] sm:$0xf]
    %v1116 = vld [vmem:[%s7 + $0x18] sm:$0xf]
    %v1117 = vld [vmem:[%s7 + $0x1c] sm:$0xf]
    %v1118 = vld [vmem:[%s7 + $0x20] sm:$0xf]
    %v1119 = vld [vmem:[%s7 + $0x24] sm:$0xf]
    %v1120 = vld [vmem:[%s7 + $0x28] sm:$0xf]
    %v1121 = vld [vmem:[%s7 + $0x2c] sm:$0xf]
    %v1122 = vld [vmem:[%s7 + $0x30] sm:$0xf]
    %v1123 = vld [vmem:[%s7 + $0x34] sm:$0xf]
    %v1124 = vld [vmem:[%s7 + $0x38] sm:$0xf]
    %v1125 = vld [vmem:[%s7 + $0x3c] sm:$0xf]
    %v1126 = vld [vmem:[%s7 + $0x40] sm:$0xf]
    %v1127 = vld [vmem:[%s7 + $0x44] sm:$0xf]
    %v1128 = vld [vmem:[%s7 + $0x48] sm:$0xf]
    %v1129 = vld [vmem:[%s7 + $0x4c] sm:$0xf]
    %v1130 = vld [vmem:[%s7 + $0x50] sm:$0xf]
    %v1131 = vld [vmem:[%s7 + $0x54] sm:$0xf]
    %v1132 = vld [vmem:[%s7 + $0x58] sm:$0xf]
    %v1133 = vld [vmem:[%s7 + $0x5c] sm:$0xf]
    %v1134 = vld [vmem:[%s7 + $0x60] sm:$0xf]
    %v1135 = vld [vmem:[%s7 + $0x64] sm:$0xf]
    %v1136 = vld [vmem:[%s7 + $0x68] sm:$0xf]
    %v1137 = vld [vmem:[%s7 + $0x6c] sm:$0xf]
    %v1138 = vld [vmem:[%s7 + $0x70] sm:$0xf]
    %v1139 = vld [vmem:[%s7 + $0x74] sm:$0xf]
    %v1140 = vld [vmem:[%s7 + $0x78] sm:$0xf]
    %v1141 = vld [vmem:[%s7 + $0x7c] sm:$0xf]
    %v1142 = vld [vmem:[%s8] sm:$0x1]
    %v1144 = vlaneseq
    %v1145 = vshrl.u32 %v1144, 7
    %v1146 = vsub.s32 0, %v1145
    %v1147 = vrot.slane %v1142, %v1146
    %v1181 = vunpack.c.l.b16 %v1110
    %v1182 = vunpack.c.l.b16 %v1111
    %v1183 = vunpack.c.l.b16 %v1112
    %v1184 = vunpack.c.l.b16 %v1113
    %v1185 = vunpack.c.l.b16 %v1114
    %v1186 = vunpack.c.l.b16 %v1115
    %v1187 = vunpack.c.l.b16 %v1116
    %v1188 = vunpack.c.l.b16 %v1117
    %v1189 = vunpack.c.l.b16 %v1118
    %v1190 = vunpack.c.l.b16 %v1119
    %v1191 = vunpack.c.l.b16 %v1120
    %v1192 = vunpack.c.l.b16 %v1121
    %v1193 = vunpack.c.l.b16 %v1122
    %v1194 = vunpack.c.l.b16 %v1123
    %v1195 = vunpack.c.l.b16 %v1124
    %v1196 = vunpack.c.l.b16 %v1125
    %v1197 = vunpack.c.l.b16 %v1126
    %v1198 = vunpack.c.l.b16 %v1127
    %v1199 = vunpack.c.l.b16 %v1128
    %v1200 = vunpack.c.l.b16 %v1129
    %v1201 = vunpack.c.l.b16 %v1130
    %v1202 = vunpack.c.l.b16 %v1131
    %v1203 = vunpack.c.l.b16 %v1132
    %v1204 = vunpack.c.l.b16 %v1133
    %v1205 = vunpack.c.l.b16 %v1134
    %v1206 = vunpack.c.l.b16 %v1135
    %v1207 = vunpack.c.l.b16 %v1136
    %v1208 = vunpack.c.l.b16 %v1137
    %v1209 = vunpack.c.l.b16 %v1138
    %v1210 = vunpack.c.l.b16 %v1139
    %v1211 = vunpack.c.l.b16 %v1140
    %v1212 = vunpack.c.l.b16 %v1141
    %v1213 = vpack.c.b16 %v1182, %v1181
    %v1214 = vpack.c.b16 %v1184, %v1183
    %v1215 = vpack.c.b16 %v1186, %v1185
    %v1216 = vpack.c.b16 %v1188, %v1187
    %v1217 = vpack.c.b16 %v1190, %v1189
    %v1218 = vpack.c.b16 %v1192, %v1191
    %v1219 = vpack.c.b16 %v1194, %v1193
    %v1220 = vpack.c.b16 %v1196, %v1195
    %v1221 = vpack.c.b16 %v1198, %v1197
    %v1222 = vpack.c.b16 %v1200, %v1199
    %v1223 = vpack.c.b16 %v1202, %v1201
    %v1224 = vpack.c.b16 %v1204, %v1203
    %v1225 = vpack.c.b16 %v1206, %v1205
    %v1226 = vpack.c.b16 %v1208, %v1207
    %v1227 = vpack.c.b16 %v1210, %v1209
    %v1228 = vpack.c.b16 %v1212, %v1211
    %1245 = vmatprep.subr.bf16.mxu0 0
    %1246 = vmatpush1.bf16.msra.mxu0 %v1213
    %1247 = vmatprep.subr.bf16.mxu0 0
    %1248 = vmatpush1.bf16.msra.mxu0 %v1214
    %1249 = vmatprep.subr.bf16.mxu0 0
    %1250 = vmatpush1.bf16.msra.mxu0 %v1215
    %1251 = vmatprep.subr.bf16.mxu0 0
    %1252 = vmatpush1.bf16.msra.mxu0 %v1216
    %1253 = vmatprep.subr.bf16.mxu0 0
    %1254 = vmatpush1.bf16.msra.mxu0 %v1217
    %1255 = vmatprep.subr.bf16.mxu0 0
    %1256 = vmatpush1.bf16.msra.mxu0 %v1218
    %1257 = vmatprep.subr.bf16.mxu0 0
    %1258 = vmatpush1.bf16.msra.mxu0 %v1219
    %1259 = vmatprep.subr.bf16.mxu0 0
    %1260 = vmatpush1.bf16.msra.mxu0 %v1220
    %1261 = vmatprep.subr.bf16.mxu0 0
    %1262 = vmatpush1.bf16.msra.mxu0 %v1221
    %1263 = vmatprep.subr.bf16.mxu0 0
    %1264 = vmatpush1.bf16.msra.mxu0 %v1222
    %1265 = vmatprep.subr.bf16.mxu0 0
    %1266 = vmatpush1.bf16.msra.mxu0 %v1223
    %1267 = vmatprep.subr.bf16.mxu0 0
    %1268 = vmatpush1.bf16.msra.mxu0 %v1224
    %1269 = vmatprep.subr.bf16.mxu0 0
    %1270 = vmatpush1.bf16.msra.mxu0 %v1225
    %1271 = vmatprep.subr.bf16.mxu0 0
    %1272 = vmatpush1.bf16.msra.mxu0 %v1226
    %1273 = vmatprep.subr.bf16.mxu0 0
    %1274 = vmatpush1.bf16.msra.mxu0 %v1227
    %1275 = vmatprep.subr.bf16.mxu0 0
    %1276 = vmatpush1.bf16.msra.mxu0 %v1228
    %1277 = vmatprep.mubr.bf16.mxu0 %v1109
    %1278 = vmatmul.mubr.bf16.gmra.mrb[0].mxu0 %v1108
    %v1279 = vpop.f32.mrb[0].mxu0
    %v1280 = vadd.f32 %v1147, %v1279
    %v1281 = vpop.f32.mrb[0].mxu0
    %v1282 = vpop.f32.mrb[0].mxu0
    %v1283 = vpop.f32.mrb[0].mxu0
    %1284 = vdwg.mxu0
    %vm1285 = vcmp.lt.s32.totalorder %v424, 0
    %v1286 = vsub.s32 0, %v424
    %v1287 = vsel %vm1285, %v1286, %v424
    %v1288 = vshrl.u32 %v1287, 4
    %v1289 = vand.u32 %v1287, 15
    %v1290 = vsub.s32 0, %v1289
    %v1291 = vsel %vm1285, %v1290, %v1289
    %vm1292 = vcmp.lt.s32.totalorder %v425, 0
    %v1293 = vsub.s32 0, %v425
    %v1294 = vsel %vm1292, %v1293, %v425
    %v1295 = vshrl.u32 %v1294, 4
    %v1296 = vand.u32 %v1294, 15
    %v1297 = vsub.s32 0, %v1296
    %v1298 = vsel %vm1292, %v1297, %v1296
    %vm1299 = vcmp.lt.s32.totalorder %v426, 0
    %v1300 = vsub.s32 0, %v426
    %v1301 = vsel %vm1299, %v1300, %v426
    %v1302 = vshrl.u32 %v1301, 4
    %v1303 = vand.u32 %v1301, 15
    %v1304 = vsub.s32 0, %v1303
    %v1305 = vsel %vm1299, %v1304, %v1303
    %vm1306 = vcmp.lt.s32.totalorder %v427, 0
    %v1307 = vsub.s32 0, %v427
    %v1308 = vsel %vm1306, %v1307, %v427
    %v1309 = vshrl.u32 %v1308, 4
    %v1310 = vand.u32 %v1308, 15
    %v1311 = vsub.s32 0, %v1310
    %v1312 = vsel %vm1306, %v1311, %v1310
    %vm1313 = vcmp.lt.s32.totalorder %v428, 0
    %v1314 = vsub.s32 0, %v428
    %v1315 = vsel %vm1313, %v1314, %v428
    %v1316 = vshrl.u32 %v1315, 4
    %v1317 = vand.u32 %v1315, 15
    %v1318 = vsub.s32 0, %v1317
    %v1319 = vsel %vm1313, %v1318, %v1317
    %vm1320 = vcmp.lt.s32.totalorder %v429, 0
    %v1321 = vsub.s32 0, %v429
    %v1322 = vsel %vm1320, %v1321, %v429
    %v1323 = vshrl.u32 %v1322, 4
    %v1324 = vand.u32 %v1322, 15
    %v1325 = vsub.s32 0, %v1324
    %v1326 = vsel %vm1320, %v1325, %v1324
    %vm1327 = vcmp.lt.s32.totalorder %v430, 0
    %v1328 = vsub.s32 0, %v430
    %v1329 = vsel %vm1327, %v1328, %v430
    %v1330 = vshrl.u32 %v1329, 4
    %v1331 = vand.u32 %v1329, 15
    %v1332 = vsub.s32 0, %v1331
    %v1333 = vsel %vm1327, %v1332, %v1331
    %vm1334 = vcmp.lt.s32.totalorder %v431, 0
    %v1335 = vsub.s32 0, %v431
    %v1336 = vsel %vm1334, %v1335, %v431
    %v1337 = vshrl.u32 %v1336, 4
    %v1338 = vand.u32 %v1336, 15
    %v1339 = vsub.s32 0, %v1338
    %v1340 = vsel %vm1334, %v1339, %v1338
    %vm1341 = vcmp.ne.s32.totalorder %v1291, 0
    %vm1342 = vcmp.ne.s32.totalorder %v1298, 0
    %vm1343 = vcmp.ne.s32.totalorder %v1305, 0
    %vm1344 = vcmp.ne.s32.totalorder %v1312, 0
    %vm1345 = vcmp.ne.s32.totalorder %v1319, 0
    %vm1346 = vcmp.ne.s32.totalorder %v1326, 0
    %vm1347 = vcmp.ne.s32.totalorder %v1333, 0
    %vm1348 = vcmp.ne.s32.totalorder %v1340, 0
    %vm1349 = vcmp.lt.s32.totalorder %v1291, 0
    %vm1350 = vcmp.lt.s32.totalorder %v1298, 0
    %vm1351 = vcmp.lt.s32.totalorder %v1305, 0
    %vm1352 = vcmp.lt.s32.totalorder %v1312, 0
    %vm1353 = vcmp.lt.s32.totalorder %v1319, 0
    %vm1354 = vcmp.lt.s32.totalorder %v1326, 0
    %vm1355 = vcmp.lt.s32.totalorder %v1333, 0
    %vm1356 = vcmp.lt.s32.totalorder %v1340, 0
    %vm1357 = vmand %vm1349, %vm1341
    %vm1358 = vmand %vm1350, %vm1342
    %vm1359 = vmand %vm1351, %vm1343
    %vm1360 = vmand %vm1352, %vm1344
    %vm1361 = vmand %vm1353, %vm1345
    %vm1362 = vmand %vm1354, %vm1346
    %vm1363 = vmand %vm1355, %vm1347
    %vm1364 = vmand %vm1356, %vm1348
    %v1365 = vadd.s32 %v1291, 16
    %v1366 = vadd.s32 %v1298, 16
    %v1367 = vadd.s32 %v1305, 16
    %v1368 = vadd.s32 %v1312, 16
    %v1369 = vadd.s32 %v1319, 16
    %v1370 = vadd.s32 %v1326, 16
    %v1371 = vadd.s32 %v1333, 16
    %v1372 = vadd.s32 %v1340, 16
    %v1373 = vsel %vm1357, %v1365, %v1291
    %v1374 = vsel %vm1358, %v1366, %v1298
    %v1375 = vsel %vm1359, %v1367, %v1305
    %v1376 = vsel %vm1360, %v1368, %v1312
    %v1377 = vsel %vm1361, %v1369, %v1319
    %v1378 = vsel %vm1362, %v1370, %v1326
    %v1379 = vsel %vm1363, %v1371, %v1333
    %v1380 = vsel %vm1364, %v1372, %v1340
    %vm1381 = vcmp.eq.s32.totalorder %v1373, %v529
    %vm1382 = vcmp.eq.s32.totalorder %v1374, %v529
    %vm1383 = vcmp.eq.s32.totalorder %v1375, %v529
    %vm1384 = vcmp.eq.s32.totalorder %v1376, %v529
    %vm1385 = vcmp.eq.s32.totalorder %v1377, %v529
    %vm1386 = vcmp.eq.s32.totalorder %v1378, %v529
    %vm1387 = vcmp.eq.s32.totalorder %v1379, %v529
    %vm1388 = vcmp.eq.s32.totalorder %v1380, %v529
    %v1389 = vsel %vm1381, 1, 0
    %v1390 = vsel %vm1382, 1, 0
    %v1391 = vsel %vm1383, 1, 0
    %v1392 = vsel %vm1384, 1, 0
    %v1393 = vsel %vm1385, 1, 0
    %v1394 = vsel %vm1386, 1, 0
    %v1395 = vsel %vm1387, 1, 0
    %v1396 = vsel %vm1388, 1, 0
    %v1397 = vcvt.s32.f32 %v1389
    %v1398 = vcvt.s32.f32 %v1390
    %v1399 = vcvt.s32.f32 %v1391
    %v1400 = vcvt.s32.f32 %v1392
    %v1401 = vcvt.s32.f32 %v1393
    %v1402 = vcvt.s32.f32 %v1394
    %v1403 = vcvt.s32.f32 %v1395
    %v1404 = vcvt.s32.f32 %v1396
    %vm1405 = vcmp.lt.s32.totalorder %v529, 0
    %v1406 = vsub.s32 0, %v529
    %v1407 = vsel %vm1405, %v1406, %v529
    %v1408 = vshrl.u32 %v1407, 4
    %v1409 = vand.u32 %v1407, 15
    %v1410 = vsub.s32 0, %v1409
    %v1411 = vsel %vm1405, %v1410, %v1409
    %vm1412 = vcmp.ne.s32.totalorder %v1411, 0
    %vm1413 = vcmp.lt.s32.totalorder %v1411, 0
    %vm1414 = vmand %vm1413, %vm1412
    %v1415 = vadd.s32 %v1411, 16
    %v1416 = vsel %vm1414, %v1415, %v1411
    %vm1417 = vcmp.eq.s32.totalorder %v1416, %v424
    %vm1418 = vcmp.eq.s32.totalorder %v1416, %v425
    %v1419 = vsel %vm1417, 1, 0
    %v1420 = vsel %vm1418, 1, 0
    %v1421 = vcvt.s32.f32 %v1419
    %v1422 = vcvt.s32.f32 %v1420
    %v1423 = vsel %vm304, %v1280, 0.0
    %v1424 = vrot.slane %v1423, 4
    %v1425 = vadd.f32 %v1423, %v1424
    %v1426 = vrot.slane %v1425, 2
    %v1427 = vadd.f32 %v1425, %v1426
    %v1428 = vrot.slane %v1427, 1
    %v1429 = vadd.f32 %v1427, %v1428
    %v1431 = vsel %vm304, %v1429, 0
    %1433 = vmatprep.subr.mxu0 0.0
    %1434 = vmatpush1.msra.mxu0 %v1397
    %1435 = vmatprep.subr.mxu0 0.0
    %1436 = vmatpush1.msra.mxu0 %v1398
    %1437 = vmatprep.subr.mxu0 0.0
    %1438 = vmatpush1.msra.mxu0 %v1399
    %1439 = vmatprep.subr.mxu0 0.0
    %1440 = vmatpush1.msra.mxu0 %v1400
    %1441 = vmatprep.subr.mxu0 0.0
    %1442 = vmatpush1.msra.mxu0 %v1401
    %1443 = vmatprep.subr.mxu0 0.0
    %1444 = vmatpush1.msra.mxu0 %v1402
    %1445 = vmatprep.subr.mxu0 0.0
    %1446 = vmatpush1.msra.mxu0 %v1403
    %1447 = vmatprep.subr.mxu0 0.0
    %1448 = vmatpush1.msra.mxu0 %v1404
    %1449 = vmatprep.subr.mxu0 0.0
    %1450 = vmatpush1.msra.mxu0 0.0
    %1451 = vmatprep.subr.mxu0 0.0
    %1452 = vmatpush1.msra.mxu0 0.0
    %1453 = vmatprep.subr.mxu0 0.0
    %1454 = vmatpush1.msra.mxu0 0.0
    %1455 = vmatprep.subr.mxu0 0.0
    %1456 = vmatpush1.msra.mxu0 0.0
    %1457 = vmatprep.subr.mxu0 0.0
    %1458 = vmatpush1.msra.mxu0 0.0
    %1459 = vmatprep.subr.mxu0 0.0
    %1460 = vmatpush1.msra.mxu0 0.0
    %1461 = vmatprep.subr.mxu0 0.0
    %1462 = vmatpush1.msra.mxu0 0.0
    %1463 = vmatprep.subr.mxu0 0.0
    %1464 = vmatpush1.msra.mxu0 0.0
    %1465 = vmatprep.subr.mxu0 0.0
    %1466 = vmatpush1.msra.mxu0 0.0
    %1467 = vmatprep.subr.mxu0 0.0
    %1468 = vmatpush1.msra.mxu0 0.0
    %1469 = vmatprep.subr.mxu0 0.0
    %1470 = vmatpush1.msra.mxu0 0.0
    %1471 = vmatprep.subr.mxu0 0.0
    %1472 = vmatpush1.msra.mxu0 0.0
    %1473 = vmatprep.subr.mxu0 0.0
    %1474 = vmatpush1.msra.mxu0 0.0
    %1475 = vmatprep.subr.mxu0 0.0
    %1476 = vmatpush1.msra.mxu0 0.0
    %1477 = vmatprep.subr.mxu0 0.0
    %1478 = vmatpush1.msra.mxu0 0.0
    %1479 = vmatprep.subr.mxu0 0.0
    %1480 = vmatpush1.msra.mxu0 0.0
    %1481 = vmatprep.subr.mxu0 0.0
    %1482 = vmatpush1.msra.mxu0 0.0
    %1483 = vmatprep.subr.mxu0 0.0
    %1484 = vmatpush1.msra.mxu0 0.0
    %1485 = vmatprep.subr.mxu0 0.0
    %1486 = vmatpush1.msra.mxu0 0.0
    %1487 = vmatprep.subr.mxu0 0.0
    %1488 = vmatpush1.msra.mxu0 0.0
    %1489 = vmatprep.subr.mxu0 0.0
    %1490 = vmatpush1.msra.mxu0 0.0
    %1491 = vmatprep.subr.mxu0 0.0
    %1492 = vmatpush1.msra.mxu0 0.0
    %1493 = vmatprep.subr.mxu0 0.0
    %1494 = vmatpush1.msra.mxu0 0.0
    %1495 = vmatprep.subr.mxu0 0.0
    %1496 = vmatpush1.msra.mxu0 0.0
    %1497 = vmatprep.mubr.f32.mxu0 0.0
    %1498 = vmatmul.mubr.f32.gmra.mrb[0].mxu0 %v1431
    %v1499 = vpop.f32.mrb[0].mxu0
    %v1500 = vadd.f32 0.0, %v1499
    %v1501 = vpop.f32.mrb[0].mxu0
    %1502 = vdwg.mxu0
    %v1504 = vsel %vm919, %v1500, 0
    %1506 = vmatprep.subr.mxu0 0.0
    %1507 = vmatpush1.msra.mxu0 %v1421
    %1508 = vmatprep.subr.mxu0 0.0
    %1509 = vmatpush1.msra.mxu0 %v1422
    %1510 = vmatprep.subr.mxu0 0.0
    %1511 = vmatpush1.msra.mxu0 0.0
    %1512 = vmatprep.subr.mxu0 0.0
    %1513 = vmatpush1.msra.mxu0 0.0
    %1514 = vmatprep.subr.mxu0 0.0
    %1515 = vmatpush1.msra.mxu0 0.0
    %1516 = vmatprep.subr.mxu0 0.0
    %1517 = vmatpush1.msra.mxu0 0.0
    %1518 = vmatprep.subr.mxu0 0.0
    %1519 = vmatpush1.msra.mxu0 0.0
    %1520 = vmatprep.subr.mxu0 0.0
    %1521 = vmatpush1.msra.mxu0 0.0
    %1522 = vmatprep.subr.mxu0 0.0
    %1523 = vmatpush1.msra.mxu0 0.0
    %1524 = vmatprep.subr.mxu0 0.0
    %1525 = vmatpush1.msra.mxu0 0.0
    %1526 = vmatprep.subr.mxu0 0.0
    %1527 = vmatpush1.msra.mxu0 0.0
    %1528 = vmatprep.subr.mxu0 0.0
    %1529 = vmatpush1.msra.mxu0 0.0
    %1530 = vmatprep.subr.mxu0 0.0
    %1531 = vmatpush1.msra.mxu0 0.0
    %1532 = vmatprep.subr.mxu0 0.0
    %1533 = vmatpush1.msra.mxu0 0.0
    %1534 = vmatprep.subr.mxu0 0.0
    %1535 = vmatpush1.msra.mxu0 0.0
    %1536 = vmatprep.subr.mxu0 0.0
    %1537 = vmatpush1.msra.mxu0 0.0
    %1538 = vmatprep.subr.mxu0 0.0
    %1539 = vmatpush1.msra.mxu0 0.0
    %1540 = vmatprep.subr.mxu0 0.0
    %1541 = vmatpush1.msra.mxu0 0.0
    %1542 = vmatprep.subr.mxu0 0.0
    %1543 = vmatpush1.msra.mxu0 0.0
    %1544 = vmatprep.subr.mxu0 0.0
    %1545 = vmatpush1.msra.mxu0 0.0
    %1546 = vmatprep.subr.mxu0 0.0
    %1547 = vmatpush1.msra.mxu0 0.0
    %1548 = vmatprep.subr.mxu0 0.0
    %1549 = vmatpush1.msra.mxu0 0.0
    %1550 = vmatprep.subr.mxu0 0.0
    %1551 = vmatpush1.msra.mxu0 0.0
    %1552 = vmatprep.subr.mxu0 0.0
    %1553 = vmatpush1.msra.mxu0 0.0
    %1554 = vmatprep.subr.mxu0 0.0
    %1555 = vmatpush1.msra.mxu0 0.0
    %1556 = vmatprep.subr.mxu0 0.0
    %1557 = vmatpush1.msra.mxu0 0.0
    %1558 = vmatprep.subr.mxu0 0.0
    %1559 = vmatpush1.msra.mxu0 0.0
    %1560 = vmatprep.subr.mxu0 0.0
    %1561 = vmatpush1.msra.mxu0 0.0
    %1562 = vmatprep.subr.mxu0 0.0
    %1563 = vmatpush1.msra.mxu0 0.0
    %1564 = vmatprep.subr.mxu0 0.0
    %1565 = vmatpush1.msra.mxu0 0.0
    %1566 = vmatprep.subr.mxu0 0.0
    %1567 = vmatpush1.msra.mxu0 0.0
    %1568 = vmatprep.subr.mxu0 0.0
    %1569 = vmatpush1.msra.mxu0 0.0
    %1570 = vmatprep.mubr.f32.mxu0 0.0
    %1571 = vmatmul.mubr.f32.gmra.mrb[0].mxu0 %v1504
    %v1572 = vpop.f32.mrb[0].mxu0
    %v1573 = vadd.f32 0.0, %v1572
    %v1574 = vpop.f32.mrb[0].mxu0
    %1575 = vdwg.mxu0
    %v1576 = vmul.f32 %v1573, 0.03125
    %v1577 = vlaneseq
    %v1578 = vshrl.u32 %v1577, 7
    %v1579 = vsub.s32 0, %v1578
    %v1580 = vrot.slane %v1576, %v1579
    %v1581 = vsub.f32 %v1280, %v1580
    %v1582 = vmul.f32 %v1581, %v1581
    %v1583 = vsel %vm304, %v1582, 0.0
    %v1584 = vrot.slane %v1583, 4
    %v1585 = vadd.f32 %v1583, %v1584
    %v1586 = vrot.slane %v1585, 2
    %v1587 = vadd.f32 %v1585, %v1586
    %v1588 = vrot.slane %v1587, 1
    %v1589 = vadd.f32 %v1587, %v1588
    %v1591 = vsel %vm304, %v1589, 0
    %1593 = vmatprep.subr.mxu0 0.0
    %1594 = vmatpush1.msra.mxu0 %v1397
    %1595 = vmatprep.subr.mxu0 0.0
    %1596 = vmatpush1.msra.mxu0 %v1398
    %1597 = vmatprep.subr.mxu0 0.0
    %1598 = vmatpush1.msra.mxu0 %v1399
    %1599 = vmatprep.subr.mxu0 0.0
    %1600 = vmatpush1.msra.mxu0 %v1400
    %1601 = vmatprep.subr.mxu0 0.0
    %1602 = vmatpush1.msra.mxu0 %v1401
    %1603 = vmatprep.subr.mxu0 0.0
    %1604 = vmatpush1.msra.mxu0 %v1402
    %1605 = vmatprep.subr.mxu0 0.0
    %1606 = vmatpush1.msra.mxu0 %v1403
    %1607 = vmatprep.subr.mxu0 0.0
    %1608 = vmatpush1.msra.mxu0 %v1404
    %1609 = vmatprep.subr.mxu0 0.0
    %1610 = vmatpush1.msra.mxu0 0.0
    %1611 = vmatprep.subr.mxu0 0.0
    %1612 = vmatpush1.msra.mxu0 0.0
    %1613 = vmatprep.subr.mxu0 0.0
    %1614 = vmatpush1.msra.mxu0 0.0
    %1615 = vmatprep.subr.mxu0 0.0
    %1616 = vmatpush1.msra.mxu0 0.0
    %1617 = vmatprep.subr.mxu0 0.0
    %1618 = vmatpush1.msra.mxu0 0.0
    %1619 = vmatprep.subr.mxu0 0.0
    %1620 = vmatpush1.msra.mxu0 0.0
    %1621 = vmatprep.subr.mxu0 0.0
    %1622 = vmatpush1.msra.mxu0 0.0
    %1623 = vmatprep.subr.mxu0 0.0
    %1624 = vmatpush1.msra.mxu0 0.0
    %1625 = vmatprep.subr.mxu0 0.0
    %1626 = vmatpush1.msra.mxu0 0.0
    %1627 = vmatprep.subr.mxu0 0.0
    %1628 = vmatpush1.msra.mxu0 0.0
    %1629 = vmatprep.subr.mxu0 0.0
    %1630 = vmatpush1.msra.mxu0 0.0
    %1631 = vmatprep.subr.mxu0 0.0
    %1632 = vmatpush1.msra.mxu0 0.0
    %1633 = vmatprep.subr.mxu0 0.0
    %1634 = vmatpush1.msra.mxu0 0.0
    %1635 = vmatprep.subr.mxu0 0.0
    %1636 = vmatpush1.msra.mxu0 0.0
    %1637 = vmatprep.subr.mxu0 0.0
    %1638 = vmatpush1.msra.mxu0 0.0
    %1639 = vmatprep.subr.mxu0 0.0
    %1640 = vmatpush1.msra.mxu0 0.0
    %1641 = vmatprep.subr.mxu0 0.0
    %1642 = vmatpush1.msra.mxu0 0.0
    %1643 = vmatprep.subr.mxu0 0.0
    %1644 = vmatpush1.msra.mxu0 0.0
    %1645 = vmatprep.subr.mxu0 0.0
    %1646 = vmatpush1.msra.mxu0 0.0
    %1647 = vmatprep.subr.mxu0 0.0
    %1648 = vmatpush1.msra.mxu0 0.0
    %1649 = vmatprep.subr.mxu0 0.0
    %1650 = vmatpush1.msra.mxu0 0.0
    %1651 = vmatprep.subr.mxu0 0.0
    %1652 = vmatpush1.msra.mxu0 0.0
    %1653 = vmatprep.subr.mxu0 0.0
    %1654 = vmatpush1.msra.mxu0 0.0
    %1655 = vmatprep.subr.mxu0 0.0
    %1656 = vmatpush1.msra.mxu0 0.0
    %1657 = vmatprep.mubr.f32.mxu0 0.0
    %1658 = vmatmul.mubr.f32.gmra.mrb[0].mxu0 %v1591
    %v1659 = vpop.f32.mrb[0].mxu0
    %v1660 = vadd.f32 0.0, %v1659
    %v1661 = vpop.f32.mrb[0].mxu0
    %1662 = vdwg.mxu0
    %v1664 = vsel %vm919, %v1660, 0
    %1666 = vmatprep.subr.mxu0 0.0
    %1667 = vmatpush1.msra.mxu0 %v1421
    %1668 = vmatprep.subr.mxu0 0.0
    %1669 = vmatpush1.msra.mxu0 %v1422
    %1670 = vmatprep.subr.mxu0 0.0
    %1671 = vmatpush1.msra.mxu0 0.0
    %1672 = vmatprep.subr.mxu0 0.0
    %1673 = vmatpush1.msra.mxu0 0.0
    %1674 = vmatprep.subr.mxu0 0.0
    %1675 = vmatpush1.msra.mxu0 0.0
    %1676 = vmatprep.subr.mxu0 0.0
    %1677 = vmatpush1.msra.mxu0 0.0
    %1678 = vmatprep.subr.mxu0 0.0
    %1679 = vmatpush1.msra.mxu0 0.0
    %1680 = vmatprep.subr.mxu0 0.0
    %1681 = vmatpush1.msra.mxu0 0.0
    %1682 = vmatprep.subr.mxu0 0.0
    %1683 = vmatpush1.msra.mxu0 0.0
    %1684 = vmatprep.subr.mxu0 0.0
    %1685 = vmatpush1.msra.mxu0 0.0
    %1686 = vmatprep.subr.mxu0 0.0
    %1687 = vmatpush1.msra.mxu0 0.0
    %1688 = vmatprep.subr.mxu0 0.0
    %1689 = vmatpush1.msra.mxu0 0.0
    %1690 = vmatprep.subr.mxu0 0.0
    %1691 = vmatpush1.msra.mxu0 0.0
    %1692 = vmatprep.subr.mxu0 0.0
    %1693 = vmatpush1.msra.mxu0 0.0
    %1694 = vmatprep.subr.mxu0 0.0
    %1695 = vmatpush1.msra.mxu0 0.0
    %1696 = vmatprep.subr.mxu0 0.0
    %1697 = vmatpush1.msra.mxu0 0.0
    %1698 = vmatprep.subr.mxu0 0.0
    %1699 = vmatpush1.msra.mxu0 0.0
    %1700 = vmatprep.subr.mxu0 0.0
    %1701 = vmatpush1.msra.mxu0 0.0
    %1702 = vmatprep.subr.mxu0 0.0
    %1703 = vmatpush1.msra.mxu0 0.0
    %1704 = vmatprep.subr.mxu0 0.0
    %1705 = vmatpush1.msra.mxu0 0.0
    %1706 = vmatprep.subr.mxu0 0.0
    %1707 = vmatpush1.msra.mxu0 0.0
    %1708 = vmatprep.subr.mxu0 0.0
    %1709 = vmatpush1.msra.mxu0 0.0
    %1710 = vmatprep.subr.mxu0 0.0
    %1711 = vmatpush1.msra.mxu0 0.0
    %1712 = vmatprep.subr.mxu0 0.0
    %1713 = vmatpush1.msra.mxu0 0.0
    %1714 = vmatprep.subr.mxu0 0.0
    %1715 = vmatpush1.msra.mxu0 0.0
    %1716 = vmatprep.subr.mxu0 0.0
    %1717 = vmatpush1.msra.mxu0 0.0
    %1718 = vmatprep.subr.mxu0 0.0
    %1719 = vmatpush1.msra.mxu0 0.0
    %1720 = vmatprep.subr.mxu0 0.0
    %1721 = vmatpush1.msra.mxu0 0.0
    %1722 = vmatprep.subr.mxu0 0.0
    %1723 = vmatpush1.msra.mxu0 0.0
    %1724 = vmatprep.subr.mxu0 0.0
    %1725 = vmatpush1.msra.mxu0 0.0
    %1726 = vmatprep.subr.mxu0 0.0
    %1727 = vmatpush1.msra.mxu0 0.0
    %1728 = vmatprep.subr.mxu0 0.0
    %1729 = vmatpush1.msra.mxu0 0.0
    %1730 = vmatprep.mubr.f32.mxu0 0.0
    %1731 = vmatmul.mubr.f32.gmra.mrb[0].mxu0 %v1664
    %v1732 = vpop.f32.mrb[0].mxu0
    %v1733 = vadd.f32 0.0, %v1732
    %v1734 = vpop.f32.mrb[0].mxu0
    %1735 = vdwg.mxu0
    %v1736 = vmul.f32 %v1733, 0.03125
    %v1737 = vld [vmem:[%s9] sm:$0x1]
    %v1738 = vadd.f32 %v1736, 1e-05
    %v1739 = vrsqrt.pop %v1738
    %v1740 = vmul.f32 %v1737, %v1739
    %v1742 = vlaneseq
    %v1743 = vshrl.u32 %v1742, 7
    %v1744 = vsub.s32 0, %v1743
    %v1745 = vrot.slane %v1740, %v1744
    %v1747 = vmul.f32 %v1581, %v1745
    %v1748 = vld [vmem:[%s10] sm:$0x1]
    %v1750 = vlaneseq
    %v1751 = vshrl.u32 %v1750, 7
    %v1752 = vsub.s32 0, %v1751
    %v1753 = vrot.slane %v1748, %v1752
    %v1755 = vadd.f32 %v1747, %v1753
    %vm1756 = vcmp.ge.f32.partialorder %v1755, 0.0
    %v1757 = vmul.f32 %v1755, 0.2
    %v1758 = vsel %vm1756, %v1755, %v1757
    %v1759 = vpack.c.bf16 %v1758, %v1758
    %v1760 = vld [vmem:[%s11] sm:$0xf]
    %v1762 = vsel %vm651, %v1760, 0
    %vm1764 = vcmask 1043456
    %v1766 = vsel %vm1764, %v1759, 0
    %1768 = vmatprep.subr.bf16.mxu0 0
    %1769 = vmatpush1.bf16.msra.mxu0 %v1766
    %1770 = vmatprep.subr.bf16.mxu0 0
    %1771 = vmatpush1.bf16.msra.mxu0 0
    %1772 = vmatprep.subr.bf16.mxu0 0
    %1773 = vmatpush1.bf16.msra.mxu0 0
    %1774 = vmatprep.subr.bf16.mxu0 0
    %1775 = vmatpush1.bf16.msra.mxu0 0
    %1776 = vmatprep.subr.bf16.mxu0 0
    %1777 = vmatpush1.bf16.msra.mxu0 0
    %1778 = vmatprep.subr.bf16.mxu0 0
    %1779 = vmatpush1.bf16.msra.mxu0 0
    %1780 = vmatprep.subr.bf16.mxu0 0
    %1781 = vmatpush1.bf16.msra.mxu0 0
    %1782 = vmatprep.subr.bf16.mxu0 0
    %1783 = vmatpush1.bf16.msra.mxu0 0
    %1784 = vmatprep.subr.bf16.mxu0 0
    %1785 = vmatpush1.bf16.msra.mxu0 0
    %1786 = vmatprep.subr.bf16.mxu0 0
    %1787 = vmatpush1.bf16.msra.mxu0 0
    %1788 = vmatprep.subr.bf16.mxu0 0
    %1789 = vmatpush1.bf16.msra.mxu0 0
    %1790 = vmatprep.subr.bf16.mxu0 0
    %1791 = vmatpush1.bf16.msra.mxu0 0
    %1792 = vmatprep.subr.bf16.mxu0 0
    %1793 = vmatpush1.bf16.msra.mxu0 0
    %1794 = vmatprep.subr.bf16.mxu0 0
    %1795 = vmatpush1.bf16.msra.mxu0 0
    %1796 = vmatprep.subr.bf16.mxu0 0
    %1797 = vmatpush1.bf16.msra.mxu0 0
    %1798 = vmatprep.subr.bf16.mxu0 0
    %1799 = vmatpush1.bf16.msra.mxu0 0
    %1800 = vmatprep.mubr.bf16.mxu0 0
    %1801 = vmatmul.mubr.bf16.gmra.mrb[0].mxu0 %v1762
    %v1802 = vpop.f32.mrb[0].mxu0
    %v1803 = vadd.f32 0.0, %v1802
    %v1804 = vpop.f32.mrb[0].mxu0
    %v1805 = vpop.f32.mrb[0].mxu0
    %v1806 = vpop.f32.mrb[0].mxu0
    %1807 = vdwg.mxu0
    %s1808 = scalar_lea.vmem %s11, 4
    %v1809 = vld [vmem:[%s1808] sm:$0xf]
    %v1811 = vsel %vm651, %v1809, 0
    %1813 = vmatprep.subr.bf16.mxu0 0
    %1814 = vmatpush1.bf16.msra.mxu0 %v1766
    %1815 = vmatprep.subr.bf16.mxu0 0
    %1816 = vmatpush1.bf16.msra.mxu0 0
    %1817 = vmatprep.subr.bf16.mxu0 0
    %1818 = vmatpush1.bf16.msra.mxu0 0
    %1819 = vmatprep.subr.bf16.mxu0 0
    %1820 = vmatpush1.bf16.msra.mxu0 0
    %1821 = vmatprep.subr.bf16.mxu0 0
    %1822 = vmatpush1.bf16.msra.mxu0 0
    %1823 = vmatprep.subr.bf16.mxu0 0
    %1824 = vmatpush1.bf16.msra.mxu0 0
    %1825 = vmatprep.subr.bf16.mxu0 0
    %1826 = vmatpush1.bf16.msra.mxu0 0
    %1827 = vmatprep.subr.bf16.mxu0 0
    %1828 = vmatpush1.bf16.msra.mxu0 0
    %1829 = vmatprep.subr.bf16.mxu0 0
    %1830 = vmatpush1.bf16.msra.mxu0 0
    %1831 = vmatprep.subr.bf16.mxu0 0
    %1832 = vmatpush1.bf16.msra.mxu0 0
    %1833 = vmatprep.subr.bf16.mxu0 0
    %1834 = vmatpush1.bf16.msra.mxu0 0
    %1835 = vmatprep.subr.bf16.mxu0 0
    %1836 = vmatpush1.bf16.msra.mxu0 0
    %1837 = vmatprep.subr.bf16.mxu0 0
    %1838 = vmatpush1.bf16.msra.mxu0 0
    %1839 = vmatprep.subr.bf16.mxu0 0
    %1840 = vmatpush1.bf16.msra.mxu0 0
    %1841 = vmatprep.subr.bf16.mxu0 0
    %1842 = vmatpush1.bf16.msra.mxu0 0
    %1843 = vmatprep.subr.bf16.mxu0 0
    %1844 = vmatpush1.bf16.msra.mxu0 0
    %1845 = vmatprep.mubr.bf16.mxu0 0
    %1846 = vmatmul.mubr.bf16.gmra.mrb[0].mxu0 %v1811
    %v1847 = vpop.f32.mrb[0].mxu0
    %v1848 = vadd.f32 0.0, %v1847
    %v1849 = vpop.f32.mrb[0].mxu0
    %v1850 = vpop.f32.mrb[0].mxu0
    %v1851 = vpop.f32.mrb[0].mxu0
    %1852 = vdwg.mxu0
    %s1853 = scalar_lea.vmem %s11, 8
    %v1854 = vld [vmem:[%s1853] sm:$0xf]
    %v1856 = vsel %vm651, %v1854, 0
    %1858 = vmatprep.subr.bf16.mxu0 0
    %1859 = vmatpush1.bf16.msra.mxu0 %v1766
    %1860 = vmatprep.subr.bf16.mxu0 0
    %1861 = vmatpush1.bf16.msra.mxu0 0
    %1862 = vmatprep.subr.bf16.mxu0 0
    %1863 = vmatpush1.bf16.msra.mxu0 0
    %1864 = vmatprep.subr.bf16.mxu0 0
    %1865 = vmatpush1.bf16.msra.mxu0 0
    %1866 = vmatprep.subr.bf16.mxu0 0
    %1867 = vmatpush1.bf16.msra.mxu0 0
    %1868 = vmatprep.subr.bf16.mxu0 0
    %1869 = vmatpush1.bf16.msra.mxu0 0
    %1870 = vmatprep.subr.bf16.mxu0 0
    %1871 = vmatpush1.bf16.msra.mxu0 0
    %1872 = vmatprep.subr.bf16.mxu0 0
    %1873 = vmatpush1.bf16.msra.mxu0 0
    %1874 = vmatprep.subr.bf16.mxu0 0
    %1875 = vmatpush1.bf16.msra.mxu0 0
    %1876 = vmatprep.subr.bf16.mxu0 0
    %1877 = vmatpush1.bf16.msra.mxu0 0
    %1878 = vmatprep.subr.bf16.mxu0 0
    %1879 = vmatpush1.bf16.msra.mxu0 0
    %1880 = vmatprep.subr.bf16.mxu0 0
    %1881 = vmatpush1.bf16.msra.mxu0 0
    %1882 = vmatprep.subr.bf16.mxu0 0
    %1883 = vmatpush1.bf16.msra.mxu0 0
    %1884 = vmatprep.subr.bf16.mxu0 0
    %1885 = vmatpush1.bf16.msra.mxu0 0
    %1886 = vmatprep.subr.bf16.mxu0 0
    %1887 = vmatpush1.bf16.msra.mxu0 0
    %1888 = vmatprep.subr.bf16.mxu0 0
    %1889 = vmatpush1.bf16.msra.mxu0 0
    %1890 = vmatprep.mubr.bf16.mxu0 0
    %1891 = vmatmul.mubr.bf16.gmra.mrb[0].mxu0 %v1856
    %v1892 = vpop.f32.mrb[0].mxu0
    %v1893 = vadd.f32 0.0, %v1892
    %v1894 = vpop.f32.mrb[0].mxu0
    %v1895 = vpop.f32.mrb[0].mxu0
    %v1896 = vpop.f32.mrb[0].mxu0
    %1897 = vdwg.mxu0
    %1899 = vrot.lane.b32.xlu0 %v1848, 64
    %v1900 = vpop.permute.xlu0 %1899
    %v1902 = vsel %vm304, %v1803, %v1900
    %v1903 = vpack.c.bf16 %v1902, %v1902
    %v1904 = vpack.c.bf16 %v1893, %v1893
    %v1905 = vld [vmem:[%s12] sm:$0xf]
    %v1906 = vld [vmem:[%s12 + $0x4] sm:$0xf]
    %v1907 = vld [vmem:[%s12 + $0x8] sm:$0xf]
    %v1908 = vld [vmem:[%s12 + $0xc] sm:$0xf]
    %v1909 = vld [vmem:[%s12 + $0x10] sm:$0xf]
    %v1910 = vld [vmem:[%s12 + $0x14] sm:$0xf]
    %v1911 = vld [vmem:[%s12 + $0x18] sm:$0xf]
    %v1912 = vld [vmem:[%s12 + $0x1c] sm:$0xf]
    %v1913 = vld [vmem:[%s12 + $0x20] sm:$0xf]
    %v1914 = vld [vmem:[%s12 + $0x24] sm:$0xf]
    %v1915 = vld [vmem:[%s12 + $0x28] sm:$0xf]
    %v1916 = vld [vmem:[%s12 + $0x2c] sm:$0xf]
    %v1917 = vld [vmem:[%s12 + $0x30] sm:$0xf]
    %v1918 = vld [vmem:[%s12 + $0x34] sm:$0xf]
    %v1919 = vld [vmem:[%s12 + $0x38] sm:$0xf]
    %v1920 = vld [vmem:[%s12 + $0x3c] sm:$0xf]
    %v1921 = vld [vmem:[%s12 + $0x40] sm:$0xf]
    %v1922 = vld [vmem:[%s12 + $0x44] sm:$0xf]
    %v1923 = vld [vmem:[%s12 + $0x48] sm:$0xf]
    %v1924 = vld [vmem:[%s12 + $0x4c] sm:$0xf]
    %v1925 = vld [vmem:[%s12 + $0x50] sm:$0xf]
    %v1926 = vld [vmem:[%s12 + $0x54] sm:$0xf]
    %v1927 = vld [vmem:[%s12 + $0x58] sm:$0xf]
    %v1928 = vld [vmem:[%s12 + $0x5c] sm:$0xf]
    %v1929 = vld [vmem:[%s13] sm:$0x1]
    %v1931 = vlaneseq
    %v1932 = vshrl.u32 %v1931, 7
    %v1933 = vsub.s32 0, %v1932
    %v1934 = vrot.slane %v1929, %v1933
    %v1960 = vunpack.c.l.b16 %v1905
    %v1961 = vunpack.c.l.b16 %v1906
    %v1962 = vunpack.c.l.b16 %v1907
    %v1963 = vunpack.c.l.b16 %v1908
    %v1964 = vunpack.c.l.b16 %v1909
    %v1965 = vunpack.c.l.b16 %v1910
    %v1966 = vunpack.c.l.b16 %v1911
    %v1967 = vunpack.c.l.b16 %v1912
    %v1968 = vunpack.c.l.b16 %v1913
    %v1969 = vunpack.c.l.b16 %v1914
    %v1970 = vunpack.c.l.b16 %v1915
    %v1971 = vunpack.c.l.b16 %v1916
    %v1972 = vunpack.c.l.b16 %v1917
    %v1973 = vunpack.c.l.b16 %v1918
    %v1974 = vunpack.c.l.b16 %v1919
    %v1975 = vunpack.c.l.b16 %v1920
    %v1976 = vunpack.c.l.b16 %v1921
    %v1977 = vunpack.c.l.b16 %v1922
    %v1978 = vunpack.c.l.b16 %v1923
    %v1979 = vunpack.c.l.b16 %v1924
    %v1980 = vunpack.c.l.b16 %v1925
    %v1981 = vunpack.c.l.b16 %v1926
    %v1982 = vunpack.c.l.b16 %v1927
    %v1983 = vunpack.c.l.b16 %v1928
    %v1984 = vpack.c.b16 %v1961, %v1960
    %v1985 = vpack.c.b16 %v1963, %v1962
    %v1986 = vpack.c.b16 %v1965, %v1964
    %v1987 = vpack.c.b16 %v1967, %v1966
    %v1988 = vpack.c.b16 %v1969, %v1968
    %v1989 = vpack.c.b16 %v1971, %v1970
    %v1990 = vpack.c.b16 %v1973, %v1972
    %v1991 = vpack.c.b16 %v1975, %v1974
    %v1992 = vpack.c.b16 %v1977, %v1976
    %v1993 = vpack.c.b16 %v1979, %v1978
    %v1994 = vpack.c.b16 %v1981, %v1980
    %v1995 = vpack.c.b16 %v1983, %v1982
    %v2009 = vsel %vm304, %v1904, 0
    %2011 = vmatprep.subr.bf16.mxu0 0
    %2012 = vmatpush1.bf16.msra.mxu0 %v1984
    %2013 = vmatprep.subr.bf16.mxu0 0
    %2014 = vmatpush1.bf16.msra.mxu0 %v1985
    %2015 = vmatprep.subr.bf16.mxu0 0
    %2016 = vmatpush1.bf16.msra.mxu0 %v1986
    %2017 = vmatprep.subr.bf16.mxu0 0
    %2018 = vmatpush1.bf16.msra.mxu0 %v1987
    %2019 = vmatprep.subr.bf16.mxu0 0
    %2020 = vmatpush1.bf16.msra.mxu0 %v1988
    %2021 = vmatprep.subr.bf16.mxu0 0
    %2022 = vmatpush1.bf16.msra.mxu0 %v1989
    %2023 = vmatprep.subr.bf16.mxu0 0
    %2024 = vmatpush1.bf16.msra.mxu0 %v1990
    %2025 = vmatprep.subr.bf16.mxu0 0
    %2026 = vmatpush1.bf16.msra.mxu0 %v1991
    %2027 = vmatprep.subr.bf16.mxu0 0
    %2028 = vmatpush1.bf16.msra.mxu0 %v1992
    %2029 = vmatprep.subr.bf16.mxu0 0
    %2030 = vmatpush1.bf16.msra.mxu0 %v1993
    %2031 = vmatprep.subr.bf16.mxu0 0
    %2032 = vmatpush1.bf16.msra.mxu0 %v1994
    %2033 = vmatprep.subr.bf16.mxu0 0
    %2034 = vmatpush1.bf16.msra.mxu0 %v1995
    %2035 = vmatprep.subr.bf16.mxu0 0
    %2036 = vmatpush1.bf16.msra.mxu0 0
    %2037 = vmatprep.subr.bf16.mxu0 0
    %2038 = vmatpush1.bf16.msra.mxu0 0
    %2039 = vmatprep.subr.bf16.mxu0 0
    %2040 = vmatpush1.bf16.msra.mxu0 0
    %2041 = vmatprep.subr.bf16.mxu0 0
    %2042 = vmatpush1.bf16.msra.mxu0 0
    %2043 = vmatprep.mubr.bf16.mxu0 %v2009
    %2044 = vmatmul.mubr.bf16.gmra.mrb[0].mxu0 %v1903
    %v2045 = vpop.f32.mrb[0].mxu0
    %v2046 = vadd.f32 %v1934, %v2045
    %v2047 = vpop.f32.mrb[0].mxu0
    %v2048 = vpop.f32.mrb[0].mxu0
    %v2049 = vpop.f32.mrb[0].mxu0
    %2050 = vdwg.mxu0
    %v2051 = vpack.c.bf16 %v2046, %v2046
    %v2052 = vld [vmem:[%s14] sm:$0x3]
    %v2054 = vsel %vm651, %v2052, 0
    %v2057 = vsel %vm1764, %v2051, 0
    %2059 = vmatprep.subr.bf16.mxu0 0
    %2060 = vmatpush1.bf16.msra.mxu0 %v2057
    %2061 = vmatprep.subr.bf16.mxu0 0
    %2062 = vmatpush1.bf16.msra.mxu0 0
    %2063 = vmatprep.subr.bf16.mxu0 0
    %2064 = vmatpush1.bf16.msra.mxu0 0
    %2065 = vmatprep.subr.bf16.mxu0 0
    %2066 = vmatpush1.bf16.msra.mxu0 0
    %2067 = vmatprep.subr.bf16.mxu0 0
    %2068 = vmatpush1.bf16.msra.mxu0 0
    %2069 = vmatprep.subr.bf16.mxu0 0
    %2070 = vmatpush1.bf16.msra.mxu0 0
    %2071 = vmatprep.subr.bf16.mxu0 0
    %2072 = vmatpush1.bf16.msra.mxu0 0
    %2073 = vmatprep.subr.bf16.mxu0 0
    %2074 = vmatpush1.bf16.msra.mxu0 0
    %2075 = vmatprep.subr.bf16.mxu0 0
    %2076 = vmatpush1.bf16.msra.mxu0 0
    %2077 = vmatprep.subr.bf16.mxu0 0
    %2078 = vmatpush1.bf16.msra.mxu0 0
    %2079 = vmatprep.subr.bf16.mxu0 0
    %2080 = vmatpush1.bf16.msra.mxu0 0
    %2081 = vmatprep.subr.bf16.mxu0 0
    %2082 = vmatpush1.bf16.msra.mxu0 0
    %2083 = vmatprep.subr.bf16.mxu0 0
    %2084 = vmatpush1.bf16.msra.mxu0 0
    %2085 = vmatprep.subr.bf16.mxu0 0
    %2086 = vmatpush1.bf16.msra.mxu0 0
    %2087 = vmatprep.subr.bf16.mxu0 0
    %2088 = vmatpush1.bf16.msra.mxu0 0
    %2089 = vmatprep.subr.bf16.mxu0 0
    %2090 = vmatpush1.bf16.msra.mxu0 0
    %2091 = vmatprep.mubr.bf16.mxu0 0
    %2092 = vmatmul.mubr.bf16.gmra.mrb[0].mxu0 %v2054
    %v2093 = vpop.f32.mrb[0].mxu0
    %v2094 = vadd.f32 0.0, %v2093
    %v2095 = vpop.f32.mrb[0].mxu0
    %v2096 = vpop.f32.mrb[0].mxu0
    %v2097 = vpop.f32.mrb[0].mxu0
    %2098 = vdwg.mxu0
    %s2099 = scalar_lea.vmem %s14, 2
    %v2100 = vld [vmem:[%s2099] sm:$0x3]
    %v2102 = vsel %vm651, %v2100, 0
    %2104 = vmatprep.subr.bf16.mxu0 0
    %2105 = vmatpush1.bf16.msra.mxu0 %v2057
    %2106 = vmatprep.subr.bf16.mxu0 0
    %2107 = vmatpush1.bf16.msra.mxu0 0
    %2108 = vmatprep.subr.bf16.mxu0 0
    %2109 = vmatpush1.bf16.msra.mxu0 0
    %2110 = vmatprep.subr.bf16.mxu0 0
    %2111 = vmatpush1.bf16.msra.mxu0 0
    %2112 = vmatprep.subr.bf16.mxu0 0
    %2113 = vmatpush1.bf16.msra.mxu0 0
    %2114 = vmatprep.subr.bf16.mxu0 0
    %2115 = vmatpush1.bf16.msra.mxu0 0
    %2116 = vmatprep.subr.bf16.mxu0 0
    %2117 = vmatpush1.bf16.msra.mxu0 0
    %2118 = vmatprep.subr.bf16.mxu0 0
    %2119 = vmatpush1.bf16.msra.mxu0 0
    %2120 = vmatprep.subr.bf16.mxu0 0
    %2121 = vmatpush1.bf16.msra.mxu0 0
    %2122 = vmatprep.subr.bf16.mxu0 0
    %2123 = vmatpush1.bf16.msra.mxu0 0
    %2124 = vmatprep.subr.bf16.mxu0 0
    %2125 = vmatpush1.bf16.msra.mxu0 0
    %2126 = vmatprep.subr.bf16.mxu0 0
    %2127 = vmatpush1.bf16.msra.mxu0 0
    %2128 = vmatprep.subr.bf16.mxu0 0
    %2129 = vmatpush1.bf16.msra.mxu0 0
    %2130 = vmatprep.subr.bf16.mxu0 0
    %2131 = vmatpush1.bf16.msra.mxu0 0
    %2132 = vmatprep.subr.bf16.mxu0 0
    %2133 = vmatpush1.bf16.msra.mxu0 0
    %2134 = vmatprep.subr.bf16.mxu0 0
    %2135 = vmatpush1.bf16.msra.mxu0 0
    %2136 = vmatprep.mubr.bf16.mxu0 0
    %2137 = vmatmul.mubr.bf16.gmra.mrb[0].mxu0 %v2102
    %v2138 = vpop.f32.mrb[0].mxu0
    %v2139 = vadd.f32 0.0, %v2138
    %v2140 = vpop.f32.mrb[0].mxu0
    %v2141 = vpop.f32.mrb[0].mxu0
    %v2142 = vpop.f32.mrb[0].mxu0
    %2143 = vdwg.mxu0
    %s2144 = scalar_lea.vmem %s14, 4
    %v2145 = vld [vmem:[%s2144] sm:$0x3]
    %v2147 = vsel %vm651, %v2145, 0
    %2149 = vmatprep.subr.bf16.mxu0 0
    %2150 = vmatpush1.bf16.msra.mxu0 %v2057
    %2151 = vmatprep.subr.bf16.mxu0 0
    %2152 = vmatpush1.bf16.msra.mxu0 0
    %2153 = vmatprep.subr.bf16.mxu0 0
    %2154 = vmatpush1.bf16.msra.mxu0 0
    %2155 = vmatprep.subr.bf16.mxu0 0
    %2156 = vmatpush1.bf16.msra.mxu0 0
    %2157 = vmatprep.subr.bf16.mxu0 0
    %2158 = vmatpush1.bf16.msra.mxu0 0
    %2159 = vmatprep.subr.bf16.mxu0 0
    %2160 = vmatpush1.bf16.msra.mxu0 0
    %2161 = vmatprep.subr.bf16.mxu0 0
    %2162 = vmatpush1.bf16.msra.mxu0 0
    %2163 = vmatprep.subr.bf16.mxu0 0
    %2164 = vmatpush1.bf16.msra.mxu0 0
    %2165 = vmatprep.subr.bf16.mxu0 0
    %2166 = vmatpush1.bf16.msra.mxu0 0
    %2167 = vmatprep.subr.bf16.mxu0 0
    %2168 = vmatpush1.bf16.msra.mxu0 0
    %2169 = vmatprep.subr.bf16.mxu0 0
    %2170 = vmatpush1.bf16.msra.mxu0 0
    %2171 = vmatprep.subr.bf16.mxu0 0
    %2172 = vmatpush1.bf16.msra.mxu0 0
    %2173 = vmatprep.subr.bf16.mxu0 0
    %2174 = vmatpush1.bf16.msra.mxu0 0
    %2175 = vmatprep.subr.bf16.mxu0 0
    %2176 = vmatpush1.bf16.msra.mxu0 0
    %2177 = vmatprep.subr.bf16.mxu0 0
    %2178 = vmatpush1.bf16.msra.mxu0 0
    %2179 = vmatprep.subr.bf16.mxu0 0
    %2180 = vmatpush1.bf16.msra.mxu0 0
    %2181 = vmatprep.mubr.bf16.mxu0 0
    %2182 = vmatmul.mubr.bf16.gmra.mrb[0].mxu0 %v2147
    %v2183 = vpop.f32.mrb[0].mxu0
    %v2184 = vadd.f32 0.0, %v2183
    %v2185 = vpop.f32.mrb[0].mxu0
    %v2186 = vpop.f32.mrb[0].mxu0
    %v2187 = vpop.f32.mrb[0].mxu0
    %2188 = vdwg.mxu0
    %s2189 = scalar_lea.vmem %s14, 6
    %v2190 = vld [vmem:[%s2189] sm:$0x3]
    %v2192 = vsel %vm651, %v2190, 0
    %2194 = vmatprep.subr.bf16.mxu0 0
    %2195 = vmatpush1.bf16.msra.mxu0 %v2057
    %2196 = vmatprep.subr.bf16.mxu0 0
    %2197 = vmatpush1.bf16.msra.mxu0 0
    %2198 = vmatprep.subr.bf16.mxu0 0
    %2199 = vmatpush1.bf16.msra.mxu0 0
    %2200 = vmatprep.subr.bf16.mxu0 0
    %2201 = vmatpush1.bf16.msra.mxu0 0
    %2202 = vmatprep.subr.bf16.mxu0 0
    %2203 = vmatpush1.bf16.msra.mxu0 0
    %2204 = vmatprep.subr.bf16.mxu0 0
    %2205 = vmatpush1.bf16.msra.mxu0 0
    %2206 = vmatprep.subr.bf16.mxu0 0
    %2207 = vmatpush1.bf16.msra.mxu0 0
    %2208 = vmatprep.subr.bf16.mxu0 0
    %2209 = vmatpush1.bf16.msra.mxu0 0
    %2210 = vmatprep.subr.bf16.mxu0 0
    %2211 = vmatpush1.bf16.msra.mxu0 0
    %2212 = vmatprep.subr.bf16.mxu0 0
    %2213 = vmatpush1.bf16.msra.mxu0 0
    %2214 = vmatprep.subr.bf16.mxu0 0
    %2215 = vmatpush1.bf16.msra.mxu0 0
    %2216 = vmatprep.subr.bf16.mxu0 0
    %2217 = vmatpush1.bf16.msra.mxu0 0
    %2218 = vmatprep.subr.bf16.mxu0 0
    %2219 = vmatpush1.bf16.msra.mxu0 0
    %2220 = vmatprep.subr.bf16.mxu0 0
    %2221 = vmatpush1.bf16.msra.mxu0 0
    %2222 = vmatprep.subr.bf16.mxu0 0
    %2223 = vmatpush1.bf16.msra.mxu0 0
    %2224 = vmatprep.subr.bf16.mxu0 0
    %2225 = vmatpush1.bf16.msra.mxu0 0
    %2226 = vmatprep.mubr.bf16.mxu0 0
    %2227 = vmatmul.mubr.bf16.gmra.mrb[0].mxu0 %v2192
    %v2228 = vpop.f32.mrb[0].mxu0
    %v2229 = vadd.f32 0.0, %v2228
    %v2230 = vpop.f32.mrb[0].mxu0
    %v2231 = vpop.f32.mrb[0].mxu0
    %v2232 = vpop.f32.mrb[0].mxu0
    %2233 = vdwg.mxu0
    %2235 = vrot.lane.b32.xlu0 %v2139, 64
    %v2236 = vpop.permute.xlu0 %2235
    %2239 = vrot.lane.b32.xlu0 %v2229, 64
    %v2240 = vpop.permute.xlu0 %2239
    %v2242 = vsel %vm304, %v2094, %v2236
    %v2243 = vsel %vm304, %v2184, %v2240
    %v2244 = vpack.c.bf16 %v2242, %v2242
    %v2245 = vpack.c.bf16 %v2243, %v2243
    %v2246 = vld [vmem:[%s15] sm:$0xf]
    %v2247 = vld [vmem:[%s15 + $0x4] sm:$0xf]
    %v2248 = vld [vmem:[%s15 + $0x8] sm:$0xf]
    %v2249 = vld [vmem:[%s15 + $0xc] sm:$0xf]
    %v2250 = vld [vmem:[%s15 + $0x10] sm:$0xf]
    %v2251 = vld [vmem:[%s15 + $0x14] sm:$0xf]
    %v2252 = vld [vmem:[%s15 + $0x18] sm:$0xf]
    %v2253 = vld [vmem:[%s15 + $0x1c] sm:$0xf]
    %v2254 = vld [vmem:[%s15 + $0x20] sm:$0xf]
    %v2255 = vld [vmem:[%s15 + $0x24] sm:$0xf]
    %v2256 = vld [vmem:[%s15 + $0x28] sm:$0xf]
    %v2257 = vld [vmem:[%s15 + $0x2c] sm:$0xf]
    %v2258 = vld [vmem:[%s15 + $0x30] sm:$0xf]
    %v2259 = vld [vmem:[%s15 + $0x34] sm:$0xf]
    %v2260 = vld [vmem:[%s15 + $0x38] sm:$0xf]
    %v2261 = vld [vmem:[%s15 + $0x3c] sm:$0xf]
    %v2262 = vld [vmem:[%s15 + $0x40] sm:$0xf]
    %v2263 = vld [vmem:[%s15 + $0x44] sm:$0xf]
    %v2264 = vld [vmem:[%s15 + $0x48] sm:$0xf]
    %v2265 = vld [vmem:[%s15 + $0x4c] sm:$0xf]
    %v2266 = vld [vmem:[%s15 + $0x50] sm:$0xf]
    %v2267 = vld [vmem:[%s15 + $0x54] sm:$0xf]
    %v2268 = vld [vmem:[%s15 + $0x58] sm:$0xf]
    %v2269 = vld [vmem:[%s15 + $0x5c] sm:$0xf]
    %v2270 = vld [vmem:[%s15 + $0x60] sm:$0xf]
    %v2271 = vld [vmem:[%s15 + $0x64] sm:$0xf]
    %v2272 = vld [vmem:[%s15 + $0x68] sm:$0xf]
    %v2273 = vld [vmem:[%s15 + $0x6c] sm:$0xf]
    %v2274 = vld [vmem:[%s15 + $0x70] sm:$0xf]
    %v2275 = vld [vmem:[%s15 + $0x74] sm:$0xf]
    %v2276 = vld [vmem:[%s15 + $0x78] sm:$0xf]
    %v2277 = vld [vmem:[%s15 + $0x7c] sm:$0xf]
    %v2278 = vld [vmem:[%s16] sm:$0x1]
    %v2280 = vlaneseq
    %v2281 = vshrl.u32 %v2280, 7
    %v2282 = vsub.s32 0, %v2281
    %v2283 = vrot.slane %v2278, %v2282
    %v2317 = vunpack.c.l.b16 %v2246
    %v2318 = vunpack.c.l.b16 %v2247
    %v2319 = vunpack.c.l.b16 %v2248
    %v2320 = vunpack.c.l.b16 %v2249
    %v2321 = vunpack.c.l.b16 %v2250
    %v2322 = vunpack.c.l.b16 %v2251
    %v2323 = vunpack.c.l.b16 %v2252
    %v2324 = vunpack.c.l.b16 %v2253
    %v2325 = vunpack.c.l.b16 %v2254
    %v2326 = vunpack.c.l.b16 %v2255
    %v2327 = vunpack.c.l.b16 %v2256
    %v2328 = vunpack.c.l.b16 %v2257
    %v2329 = vunpack.c.l.b16 %v2258
    %v2330 = vunpack.c.l.b16 %v2259
    %v2331 = vunpack.c.l.b16 %v2260
    %v2332 = vunpack.c.l.b16 %v2261
    %v2333 = vunpack.c.l.b16 %v2262
    %v2334 = vunpack.c.l.b16 %v2263
    %v2335 = vunpack.c.l.b16 %v2264
    %v2336 = vunpack.c.l.b16 %v2265
    %v2337 = vunpack.c.l.b16 %v2266
    %v2338 = vunpack.c.l.b16 %v2267
    %v2339 = vunpack.c.l.b16 %v2268
    %v2340 = vunpack.c.l.b16 %v2269
    %v2341 = vunpack.c.l.b16 %v2270
    %v2342 = vunpack.c.l.b16 %v2271
    %v2343 = vunpack.c.l.b16 %v2272
    %v2344 = vunpack.c.l.b16 %v2273
    %v2345 = vunpack.c.l.b16 %v2274
    %v2346 = vunpack.c.l.b16 %v2275
    %v2347 = vunpack.c.l.b16 %v2276
    %v2348 = vunpack.c.l.b16 %v2277
    %v2349 = vpack.c.b16 %v2318, %v2317
    %v2350 = vpack.c.b16 %v2320, %v2319
    %v2351 = vpack.c.b16 %v2322, %v2321
    %v2352 = vpack.c.b16 %v2324, %v2323
    %v2353 = vpack.c.b16 %v2326, %v2325
    %v2354 = vpack.c.b16 %v2328, %v2327
    %v2355 = vpack.c.b16 %v2330, %v2329
    %v2356 = vpack.c.b16 %v2332, %v2331
    %v2357 = vpack.c.b16 %v2334, %v2333
    %v2358 = vpack.c.b16 %v2336, %v2335
    %v2359 = vpack.c.b16 %v2338, %v2337
    %v2360 = vpack.c.b16 %v2340, %v2339
    %v2361 = vpack.c.b16 %v2342, %v2341
    %v2362 = vpack.c.b16 %v2344, %v2343
    %v2363 = vpack.c.b16 %v2346, %v2345
    %v2364 = vpack.c.b16 %v2348, %v2347
    %2381 = vmatprep.subr.bf16.mxu0 0
    %2382 = vmatpush1.bf16.msra.mxu0 %v2349
    %2383 = vmatprep.subr.bf16.mxu0 0
    %2384 = vmatpush1.bf16.msra.mxu0 %v2350
    %2385 = vmatprep.subr.bf16.mxu0 0
    %2386 = vmatpush1.bf16.msra.mxu0 %v2351
    %2387 = vmatprep.subr.bf16.mxu0 0
    %2388 = vmatpush1.bf16.msra.mxu0 %v2352
    %2389 = vmatprep.subr.bf16.mxu0 0
    %2390 = vmatpush1.bf16.msra.mxu0 %v2353
    %2391 = vmatprep.subr.bf16.mxu0 0
    %2392 = vmatpush1.bf16.msra.mxu0 %v2354
    %2393 = vmatprep.subr.bf16.mxu0 0
    %2394 = vmatpush1.bf16.msra.mxu0 %v2355
    %2395 = vmatprep.subr.bf16.mxu0 0
    %2396 = vmatpush1.bf16.msra.mxu0 %v2356
    %2397 = vmatprep.subr.bf16.mxu0 0
    %2398 = vmatpush1.bf16.msra.mxu0 %v2357
    %2399 = vmatprep.subr.bf16.mxu0 0
    %2400 = vmatpush1.bf16.msra.mxu0 %v2358
    %2401 = vmatprep.subr.bf16.mxu0 0
    %2402 = vmatpush1.bf16.msra.mxu0 %v2359
    %2403 = vmatprep.subr.bf16.mxu0 0
    %2404 = vmatpush1.bf16.msra.mxu0 %v2360
    %2405 = vmatprep.subr.bf16.mxu0 0
    %2406 = vmatpush1.bf16.msra.mxu0 %v2361
    %2407 = vmatprep.subr.bf16.mxu0 0
    %2408 = vmatpush1.bf16.msra.mxu0 %v2362
    %2409 = vmatprep.subr.bf16.mxu0 0
    %2410 = vmatpush1.bf16.msra.mxu0 %v2363
    %2411 = vmatprep.subr.bf16.mxu0 0
    %2412 = vmatpush1.bf16.msra.mxu0 %v2364
    %2413 = vmatprep.mubr.bf16.mxu0 %v2245
    %2414 = vmatmul.mubr.bf16.gmra.mrb[0].mxu0 %v2244
    %v2415 = vpop.f32.mrb[0].mxu0
    %v2416 = vadd.f32 %v2283, %v2415
    %v2417 = vpop.f32.mrb[0].mxu0
    %v2418 = vpop.f32.mrb[0].mxu0
    %v2419 = vpop.f32.mrb[0].mxu0
    %2420 = vdwg.mxu0
    %vm2421 = vcmask 257024
    %v2422 = vsel %vm2421, %v2416, 0.0
    %v2423 = vrot.slane %v2422, 4
    %v2424 = vadd.f32 %v2422, %v2423
    %v2425 = vrot.slane %v2424, 2
    %v2426 = vadd.f32 %v2424, %v2425
    %v2427 = vrot.slane %v2426, 1
    %v2428 = vadd.f32 %v2426, %v2427
    %v2430 = vsel %vm77, %v2428, 0
    %2432 = vmatprep.subr.mxu0 0.0
    %2433 = vmatpush1.msra.mxu0 %v1397
    %2434 = vmatprep.subr.mxu0 0.0
    %2435 = vmatpush1.msra.mxu0 %v1398
    %2436 = vmatprep.subr.mxu0 0.0
    %2437 = vmatpush1.msra.mxu0 %v1399
    %2438 = vmatprep.subr.mxu0 0.0
    %2439 = vmatpush1.msra.mxu0 %v1400
    %2440 = vmatprep.subr.mxu0 0.0
    %2441 = vmatpush1.msra.mxu0 0.0
    %2442 = vmatprep.subr.mxu0 0.0
    %2443 = vmatpush1.msra.mxu0 0.0
    %2444 = vmatprep.subr.mxu0 0.0
    %2445 = vmatpush1.msra.mxu0 0.0
    %2446 = vmatprep.subr.mxu0 0.0
    %2447 = vmatpush1.msra.mxu0 0.0
    %2448 = vmatprep.subr.mxu0 0.0
    %2449 = vmatpush1.msra.mxu0 0.0
    %2450 = vmatprep.subr.mxu0 0.0
    %2451 = vmatpush1.msra.mxu0 0.0
    %2452 = vmatprep.subr.mxu0 0.0
    %2453 = vmatpush1.msra.mxu0 0.0
    %2454 = vmatprep.subr.mxu0 0.0
    %2455 = vmatpush1.msra.mxu0 0.0
    %2456 = vmatprep.subr.mxu0 0.0
    %2457 = vmatpush1.msra.mxu0 0.0
    %2458 = vmatprep.subr.mxu0 0.0
    %2459 = vmatpush1.msra.mxu0 0.0
    %2460 = vmatprep.subr.mxu0 0.0
    %2461 = vmatpush1.msra.mxu0 0.0
    %2462 = vmatprep.subr.mxu0 0.0
    %2463 = vmatpush1.msra.mxu0 0.0
    %2464 = vmatprep.subr.mxu0 0.0
    %2465 = vmatpush1.msra.mxu0 0.0
    %2466 = vmatprep.subr.mxu0 0.0
    %2467 = vmatpush1.msra.mxu0 0.0
    %2468 = vmatprep.subr.mxu0 0.0
    %2469 = vmatpush1.msra.mxu0 0.0
    %2470 = vmatprep.subr.mxu0 0.0
    %2471 = vmatpush1.msra.mxu0 0.0
    %2472 = vmatprep.subr.mxu0 0.0
    %2473 = vmatpush1.msra.mxu0 0.0
    %2474 = vmatprep.subr.mxu0 0.0
    %2475 = vmatpush1.msra.mxu0 0.0
    %2476 = vmatprep.subr.mxu0 0.0
    %2477 = vmatpush1.msra.mxu0 0.0
    %2478 = vmatprep.subr.mxu0 0.0
    %2479 = vmatpush1.msra.mxu0 0.0
    %2480 = vmatprep.subr.mxu0 0.0
    %2481 = vmatpush1.msra.mxu0 0.0
    %2482 = vmatprep.subr.mxu0 0.0
    %2483 = vmatpush1.msra.mxu0 0.0
    %2484 = vmatprep.subr.mxu0 0.0
    %2485 = vmatpush1.msra.mxu0 0.0
    %2486 = vmatprep.subr.mxu0 0.0
    %2487 = vmatpush1.msra.mxu0 0.0
    %2488 = vmatprep.subr.mxu0 0.0
    %2489 = vmatpush1.msra.mxu0 0.0
    %2490 = vmatprep.subr.mxu0 0.0
    %2491 = vmatpush1.msra.mxu0 0.0
    %2492 = vmatprep.subr.mxu0 0.0
    %2493 = vmatpush1.msra.mxu0 0.0
    %2494 = vmatprep.subr.mxu0 0.0
    %2495 = vmatpush1.msra.mxu0 0.0
    %2496 = vmatprep.mubr.f32.mxu0 0.0
    %2497 = vmatmul.mubr.f32.gmra.mrb[0].mxu0 %v2430
    %v2498 = vpop.f32.mrb[0].mxu0
    %v2499 = vadd.f32 0.0, %v2498
    %v2500 = vpop.f32.mrb[0].mxu0
    %2501 = vdwg.mxu0
    %v2503 = vsel %vm919, %v2499, 0
    %2505 = vmatprep.subr.mxu0 0.0
    %2506 = vmatpush1.msra.mxu0 %v1421
    %2507 = vmatprep.subr.mxu0 0.0
    %2508 = vmatpush1.msra.mxu0 %v1422
    %2509 = vmatprep.subr.mxu0 0.0
    %2510 = vmatpush1.msra.mxu0 0.0
    %2511 = vmatprep.subr.mxu0 0.0
    %2512 = vmatpush1.msra.mxu0 0.0
    %2513 = vmatprep.subr.mxu0 0.0
    %2514 = vmatpush1.msra.mxu0 0.0
    %2515 = vmatprep.subr.mxu0 0.0
    %2516 = vmatpush1.msra.mxu0 0.0
    %2517 = vmatprep.subr.mxu0 0.0
    %2518 = vmatpush1.msra.mxu0 0.0
    %2519 = vmatprep.subr.mxu0 0.0
    %2520 = vmatpush1.msra.mxu0 0.0
    %2521 = vmatprep.subr.mxu0 0.0
    %2522 = vmatpush1.msra.mxu0 0.0
    %2523 = vmatprep.subr.mxu0 0.0
    %2524 = vmatpush1.msra.mxu0 0.0
    %2525 = vmatprep.subr.mxu0 0.0
    %2526 = vmatpush1.msra.mxu0 0.0
    %2527 = vmatprep.subr.mxu0 0.0
    %2528 = vmatpush1.msra.mxu0 0.0
    %2529 = vmatprep.subr.mxu0 0.0
    %2530 = vmatpush1.msra.mxu0 0.0
    %2531 = vmatprep.subr.mxu0 0.0
    %2532 = vmatpush1.msra.mxu0 0.0
    %2533 = vmatprep.subr.mxu0 0.0
    %2534 = vmatpush1.msra.mxu0 0.0
    %2535 = vmatprep.subr.mxu0 0.0
    %2536 = vmatpush1.msra.mxu0 0.0
    %2537 = vmatprep.subr.mxu0 0.0
    %2538 = vmatpush1.msra.mxu0 0.0
    %2539 = vmatprep.subr.mxu0 0.0
    %2540 = vmatpush1.msra.mxu0 0.0
    %2541 = vmatprep.subr.mxu0 0.0
    %2542 = vmatpush1.msra.mxu0 0.0
    %2543 = vmatprep.subr.mxu0 0.0
    %2544 = vmatpush1.msra.mxu0 0.0
    %2545 = vmatprep.subr.mxu0 0.0
    %2546 = vmatpush1.msra.mxu0 0.0
    %2547 = vmatprep.subr.mxu0 0.0
    %2548 = vmatpush1.msra.mxu0 0.0
    %2549 = vmatprep.subr.mxu0 0.0
    %2550 = vmatpush1.msra.mxu0 0.0
    %2551 = vmatprep.subr.mxu0 0.0
    %2552 = vmatpush1.msra.mxu0 0.0
    %2553 = vmatprep.subr.mxu0 0.0
    %2554 = vmatpush1.msra.mxu0 0.0
    %2555 = vmatprep.subr.mxu0 0.0
    %2556 = vmatpush1.msra.mxu0 0.0
    %2557 = vmatprep.subr.mxu0 0.0
    %2558 = vmatpush1.msra.mxu0 0.0
    %2559 = vmatprep.subr.mxu0 0.0
    %2560 = vmatpush1.msra.mxu0 0.0
    %2561 = vmatprep.subr.mxu0 0.0
    %2562 = vmatpush1.msra.mxu0 0.0
    %2563 = vmatprep.subr.mxu0 0.0
    %2564 = vmatpush1.msra.mxu0 0.0
    %2565 = vmatprep.subr.mxu0 0.0
    %2566 = vmatpush1.msra.mxu0 0.0
    %2567 = vmatprep.subr.mxu0 0.0
    %2568 = vmatpush1.msra.mxu0 0.0
    %2569 = vmatprep.mubr.f32.mxu0 0.0
    %2570 = vmatmul.mubr.f32.gmra.mrb[0].mxu0 %v2503
    %v2571 = vpop.f32.mrb[0].mxu0
    %v2572 = vadd.f32 0.0, %v2571
    %v2573 = vpop.f32.mrb[0].mxu0
    %2574 = vdwg.mxu0
    %v2575 = vmul.f32 %v2572, 0.125
    %v2576 = vlaneseq
    %v2577 = vshrl.u32 %v2576, 7
    %v2578 = vsub.s32 0, %v2577
    %v2579 = vrot.slane %v2575, %v2578
    %v2580 = vsub.f32 %v2416, %v2579
    %v2581 = vmul.f32 %v2580, %v2580
    %v2582 = vsel %vm2421, %v2581, 0.0
    %v2583 = vrot.slane %v2582, 4
    %v2584 = vadd.f32 %v2582, %v2583
    %v2585 = vrot.slane %v2584, 2
    %v2586 = vadd.f32 %v2584, %v2585
    %v2587 = vrot.slane %v2586, 1
    %v2588 = vadd.f32 %v2586, %v2587
    %v2590 = vsel %vm77, %v2588, 0
    %2592 = vmatprep.subr.mxu0 0.0
    %2593 = vmatpush1.msra.mxu0 %v1397
    %2594 = vmatprep.subr.mxu0 0.0
    %2595 = vmatpush1.msra.mxu0 %v1398
    %2596 = vmatprep.subr.mxu0 0.0
    %2597 = vmatpush1.msra.mxu0 %v1399
    %2598 = vmatprep.subr.mxu0 0.0
    %2599 = vmatpush1.msra.mxu0 %v1400
    %2600 = vmatprep.subr.mxu0 0.0
    %2601 = vmatpush1.msra.mxu0 0.0
    %2602 = vmatprep.subr.mxu0 0.0
    %2603 = vmatpush1.msra.mxu0 0.0
    %2604 = vmatprep.subr.mxu0 0.0
    %2605 = vmatpush1.msra.mxu0 0.0
    %2606 = vmatprep.subr.mxu0 0.0
    %2607 = vmatpush1.msra.mxu0 0.0
    %2608 = vmatprep.subr.mxu0 0.0
    %2609 = vmatpush1.msra.mxu0 0.0
    %2610 = vmatprep.subr.mxu0 0.0
    %2611 = vmatpush1.msra.mxu0 0.0
    %2612 = vmatprep.subr.mxu0 0.0
    %2613 = vmatpush1.msra.mxu0 0.0
    %2614 = vmatprep.subr.mxu0 0.0
    %2615 = vmatpush1.msra.mxu0 0.0
    %2616 = vmatprep.subr.mxu0 0.0
    %2617 = vmatpush1.msra.mxu0 0.0
    %2618 = vmatprep.subr.mxu0 0.0
    %2619 = vmatpush1.msra.mxu0 0.0
    %2620 = vmatprep.subr.mxu0 0.0
    %2621 = vmatpush1.msra.mxu0 0.0
    %2622 = vmatprep.subr.mxu0 0.0
    %2623 = vmatpush1.msra.mxu0 0.0
    %2624 = vmatprep.subr.mxu0 0.0
    %2625 = vmatpush1.msra.mxu0 0.0
    %2626 = vmatprep.subr.mxu0 0.0
    %2627 = vmatpush1.msra.mxu0 0.0
    %2628 = vmatprep.subr.mxu0 0.0
    %2629 = vmatpush1.msra.mxu0 0.0
    %2630 = vmatprep.subr.mxu0 0.0
    %2631 = vmatpush1.msra.mxu0 0.0
    %2632 = vmatprep.subr.mxu0 0.0
    %2633 = vmatpush1.msra.mxu0 0.0
    %2634 = vmatprep.subr.mxu0 0.0
    %2635 = vmatpush1.msra.mxu0 0.0
    %2636 = vmatprep.subr.mxu0 0.0
    %2637 = vmatpush1.msra.mxu0 0.0
    %2638 = vmatprep.subr.mxu0 0.0
    %2639 = vmatpush1.msra.mxu0 0.0
    %2640 = vmatprep.subr.mxu0 0.0
    %2641 = vmatpush1.msra.mxu0 0.0
    %2642 = vmatprep.subr.mxu0 0.0
    %2643 = vmatpush1.msra.mxu0 0.0
    %2644 = vmatprep.subr.mxu0 0.0
    %2645 = vmatpush1.msra.mxu0 0.0
    %2646 = vmatprep.subr.mxu0 0.0
    %2647 = vmatpush1.msra.mxu0 0.0
    %2648 = vmatprep.subr.mxu0 0.0
    %2649 = vmatpush1.msra.mxu0 0.0
    %2650 = vmatprep.subr.mxu0 0.0
    %2651 = vmatpush1.msra.mxu0 0.0
    %2652 = vmatprep.subr.mxu0 0.0
    %2653 = vmatpush1.msra.mxu0 0.0
    %2654 = vmatprep.subr.mxu0 0.0
    %2655 = vmatpush1.msra.mxu0 0.0
    %2656 = vmatprep.mubr.f32.mxu0 0.0
    %2657 = vmatmul.mubr.f32.gmra.mrb[0].mxu0 %v2590
    %v2658 = vpop.f32.mrb[0].mxu0
    %v2659 = vadd.f32 0.0, %v2658
    %v2660 = vpop.f32.mrb[0].mxu0
    %2661 = vdwg.mxu0
    %v2663 = vsel %vm919, %v2659, 0
    %2665 = vmatprep.subr.mxu0 0.0
    %2666 = vmatpush1.msra.mxu0 %v1421
    %2667 = vmatprep.subr.mxu0 0.0
    %2668 = vmatpush1.msra.mxu0 %v1422
    %2669 = vmatprep.subr.mxu0 0.0
    %2670 = vmatpush1.msra.mxu0 0.0
    %2671 = vmatprep.subr.mxu0 0.0
    %2672 = vmatpush1.msra.mxu0 0.0
    %2673 = vmatprep.subr.mxu0 0.0
    %2674 = vmatpush1.msra.mxu0 0.0
    %2675 = vmatprep.subr.mxu0 0.0
    %2676 = vmatpush1.msra.mxu0 0.0
    %2677 = vmatprep.subr.mxu0 0.0
    %2678 = vmatpush1.msra.mxu0 0.0
    %2679 = vmatprep.subr.mxu0 0.0
    %2680 = vmatpush1.msra.mxu0 0.0
    %2681 = vmatprep.subr.mxu0 0.0
    %2682 = vmatpush1.msra.mxu0 0.0
    %2683 = vmatprep.subr.mxu0 0.0
    %2684 = vmatpush1.msra.mxu0 0.0
    %2685 = vmatprep.subr.mxu0 0.0
    %2686 = vmatpush1.msra.mxu0 0.0
    %2687 = vmatprep.subr.mxu0 0.0
    %2688 = vmatpush1.msra.mxu0 0.0
    %2689 = vmatprep.subr.mxu0 0.0
    %2690 = vmatpush1.msra.mxu0 0.0
    %2691 = vmatprep.subr.mxu0 0.0
    %2692 = vmatpush1.msra.mxu0 0.0
    %2693 = vmatprep.subr.mxu0 0.0
    %2694 = vmatpush1.msra.mxu0 0.0
    %2695 = vmatprep.subr.mxu0 0.0
    %2696 = vmatpush1.msra.mxu0 0.0
    %2697 = vmatprep.subr.mxu0 0.0
    %2698 = vmatpush1.msra.mxu0 0.0
    %2699 = vmatprep.subr.mxu0 0.0
    %2700 = vmatpush1.msra.mxu0 0.0
    %2701 = vmatprep.subr.mxu0 0.0
    %2702 = vmatpush1.msra.mxu0 0.0
    %2703 = vmatprep.subr.mxu0 0.0
    %2704 = vmatpush1.msra.mxu0 0.0
    %2705 = vmatprep.subr.mxu0 0.0
    %2706 = vmatpush1.msra.mxu0 0.0
    %2707 = vmatprep.subr.mxu0 0.0
    %2708 = vmatpush1.msra.mxu0 0.0
    %2709 = vmatprep.subr.mxu0 0.0
    %2710 = vmatpush1.msra.mxu0 0.0
    %2711 = vmatprep.subr.mxu0 0.0
    %2712 = vmatpush1.msra.mxu0 0.0
    %2713 = vmatprep.subr.mxu0 0.0
    %2714 = vmatpush1.msra.mxu0 0.0
    %2715 = vmatprep.subr.mxu0 0.0
    %2716 = vmatpush1.msra.mxu0 0.0
    %2717 = vmatprep.subr.mxu0 0.0
    %2718 = vmatpush1.msra.mxu0 0.0
    %2719 = vmatprep.subr.mxu0 0.0
    %2720 = vmatpush1.msra.mxu0 0.0
    %2721 = vmatprep.subr.mxu0 0.0
    %2722 = vmatpush1.msra.mxu0 0.0
    %2723 = vmatprep.subr.mxu0 0.0
    %2724 = vmatpush1.msra.mxu0 0.0
    %2725 = vmatprep.subr.mxu0 0.0
    %2726 = vmatpush1.msra.mxu0 0.0
    %2727 = vmatprep.subr.mxu0 0.0
    %2728 = vmatpush1.msra.mxu0 0.0
    %2729 = vmatprep.mubr.f32.mxu0 0.0
    %2730 = vmatmul.mubr.f32.gmra.mrb[0].mxu0 %v2663
    %v2731 = vpop.f32.mrb[0].mxu0
    %v2732 = vadd.f32 0.0, %v2731
    %v2733 = vpop.f32.mrb[0].mxu0
    %2734 = vdwg.mxu0
    %v2735 = vmul.f32 %v2732, 0.125
    %v2736 = vld [vmem:[%s17] sm:$0x1]
    %v2737 = vadd.f32 %v2735, 1e-05
    %v2738 = vrsqrt.pop %v2737
    %v2739 = vmul.f32 %v2736, %v2738
    %v2741 = vlaneseq
    %v2742 = vshrl.u32 %v2741, 7
    %v2743 = vsub.s32 0, %v2742
    %v2744 = vrot.slane %v2739, %v2743
    %v2746 = vmul.f32 %v2580, %v2744
    %v2747 = vld [vmem:[%s18] sm:$0x1]
    %v2749 = vlaneseq
    %v2750 = vshrl.u32 %v2749, 7
    %v2751 = vsub.s32 0, %v2750
    %v2752 = vrot.slane %v2747, %v2751
    %v2754 = vadd.f32 %v2746, %v2752
    %vm2755 = vcmp.ge.f32.partialorder %v2754, 0.0
    %v2756 = vmul.f32 %v2754, 0.2
    %v2757 = vsel %vm2755, %v2754, %v2756
    %2758 = vst.msk [vmem:[#allocation2] sm:$0xf] %vm2421, %v2757
    // Predicated region
    $region78: #{tpu_custom_call.1} parent=1 // pred_check
      _
    $region79: #{tpu_custom_call.1} parent=1 // pred_check_branch
      %2760 = sbr.rel (0) target = $region81
    $region80: #{tpu_custom_call.1} parent=1 // pred_region
      %s2762 = ssub.s32 64, 64
      %2763 = vsyncadd [#allocation3], %s2762
      %s2765 = sshll.u32 [#allocation2], 4
      %s2766 = int_to_ptr.vmem [resolvable:$true] %s2765
      %2768 = dma.vmem_to_hbm [thread:$0]  %s2766, 64, %s19, [#allocation3]
    $region81: #{tpu_custom_call.1} parent=1 // pred_fallthru
      _
    // Predicated region
    $region82: #{tpu_custom_call.1} parent=1 // pred_check
      _
    $region83: #{tpu_custom_call.1} parent=1 // pred_check_branch
      %2770 = sbr.rel (0) target = $region85
    $region84: #{tpu_custom_call.1} parent=1 // pred_region
      %2771 = dma.done [#allocation3], 64
    $region85: #{tpu_custom_call.1} parent=1 // pred_fallthru
      _
    %2772 = vsyncpa [#allocation3], 1

</llo_original>
